<compile_context>
chip_gen: v6e
topology: v6e:2x2x1
jax: 0.10.0
libtpu: 0.0.40
codegen_flags: <defaults>
</compile_context>

<pallas_src>
import functools
from typing import NamedTuple

import jax
import jax.numpy as jnp
from jax.experimental import pallas as pl
from jax.experimental.pallas import tpu as pltpu

_LANE = 128
_SUBLANE = 8


def _round_up(x: int, m: int) -> int:
    return (x + m - 1) // m * m


def _fused_mlp_kernel(z_ref, w0_ref, b0_ref, wh_ref, bh_ref, wl_ref, bl_ref,
                      o_ref, h_ref, *, negative_slope):
    """One grid step == one Linear (+ LeakyReLU) layer of the MLP.

    z_ref  : (Bp, K0p)      zero-padded f32 input, resident in VMEM
    w0_ref : (K0p, Dp)      first-layer weight, bf16, resident
    b0_ref : (1, Dp)        first-layer bias, f32, resident
    wh_ref : (1, Dp, Dp)    current hidden-layer weight, bf16, streamed
    bh_ref : (1, 1, Dp)     current hidden-layer bias, f32, streamed
    wl_ref : (Dp, Np)       last-layer weight, bf16, resident
    bl_ref : (1, Np)        last-layer bias, f32, resident
    o_ref  : (Bp, Np)       padded output block (written only on the last layer)
    h_ref  : (Bp, Dp)       VMEM scratch: running f32 activation, never leaves VMEM
    """
    layer = pl.program_id(0)
    n_layers = pl.num_programs(0)

    @pl.when(layer == 0)
    def _():
        x = z_ref[...].astype(w0_ref.dtype)
        y = jnp.dot(x, w0_ref[...], preferred_element_type=jnp.float32)
        y = y + b0_ref[...]
        h_ref[...] = jnp.where(y >= 0.0, y, negative_slope * y)

    @pl.when(jnp.logical_and(layer > 0, layer < n_layers - 1))
    def _():
        x = h_ref[...].astype(wh_ref.dtype)
        y = jnp.dot(x, wh_ref[0], preferred_element_type=jnp.float32)
        y = y + bh_ref[0]
        h_ref[...] = jnp.where(y >= 0.0, y, negative_slope * y)

    @pl.when(layer == n_layers - 1)
    def _():
        x = h_ref[...].astype(wl_ref.dtype)
        y = jnp.dot(x, wl_ref[...], preferred_element_type=jnp.float32)
        y = y + bl_ref[...]
        o_ref[...] = y.astype(o_ref.dtype)


class PackedDiscriminator(NamedTuple):
    w_first: jax.Array   # (K0p, Dp) bf16
    b_first: jax.Array   # (1, Dp)   f32
    w_hidden: jax.Array  # (L-2, Dp, Dp) bf16
    b_hidden: jax.Array  # (L-2, 1, Dp)  f32
    w_last: jax.Array    # (Dp, Np) bf16
    b_last: jax.Array    # (1, Np)  f32
    out_dim: int         # true output width of the last layer (2)
    in_dim: int          # true z_dim


def init_discriminator_params(key, z_dim, hidden=1000, out_dim=2):
    """normal_init: weights ~ N(0, 0.02), biases = 0 (matches the PyTorch module).

    Weights are stored as (in_features, out_features) so the kernel computes
    y = x @ W + b (same math as PyTorch's x @ W.T with W of shape (out, in)).
    """
    dims = [z_dim] + [hidden] * 5 + [out_dim]
    params = []
    for i in range(len(dims) - 1):
        key, sub = jax.random.split(key)
        w = 0.02 * jax.random.normal(sub, (dims[i], dims[i + 1]), dtype=jnp.float32)
        b = jnp.zeros((dims[i + 1],), dtype=jnp.float32)
        params.append((w, b))
    return params


def pack_discriminator_params(params):
    """Pad each weight only to its own lane-aligned shape; bf16 weights, f32 biases."""
    ws = [w for w, _ in params]
    bs = [b for _, b in params]
    in_dim = ws[0].shape[0]
    hidden = ws[0].shape[1]
    out_dim = ws[-1].shape[1]

    dp = _round_up(hidden, _LANE)     # 1000 -> 1024
    k0p = _round_up(in_dim, _LANE)    # z_dim -> 128
    npad = _round_up(out_dim, _LANE)  # 2 -> 128

    w_first = jnp.pad(ws[0].astype(jnp.float32),
                      ((0, k0p - in_dim), (0, dp - hidden))).astype(jnp.bfloat16)
    b_first = jnp.pad(bs[0].reshape(1, -1).astype(jnp.float32),
                      ((0, 0), (0, dp - hidden)))

    w_hidden = jnp.stack([
        jnp.pad(w.astype(jnp.float32),
                ((0, dp - w.shape[0]), (0, dp - w.shape[1])))
        for w in ws[1:-1]
    ]).astype(jnp.bfloat16)
    b_hidden = jnp.stack([
        jnp.pad(b.reshape(1, -1).astype(jnp.float32), ((0, 0), (0, dp - b.size)))
        for b in bs[1:-1]
    ])

    w_last = jnp.pad(ws[-1].astype(jnp.float32),
                     ((0, dp - ws[-1].shape[0]), (0, npad - out_dim))).astype(jnp.bfloat16)
    b_last = jnp.pad(bs[-1].reshape(1, -1).astype(jnp.float32),
                     ((0, 0), (0, npad - out_dim)))

    return PackedDiscriminator(w_first, b_first, w_hidden, b_hidden,
                               w_last, b_last, out_dim, in_dim)


def discriminator_forward(packed: PackedDiscriminator, z, *, negative_slope=0.2):
    """z: (B, z_dim) -> logits of the last layer, squeezed like PyTorch `.squeeze()`."""
    b, z_dim = z.shape
    assert z_dim == packed.in_dim, (z_dim, packed.in_dim)
    k0p, dp = packed.w_first.shape
    _, npad = packed.w_last.shape
    n_hidden = packed.w_hidden.shape[0]
    n_layers = n_hidden + 2
    bp = _round_up(max(b, _SUBLANE), _SUBLANE)

    z_pad = jnp.pad(z.astype(jnp.float32), ((0, bp - b), (0, k0p - z_dim)))

    # Streamed hidden-weight block index: layers 1..n_hidden use blocks 0..n_hidden-1;
    # layer 0 and the last layer clamp to an adjacent block already needed anyway,
    # so no redundant DMA is issued on those steps.
    def hid_idx(l):
        return (jnp.minimum(jnp.maximum(l - 1, 0), n_hidden - 1), 0, 0)

    kernel = functools.partial(_fused_mlp_kernel, negative_slope=negative_slope)

    out_pad = pl.pallas_call(
        kernel,
        out_shape=jax.ShapeDtypeStruct((bp, npad), jnp.float32),
        grid_spec=pltpu.PrefetchScalarGridSpec(
            num_scalar_prefetch=0,
            grid=(n_layers,),
            in_specs=[
                pl.BlockSpec((bp, k0p), lambda l: (0, 0)),      # z: resident
                pl.BlockSpec((k0p, dp), lambda l: (0, 0)),      # first weight: resident
                pl.BlockSpec((1, dp), lambda l: (0, 0)),        # first bias: resident
                pl.BlockSpec((1, dp, dp), hid_idx),             # hidden weights: streamed
                pl.BlockSpec((1, 1, dp), hid_idx),              # hidden biases: streamed
                pl.BlockSpec((dp, npad), lambda l: (0, 0)),     # last weight: resident
                pl.BlockSpec((1, npad), lambda l: (0, 0)),      # last bias: resident
            ],
            out_specs=pl.BlockSpec((bp, npad), lambda l: (0, 0)),   # resident output
            scratch_shapes=[pltpu.VMEM((bp, dp), jnp.float32)],     # running activation
        ),
        compiler_params=pltpu.CompilerParams(
            # Layers form a sequential dependency chain through the VMEM scratch.
            dimension_semantics=("arbitrary",),
        ),
    )(z_pad, packed.w_first, packed.b_first, packed.w_hidden, packed.b_hidden,
      packed.w_last, packed.b_last)

    return jnp.squeeze(out_pad[:b, :packed.out_dim])


if __name__ == "__main__":
    key = jax.random.PRNGKey(0)
    z_dim = 32
    batch = 8

    key, pkey, zkey = jax.random.split(key, 3)
    params = init_discriminator_params(pkey, z_dim)
    z = jax.random.normal(zkey, (batch, z_dim), dtype=jnp.float32)

    packed = pack_discriminator_params(params)
    out = discriminator_forward(packed, z)
    jax.block_until_ready(out)

    # Reference mimicking the kernel numerics: bf16 weights, bf16 dot inputs,
    # f32 accumulation (same math as the MXU path used in the kernel).
    h = z
    for i, (w, b) in enumerate(params):
        x = h.astype(jnp.bfloat16).astype(jnp.float32)
        wq = w.astype(jnp.bfloat16).astype(jnp.float32)
        h = x @ wq + b[None, :]
        if i < len(params) - 1:
            h = jnp.where(h >= 0, h, 0.2 * h)
    ref = jnp.squeeze(h)

    assert out.shape == (batch, 2), out.shape
    max_err = float(jnp.max(jnp.abs(out - ref)))
    assert jnp.allclose(out, ref, atol=2e-3, rtol=2e-2), max_err

    print("KERNEL_OK")
</pallas_src>

<mosaic_0001>
module attributes {stable_mosaic.version = 11 : i64} {
  func.func @_fused_mlp_kernel(%arg0: i32, %arg1: memref<8x128xf32, #tpu.memory_space<vmem>>, %arg2: memref<128x1024xbf16, #tpu.memory_space<vmem>>, %arg3: memref<1x1024xf32, #tpu.memory_space<vmem>>, %arg4: memref<1x1024x1024xbf16, #tpu.memory_space<vmem>>, %arg5: memref<1x1x1024xf32, #tpu.memory_space<vmem>>, %arg6: memref<1024x128xbf16, #tpu.memory_space<vmem>>, %arg7: memref<1x128xf32, #tpu.memory_space<vmem>>, %arg8: memref<8x128xf32, #tpu.memory_space<vmem>>, %arg9: memref<8x1024xf32, #tpu.memory_space<vmem>>) attributes {dimension_semantics = [#tpu.dimension_semantics<arbitrary>], iteration_bounds = array<i64: 6>, scalar_prefetch = 0 : i64, scratch_operands = 1 : i64, tpu.core_type = #tpu.core_type<tc>, window_params = [{pipeline_mode = #tpu.pipeline_mode<synchronous>, transform_indices = @transform_0, window_bounds = array<i64: 8, 128>}, {pipeline_mode = #tpu.pipeline_mode<synchronous>, transform_indices = @transform_1, window_bounds = array<i64: 128, 1024>}, {pipeline_mode = #tpu.pipeline_mode<synchronous>, transform_indices = @transform_2, window_bounds = array<i64: 1, 1024>}, {transform_indices = @transform_3, window_bounds = array<i64: 1, 1024, 1024>}, {transform_indices = @transform_4, window_bounds = array<i64: 1, 1, 1024>}, {pipeline_mode = #tpu.pipeline_mode<synchronous>, transform_indices = @transform_5, window_bounds = array<i64: 1024, 128>}, {pipeline_mode = #tpu.pipeline_mode<synchronous>, transform_indices = @transform_6, window_bounds = array<i64: 1, 128>}, {pipeline_mode = #tpu.pipeline_mode<synchronous>, transform_indices = @transform_7, window_bounds = array<i64: 8, 128>}]} {
    %c0_i32 = arith.constant 0 : i32
    %0 = arith.cmpi eq, %arg0, %c0_i32 : i32
    %1 = arith.extui %0 : i1 to i32
    %c0_i32_0 = arith.constant 0 : i32
    %2 = arith.cmpi ne, %1, %c0_i32_0 : i32
    scf.if %2 {
      %c0 = arith.constant 0 : index
      %c0_5 = arith.constant 0 : index
      %11 = vector.load %arg1[%c0, %c0_5] : memref<8x128xf32, #tpu.memory_space<vmem>>, vector<8x128xf32>
      %12 = arith.truncf %11 : vector<8x128xf32> to vector<8x128xbf16>
      %c0_6 = arith.constant 0 : index
      %c0_7 = arith.constant 0 : index
      %13 = vector.load %arg2[%c0_6, %c0_7] : memref<128x1024xbf16, #tpu.memory_space<vmem>>, vector<128x1024xbf16>
      %cst = arith.constant dense<0.000000e+00> : vector<8x1024xf32>
      %14 = tpu.matmul %12, %13, %cst {dimension_numbers = #tpu.dot_dimension_numbers<[1], [0], [0], [1], [0, 0, 1, 1], [], []>} : vector<8x128xbf16>, vector<128x1024xbf16>, vector<8x1024xf32> -> vector<8x1024xf32>
      %c0_8 = arith.constant 0 : index
      %c0_9 = arith.constant 0 : index
      %15 = vector.load %arg3[%c0_8, %c0_9] : memref<1x1024xf32, #tpu.memory_space<vmem>>, vector<1x1024xf32>
      %16 = vector.broadcast %15 : vector<1x1024xf32> to vector<8x1024xf32>
      %17 = arith.addf %14, %16 : vector<8x1024xf32>
      %cst_10 = arith.constant 0.000000e+00 : f32
      %18 = vector.broadcast %cst_10 : f32 to vector<8x1024xf32>
      %19 = arith.cmpf oge, %17, %18 : vector<8x1024xf32>
      %cst_11 = arith.constant 2.000000e-01 : f32
      %20 = vector.broadcast %cst_11 : f32 to vector<8x1024xf32>
      %21 = arith.mulf %20, %17 : vector<8x1024xf32>
      %22 = arith.select %19, %17, %21 : vector<8x1024xi1>, vector<8x1024xf32>
      %c0_12 = arith.constant 0 : index
      %c0_13 = arith.constant 0 : index
      %23 = vector.load %arg9[%c0_12, %c0_13] : memref<8x1024xf32, #tpu.memory_space<vmem>>, vector<8x1024xf32>
      tpu.vector_store %arg9[%c0_12, %c0_13], %22 {strides = array<i32>} : memref<8x1024xf32, #tpu.memory_space<vmem>>, vector<8x1024xf32>,
    } else {
    }
    %c0_i32_1 = arith.constant 0 : i32
    %3 = arith.cmpi sgt, %arg0, %c0_i32_1 : i32
    %c5_i32 = arith.constant 5 : i32
    %4 = arith.cmpi slt, %arg0, %c5_i32 : i32
    %5 = arith.andi %3, %4 : i1
    %6 = arith.extui %5 : i1 to i32
    %c0_i32_2 = arith.constant 0 : i32
    %7 = arith.cmpi ne, %6, %c0_i32_2 : i32
    scf.if %7 {
      %c0 = arith.constant 0 : index
      %c0_5 = arith.constant 0 : index
      %11 = vector.load %arg9[%c0, %c0_5] : memref<8x1024xf32, #tpu.memory_space<vmem>>, vector<8x1024xf32>
      %12 = arith.truncf %11 : vector<8x1024xf32> to vector<8x1024xbf16>
      %c0_6 = arith.constant 0 : index
      %c0_7 = arith.constant 0 : index
      %c0_8 = arith.constant 0 : index
      %13 = vector.load %arg4[%c0_6, %c0_7, %c0_8] : memref<1x1024x1024xbf16, #tpu.memory_space<vmem>>, vector<1x1024x1024xbf16>
      %14 = vector.shape_cast %13 : vector<1x1024x1024xbf16> to vector<1024x1024xbf16>
      %cst = arith.constant dense<0.000000e+00> : vector<8x1024xf32>
      %15 = tpu.matmul %12, %14, %cst {dimension_numbers = #tpu.dot_dimension_numbers<[1], [0], [0], [1], [0, 0, 1, 1], [], []>} : vector<8x1024xbf16>, vector<1024x1024xbf16>, vector<8x1024xf32> -> vector<8x1024xf32>
      %c0_9 = arith.constant 0 : index
      %c0_10 = arith.constant 0 : index
      %c0_11 = arith.constant 0 : index
      %16 = vector.load %arg5[%c0_9, %c0_10, %c0_11] : memref<1x1x1024xf32, #tpu.memory_space<vmem>>, vector<1x1x1024xf32>
      %17 = vector.shape_cast %16 : vector<1x1x1024xf32> to vector<1x1024xf32>
      %18 = vector.broadcast %17 : vector<1x1024xf32> to vector<8x1024xf32>
      %19 = arith.addf %15, %18 : vector<8x1024xf32>
      %cst_12 = arith.constant 0.000000e+00 : f32
      %20 = vector.broadcast %cst_12 : f32 to vector<8x1024xf32>
      %21 = arith.cmpf oge, %19, %20 : vector<8x1024xf32>
      %cst_13 = arith.constant 2.000000e-01 : f32
      %22 = vector.broadcast %cst_13 : f32 to vector<8x1024xf32>
      %23 = arith.mulf %22, %19 : vector<8x1024xf32>
      %24 = arith.select %21, %19, %23 : vector<8x1024xi1>, vector<8x1024xf32>
      %c0_14 = arith.constant 0 : index
      %c0_15 = arith.constant 0 : index
      %25 = vector.load %arg9[%c0_14, %c0_15] : memref<8x1024xf32, #tpu.memory_space<vmem>>, vector<8x1024xf32>
      tpu.vector_store %arg9[%c0_14, %c0_15], %24 {strides = array<i32>} : memref<8x1024xf32, #tpu.memory_space<vmem>>, vector<8x1024xf32>,
    } else {
    }
    %c5_i32_3 = arith.constant 5 : i32
    %8 = arith.cmpi eq, %arg0, %c5_i32_3 : i32
    %9 = arith.extui %8 : i1 to i32
    %c0_i32_4 = arith.constant 0 : i32
    %10 = arith.cmpi ne, %9, %c0_i32_4 : i32
    scf.if %10 {
      %c0 = arith.constant 0 : index
      %c0_5 = arith.constant 0 : index
      %11 = vector.load %arg9[%c0, %c0_5] : memref<8x1024xf32, #tpu.memory_space<vmem>>, vector<8x1024xf32>
      %12 = arith.truncf %11 : vector<8x1024xf32> to vector<8x1024xbf16>
      %c0_6 = arith.constant 0 : index
      %c0_7 = arith.constant 0 : index
      %13 = vector.load %arg6[%c0_6, %c0_7] : memref<1024x128xbf16, #tpu.memory_space<vmem>>, vector<1024x128xbf16>
      %cst = arith.constant dense<0.000000e+00> : vector<8x128xf32>
      %14 = tpu.matmul %12, %13, %cst {dimension_numbers = #tpu.dot_dimension_numbers<[1], [0], [0], [1], [0, 0, 1, 1], [], []>} : vector<8x1024xbf16>, vector<1024x128xbf16>, vector<8x128xf32> -> vector<8x128xf32>
      %c0_8 = arith.constant 0 : index
      %c0_9 = arith.constant 0 : index
      %15 = vector.load %arg7[%c0_8, %c0_9] : memref<1x128xf32, #tpu.memory_space<vmem>>, vector<1x128xf32>
      %16 = vector.broadcast %15 : vector<1x128xf32> to vector<8x128xf32>
      %17 = arith.addf %14, %16 : vector<8x128xf32>
      %c0_10 = arith.constant 0 : index
      %c0_11 = arith.constant 0 : index
      %18 = vector.load %arg8[%c0_10, %c0_11] : memref<8x128xf32, #tpu.memory_space<vmem>>, vector<8x128xf32>
      tpu.vector_store %arg8[%c0_10, %c0_11], %17 {strides = array<i32>} : memref<8x128xf32, #tpu.memory_space<vmem>>, vector<8x128xf32>,
    } else {
    }
    return
  }
  func.func @transform_0(%arg0: i32) -> (i32, i32) {
    %c0_i32 = arith.constant 0 : i32
    %c0_i32_0 = arith.constant 0 : i32
    %c0_i32_1 = arith.constant 0 : i32
    return %c0_i32, %c0_i32_0 : i32, i32
  }
  func.func @transform_1(%arg0: i32) -> (i32, i32) {
    %c0_i32 = arith.constant 0 : i32
    %c0_i32_0 = arith.constant 0 : i32
    %c0_i32_1 = arith.constant 0 : i32
    return %c0_i32, %c0_i32_0 : i32, i32
  }
  func.func @transform_2(%arg0: i32) -> (i32, i32) {
    %c0_i32 = arith.constant 0 : i32
    %c0_i32_0 = arith.constant 0 : i32
    %c0_i32_1 = arith.constant 0 : i32
    return %c0_i32, %c0_i32_0 : i32, i32
  }
  func.func @transform_3(%arg0: i32) -> (i32, i32, i32) {
    %c1_i32 = arith.constant 1 : i32
    %0 = arith.subi %arg0, %c1_i32 : i32
    %c0_i32 = arith.constant 0 : i32
    %1 = arith.maxsi %0, %c0_i32 : i32
    %c3_i32 = arith.constant 3 : i32
    %2 = arith.minsi %1, %c3_i32 : i32
    %c0_i32_0 = arith.constant 0 : i32
    %c0_i32_1 = arith.constant 0 : i32
    %c0_i32_2 = arith.constant 0 : i32
    return %2, %c0_i32_0, %c0_i32_1 : i32, i32, i32
  }
  func.func @transform_4(%arg0: i32) -> (i32, i32, i32) {
    %c1_i32 = arith.constant 1 : i32
    %0 = arith.subi %arg0, %c1_i32 : i32
    %c0_i32 = arith.constant 0 : i32
    %1 = arith.maxsi %0, %c0_i32 : i32
    %c3_i32 = arith.constant 3 : i32
    %2 = arith.minsi %1, %c3_i32 : i32
    %c0_i32_0 = arith.constant 0 : i32
    %c0_i32_1 = arith.constant 0 : i32
    %c0_i32_2 = arith.constant 0 : i32
    return %2, %c0_i32_0, %c0_i32_1 : i32, i32, i32
  }
  func.func @transform_5(%arg0: i32) -> (i32, i32) {
    %c0_i32 = arith.constant 0 : i32
    %c0_i32_0 = arith.constant 0 : i32
    %c0_i32_1 = arith.constant 0 : i32
    return %c0_i32, %c0_i32_0 : i32, i32
  }
  func.func @transform_6(%arg0: i32) -> (i32, i32) {
    %c0_i32 = arith.constant 0 : i32
    %c0_i32_0 = arith.constant 0 : i32
    %c0_i32_1 = arith.constant 0 : i32
    return %c0_i32, %c0_i32_0 : i32, i32
  }
  func.func @transform_7(%arg0: i32) -> (i32, i32) {
    %c0_i32 = arith.constant 0 : i32
    %c0_i32_0 = arith.constant 0 : i32
    %c0_i32_1 = arith.constant 0 : i32
    return %c0_i32, %c0_i32_0 : i32, i32
  }
}

</mosaic_0001>

<llo_original>
// kernel: tpu_custom_call.1
$region0: #{tpu_custom_call.1}
  #allocation0 [shape = 'u32[]', space=smem, size = 0x4, offset = 0x4, fixed_abs, tag = 'smem constant byte address 0x4 - core index']
  #allocation1 [shape = 'u32[144,128]{1,0:T(1,128)}', space=vmem, size = 0x12000, scoped, tag = 'internal scratch']
  #allocation2 [shape = 'f32[8,1024]{1,0:T(8,128)}', space=vmem, size = 0x8000, scoped, tag = 'scratch operand']
  %s0 = inlined_call_operand.hbm [shape: f32[8,128], index: 0, kind: input, shape index: {}]
  %s1 = inlined_call_operand.hbm [shape: bf16[128,1024], index: 1, kind: input, shape index: {}]
  %s2 = inlined_call_operand.hbm [shape: f32[1,1024], index: 2, kind: input, shape index: {}]
  %s3 = inlined_call_operand.hbm [shape: bf16[4,1024,1024], index: 3, kind: input, shape index: {}]
  %s4 = inlined_call_operand.hbm [shape: f32[4,1,1024], index: 4, kind: input, shape index: {}]
  %s5 = inlined_call_operand.hbm [shape: bf16[1024,128], index: 5, kind: input, shape index: {}]
  %s6 = inlined_call_operand.hbm [shape: f32[1,128], index: 6, kind: input, shape index: {}]
  %s7 = inlined_call_operand.hbm [shape: f32[8,128], index: 7, kind: output, shape index: {}]
  %s8 = sld [smem:[#allocation0]]
  $region101: #{tpu_custom_call.1} parent=0
    _
  %s10 = ssub.s32 1, %s8
  %s11 = scalar_select 0, %s10, %s8
  $region1: #{tpu_custom_call.1} parent=0
    #allocation3 [shape = 'u8[4096]{0}', space=vmem, size = 0x1000, scoped, tag = 'input window, operand 0, single buffered']
    #allocation4 [shape = 's32[2]{0}', space=sflag, size = 0x8, scoped, tag = 'scoped memory for tpu_custom_call.1']
    #allocation5 [shape = 's32[2]{0}', space=sflag, size = 0x8, scoped, tag = 'scoped memory for tpu_custom_call.1']
    #allocation6 [shape = 'u8[262144]{0}', space=vmem, size = 0x40000, scoped, tag = 'input window, operand 1, single buffered']
    #allocation7 [shape = 's32[1]{0}', space=sflag, size = 0x4, scoped, tag = 'scoped memory for tpu_custom_call.1']
    #allocation8 [shape = 'u8[4096]{0}', space=vmem, size = 0x1000, scoped, tag = 'input window, operand 2, single buffered']
    #allocation9 [shape = 'u8[4194304]{0}', space=vmem, size = 0x400000, scoped, tag = 'input window, operand 3']
    #allocation10 [shape = 's32[2]{0}', space=sflag, size = 0x8, scoped, tag = 'scoped memory for tpu_custom_call.1']
    #allocation11 [shape = 'u8[8192]{0}', space=vmem, size = 0x2000, scoped, tag = 'input window, operand 4']
    #allocation12 [shape = 'u8[262144]{0}', space=vmem, size = 0x40000, scoped, tag = 'input window, operand 5, single buffered']
    #allocation13 [shape = 's32[1]{0}', space=sflag, size = 0x4, scoped, tag = 'scoped memory for tpu_custom_call.1']
    #allocation14 [shape = 'u8[512]{0}', space=vmem, size = 0x400, scoped, tag = 'input window, operand 6, single buffered']
    #allocation15 [shape = 'u8[4096]{0}', space=vmem, size = 0x1000, scoped, tag = 'output window, operand 0, single buffered']
    %12 = vsyncpa [#allocation4], 0
    %13 = vsyncpa [#allocation7], 0
    %14 = vsyncpa [#allocation10], 0
    %s15 = scalar_lea.sflag [#allocation10], 1
    %16 = vsyncpa %s15, 0
    %17 = vsyncpa [#allocation13], 0
    %18 = vsyncpa [#allocation5], 0
    loop: start=0, step=1, limit=8
    $region2: #{tpu_custom_call.1} parent=1 // loop_pre_header
      _
    $region3: #{tpu_custom_call.1} parent=1 // loop_header
      %s20 = sphi 0, %s24
      %p21 = scmp.ge.s32.totalorder %s20, 8
      %s28 = sphi 0, %s28
      %s30 = sphi 0, %s28
      %s31 = sphi 0, %s30
      %s45 = sphi 0, %s31
      %s49 = sphi 0, %s49
      %s51 = sphi 0, %s49
      %s52 = sphi 0, %s51
      %s66 = sphi 0, %s52
      %s70 = sphi 0, %s70
      %s72 = sphi 0, %s70
      %s73 = sphi 0, %s72
      %s87 = sphi 0, %s73
      %s103 = sphi 0, %s105
      %s106 = sphi 0, %s103
      %s107 = sphi 0, %s106
      %s123 = sphi 0, %s107
      %s139 = sphi 0, %s141
      %s142 = sphi 0, %s139
      %s143 = sphi 0, %s142
      %s159 = sphi 0, %s143
      %s163 = sphi 0, %s163
      %s165 = sphi 0, %s163
      %s166 = sphi 0, %s165
      %s180 = sphi 0, %s166
      %s184 = sphi 0, %s184
      %s186 = sphi 0, %s184
      %s187 = sphi 0, %s186
      %s201 = sphi 0, %s187
      %s205 = sphi 0, %s205
      %s207 = sphi 0, %s205
      %s208 = sphi 0, %s207
      %s222 = sphi 0, %s208
    $region4: #{tpu_custom_call.1} parent=1 // loop_header_branch
      %23 = sbr.rel (%p21) target = $region8
    $region5: #{tpu_custom_call.1} parent=1 // loop_body
      %s25 = ssub.s32 %s20, 1
      %s26 = ssub.s32 %s20, 2
      %s27 = sadd.s32 %s20, 1
      %s29 = sadd.s32 %s28, 1
      %p32 = scmp.eq.s32.totalorder %s20, 5
      %p33 = scmp.ne.s32.totalorder %s28, %s30
      %p34 = scmp.eq.s32.totalorder %s20, 0
      %p35 = por %p33, %p34
      %p36 = scmp.ne.s32.totalorder %s28, %s30
      %p37 = scmp.eq.s32.totalorder %s25, 5
      %p38 = por %p36, %p37
      %p39 = scmp.ne.s32.totalorder %s30, %s31
      %p40 = scmp.eq.s32.totalorder %s25, 0
      %p41 = por %p39, %p40
      %p42 = scmp.ne.s32.totalorder %s30, %s31
      %p43 = scmp.eq.s32.totalorder %s26, 5
      %p44 = por %p42, %p43
      %p46 = scmp.ne.s32.totalorder %s31, %s45
      %p47 = scmp.eq.s32.totalorder %s26, 0
      %p48 = por %p46, %p47
      %s50 = sadd.s32 %s49, 1
      %p53 = scmp.eq.s32.totalorder %s20, 5
      %p54 = scmp.ne.s32.totalorder %s49, %s51
      %p55 = scmp.eq.s32.totalorder %s20, 0
      %p56 = por %p54, %p55
      %p57 = scmp.ne.s32.totalorder %s49, %s51
      %p58 = scmp.eq.s32.totalorder %s25, 5
      %p59 = por %p57, %p58
      %p60 = scmp.ne.s32.totalorder %s51, %s52
      %p61 = scmp.eq.s32.totalorder %s25, 0
      %p62 = por %p60, %p61
      %p63 = scmp.ne.s32.totalorder %s51, %s52
      %p64 = scmp.eq.s32.totalorder %s26, 5
      %p65 = por %p63, %p64
      %p67 = scmp.ne.s32.totalorder %s52, %s66
      %p68 = scmp.eq.s32.totalorder %s26, 0
      %p69 = por %p67, %p68
      %s71 = sadd.s32 %s70, 1
      %p74 = scmp.eq.s32.totalorder %s20, 5
      %p75 = scmp.ne.s32.totalorder %s70, %s72
      %p76 = scmp.eq.s32.totalorder %s20, 0
      %p77 = por %p75, %p76
      %p78 = scmp.ne.s32.totalorder %s70, %s72
      %p79 = scmp.eq.s32.totalorder %s25, 5
      %p80 = por %p78, %p79
      %p81 = scmp.ne.s32.totalorder %s72, %s73
      %p82 = scmp.eq.s32.totalorder %s25, 0
      %p83 = por %p81, %p82
      %p84 = scmp.ne.s32.totalorder %s72, %s73
      %p85 = scmp.eq.s32.totalorder %s26, 5
      %p86 = por %p84, %p85
      %p88 = scmp.ne.s32.totalorder %s73, %s87
      %p89 = scmp.eq.s32.totalorder %s26, 0
      %p90 = por %p88, %p89
      %s91 = ssub.s32 %s20, 1
      %p92 = scmp.gt.s32.totalorder %s91, 0
      %s93 = scalar_select %p92, %s91, 0
      %p94 = scmp.lt.s32.totalorder %s93, 3
      %s95 = scalar_select %p94, %s93, 3
      %s96 = ssub.s32 %s27, 1
      %p97 = scmp.gt.s32.totalorder %s96, 0
      %s98 = scalar_select %p97, %s96, 0
      %p99 = scmp.lt.s32.totalorder %s98, 3
      %s100 = scalar_select %p99, %s98, 3
      %s101 = ssub.s32 %s95, %s100
      %p102 = scmp.eq.s32.totalorder %s101, 0
      %s104 = sadd.s32 %s103, 1
      %s105 = scalar_select %p102, %s103, %s104
      %p108 = pneg %p102
      %p109 = scmp.eq.s32.totalorder %s20, 5
      %p110 = por %p108, %p109
      %p111 = scmp.ne.s32.totalorder %s103, %s106
      %p112 = scmp.eq.s32.totalorder %s20, 0
      %p113 = por %p111, %p112
      %p114 = scmp.ne.s32.totalorder %s103, %s106
      %p115 = scmp.eq.s32.totalorder %s25, 5
      %p116 = por %p114, %p115
      %p117 = scmp.ne.s32.totalorder %s106, %s107
      %p118 = scmp.eq.s32.totalorder %s25, 0
      %p119 = por %p117, %p118
      %p120 = scmp.ne.s32.totalorder %s106, %s107
      %p121 = scmp.eq.s32.totalorder %s26, 5
      %p122 = por %p120, %p121
      %p124 = scmp.ne.s32.totalorder %s107, %s123
      %p125 = scmp.eq.s32.totalorder %s26, 0
      %p126 = por %p124, %p125
      %s127 = ssub.s32 %s20, 1
      %p128 = scmp.gt.s32.totalorder %s127, 0
      %s129 = scalar_select %p128, %s127, 0
      %p130 = scmp.lt.s32.totalorder %s129, 3
      %s131 = scalar_select %p130, %s129, 3
      %s132 = ssub.s32 %s27, 1
      %p133 = scmp.gt.s32.totalorder %s132, 0
      %s134 = scalar_select %p133, %s132, 0
      %p135 = scmp.lt.s32.totalorder %s134, 3
      %s136 = scalar_select %p135, %s134, 3
      %s137 = ssub.s32 %s131, %s136
      %p138 = scmp.eq.s32.totalorder %s137, 0
      %s140 = sadd.s32 %s139, 1
      %s141 = scalar_select %p138, %s139, %s140
      %p144 = pneg %p138
      %p145 = scmp.eq.s32.totalorder %s20, 5
      %p146 = por %p144, %p145
      %p147 = scmp.ne.s32.totalorder %s139, %s142
      %p148 = scmp.eq.s32.totalorder %s20, 0
      %p149 = por %p147, %p148
      %p150 = scmp.ne.s32.totalorder %s139, %s142
      %p151 = scmp.eq.s32.totalorder %s25, 5
      %p152 = por %p150, %p151
      %p153 = scmp.ne.s32.totalorder %s142, %s143
      %p154 = scmp.eq.s32.totalorder %s25, 0
      %p155 = por %p153, %p154
      %p156 = scmp.ne.s32.totalorder %s142, %s143
      %p157 = scmp.eq.s32.totalorder %s26, 5
      %p158 = por %p156, %p157
      %p160 = scmp.ne.s32.totalorder %s143, %s159
      %p161 = scmp.eq.s32.totalorder %s26, 0
      %p162 = por %p160, %p161
      %s164 = sadd.s32 %s163, 1
      %p167 = scmp.eq.s32.totalorder %s20, 5
      %p168 = scmp.ne.s32.totalorder %s163, %s165
      %p169 = scmp.eq.s32.totalorder %s20, 0
      %p170 = por %p168, %p169
      %p171 = scmp.ne.s32.totalorder %s163, %s165
      %p172 = scmp.eq.s32.totalorder %s25, 5
      %p173 = por %p171, %p172
      %p174 = scmp.ne.s32.totalorder %s165, %s166
      %p175 = scmp.eq.s32.totalorder %s25, 0
      %p176 = por %p174, %p175
      %p177 = scmp.ne.s32.totalorder %s165, %s166
      %p178 = scmp.eq.s32.totalorder %s26, 5
      %p179 = por %p177, %p178
      %p181 = scmp.ne.s32.totalorder %s166, %s180
      %p182 = scmp.eq.s32.totalorder %s26, 0
      %p183 = por %p181, %p182
      %s185 = sadd.s32 %s184, 1
      %p188 = scmp.eq.s32.totalorder %s20, 5
      %p189 = scmp.ne.s32.totalorder %s184, %s186
      %p190 = scmp.eq.s32.totalorder %s20, 0
      %p191 = por %p189, %p190
      %p192 = scmp.ne.s32.totalorder %s184, %s186
      %p193 = scmp.eq.s32.totalorder %s25, 5
      %p194 = por %p192, %p193
      %p195 = scmp.ne.s32.totalorder %s186, %s187
      %p196 = scmp.eq.s32.totalorder %s25, 0
      %p197 = por %p195, %p196
      %p198 = scmp.ne.s32.totalorder %s186, %s187
      %p199 = scmp.eq.s32.totalorder %s26, 5
      %p200 = por %p198, %p199
      %p202 = scmp.ne.s32.totalorder %s187, %s201
      %p203 = scmp.eq.s32.totalorder %s26, 0
      %p204 = por %p202, %p203
      %s206 = sadd.s32 %s205, 1
      %p209 = scmp.eq.s32.totalorder %s20, 5
      %p210 = scmp.ne.s32.totalorder %s205, %s207
      %p211 = scmp.eq.s32.totalorder %s20, 0
      %p212 = por %p210, %p211
      %p213 = scmp.ne.s32.totalorder %s205, %s207
      %p214 = scmp.eq.s32.totalorder %s25, 5
      %p215 = por %p213, %p214
      %p216 = scmp.ne.s32.totalorder %s207, %s208
      %p217 = scmp.eq.s32.totalorder %s25, 0
      %p218 = por %p216, %p217
      %p219 = scmp.ne.s32.totalorder %s207, %s208
      %p220 = scmp.eq.s32.totalorder %s26, 5
      %p221 = por %p219, %p220
      %p223 = scmp.ne.s32.totalorder %s208, %s222
      %p224 = scmp.eq.s32.totalorder %s26, 0
      %p225 = por %p223, %p224
      %p226 = scmp.le.s32.totalorder 1, %s20
      %p227 = scmp.lt.s32.totalorder %s20, 7
      %p228 = pnand %p226, %p227
      %p229 = pneg %p228
      // Predicated region
      $region9: #{tpu_custom_call.1} parent=5 // pred_check
        _
      $region10: #{tpu_custom_call.1} parent=5 // pred_check_branch
        %231 = sbr.rel (%p228) target = $region12
      $region11: #{tpu_custom_call.1} parent=5 // pred_region
        %s232 = ssub.s32 %s20, 1
        // Predicated region
        $region13: #{tpu_custom_call.1} parent=11 // pred_check
          %p233 = pneg %p41
        $region14: #{tpu_custom_call.1} parent=11 // pred_check_branch
          %235 = sbr.rel (%p233) target = $region16
        $region15: #{tpu_custom_call.1} parent=11 // pred_region
          %s237 = ssub.s32 128, 128
          %238 = vsyncadd [#allocation4], %s237
          %s240 = sshll.u32 [#allocation3], 4
          %s241 = int_to_ptr.vmem [resolvable:$true] %s240
          %243 = dma.hbm_to_vmem [thread:$0]  %s0, 128, %s241, [#allocation4]
        $region16: #{tpu_custom_call.1} parent=11 // pred_fallthru
          _
        // Predicated region
        $region17: #{tpu_custom_call.1} parent=11 // pred_check
          %p244 = pneg %p62
        $region18: #{tpu_custom_call.1} parent=11 // pred_check_branch
          %246 = sbr.rel (%p244) target = $region20
        $region19: #{tpu_custom_call.1} parent=11 // pred_region
          %s248 = ssub.s32 8192, 8192
          %249 = vsyncadd [#allocation7], %s248
          %s250 = sshll.u32 [#allocation6], 4
          %s251 = int_to_ptr.vmem [resolvable:$true] %s250
          %256 = dma.hbm_to_vmem [thread:$0]  %s1, 8192, %s251, [#allocation7], 512, 512, 32
        $region20: #{tpu_custom_call.1} parent=11 // pred_fallthru
          _
        // Predicated region
        $region21: #{tpu_custom_call.1} parent=11 // pred_check
          %p257 = pneg %p83
        $region22: #{tpu_custom_call.1} parent=11 // pred_check_branch
          %259 = sbr.rel (%p257) target = $region24
        $region23: #{tpu_custom_call.1} parent=11 // pred_region
          %s261 = ssub.s32 128, 128
          %262 = vsyncadd [#allocation7], %s261
          %s264 = sshll.u32 [#allocation8], 4
          %s265 = int_to_ptr.vmem [resolvable:$true] %s264
          %267 = dma.hbm_to_vmem [thread:$0]  %s2, 128, %s265, [#allocation7]
        $region24: #{tpu_custom_call.1} parent=11 // pred_fallthru
          _
        // Predicated region
        $region25: #{tpu_custom_call.1} parent=11 // pred_check
          %p268 = pneg %p176
        $region26: #{tpu_custom_call.1} parent=11 // pred_check_branch
          %270 = sbr.rel (%p268) target = $region28
        $region27: #{tpu_custom_call.1} parent=11 // pred_region
          %s272 = ssub.s32 8192, 8192
          %273 = vsyncadd [#allocation13], %s272
          %s274 = sshll.u32 [#allocation12], 4
          %s275 = int_to_ptr.vmem [resolvable:$true] %s274
          %280 = dma.hbm_to_vmem [thread:$0]  %s5, 8192, %s275, [#allocation13], 64, 64, 4
        $region28: #{tpu_custom_call.1} parent=11 // pred_fallthru
          _
        // Predicated region
        $region29: #{tpu_custom_call.1} parent=11 // pred_check
          %p281 = pneg %p197
        $region30: #{tpu_custom_call.1} parent=11 // pred_check_branch
          %283 = sbr.rel (%p281) target = $region32
        $region31: #{tpu_custom_call.1} parent=11 // pred_region
          %s285 = ssub.s32 16, 16
          %286 = vsyncadd [#allocation13], %s285
          %s288 = sshll.u32 [#allocation14], 4
          %s289 = int_to_ptr.vmem [resolvable:$true] %s288
          %291 = dma.hbm_to_vmem [thread:$0]  %s6, 16, %s289, [#allocation13]
        $region32: #{tpu_custom_call.1} parent=11 // pred_fallthru
          _
      $region12: #{tpu_custom_call.1} parent=5 // pred_fallthru
        _
      %p292 = scmp.lt.s32.totalorder %s20, 6
      // Predicated region
      $region33: #{tpu_custom_call.1} parent=5 // pred_check
        %p293 = pneg %p292
      $region34: #{tpu_custom_call.1} parent=5 // pred_check_branch
        %295 = sbr.rel (%p293) target = $region36
      $region35: #{tpu_custom_call.1} parent=5 // pred_region
        // Predicated region
        $region37: #{tpu_custom_call.1} parent=35 // pred_check
          %p296 = pneg %p113
        $region38: #{tpu_custom_call.1} parent=35 // pred_check_branch
          %298 = sbr.rel (%p296) target = $region40
        $region39: #{tpu_custom_call.1} parent=35 // pred_region
          %s299 = sand.u32 %s20, 1
          %s300 = scalar_lea.sflag [#allocation10], %s299
          %s301 = sand.u32 %s103, 1
          %s302 = smul.addr %s301, 4096
          %s303 = scalar_lea.vmem [#allocation9], %s302
          %s304 = ssub.s32 %s20, 1
          %p305 = scmp.gt.s32.totalorder %s304, 0
          %s306 = scalar_select %p305, %s304, 0
          %p307 = scmp.lt.s32.totalorder %s306, 3
          %s308 = scalar_select %p307, %s306, 3
          %s310 = ssub.s32 65536, 65536
          %311 = vsyncadd %s300, %s310
          %s312 = smul.addr %s308, 1024
          %s313 = smul.addr %s312, 64
          %s314 = scalar_lea.hbm %s3, %s313
          %s315 = sshll.u32 %s303, 4
          %s316 = int_to_ptr.vmem [resolvable:$true] %s315
          %321 = dma.hbm_to_vmem [thread:$0]  %s314, 65536, %s316, %s300, 512, 512, 32
        $region40: #{tpu_custom_call.1} parent=35 // pred_fallthru
          _
        // Predicated region
        $region41: #{tpu_custom_call.1} parent=35 // pred_check
          %p322 = pneg %p149
        $region42: #{tpu_custom_call.1} parent=35 // pred_check_branch
          %324 = sbr.rel (%p322) target = $region44
        $region43: #{tpu_custom_call.1} parent=35 // pred_region
          %s325 = sand.u32 %s20, 1
          %s326 = scalar_lea.sflag [#allocation10], %s325
          %s327 = sand.u32 %s139, 1
          %s328 = smul.addr %s327, 8
          %s329 = scalar_lea.vmem [#allocation11], %s328
          %s330 = ssub.s32 %s20, 1
          %p331 = scmp.gt.s32.totalorder %s330, 0
          %s332 = scalar_select %p331, %s330, 0
          %p333 = scmp.lt.s32.totalorder %s332, 3
          %s334 = scalar_select %p333, %s332, 3
          %s336 = ssub.s32 128, 128
          %337 = vsyncadd %s326, %s336
          %s338 = smul.addr %s334, 8
          %s339 = smul.addr %s338, 16
          %s340 = scalar_lea.hbm %s4, %s339
          %s342 = sshll.u32 %s329, 4
          %s343 = int_to_ptr.vmem [resolvable:$true] %s342
          %345 = dma.hbm_to_vmem [thread:$0]  %s340, 128, %s343, %s326
        $region44: #{tpu_custom_call.1} parent=35 // pred_fallthru
          _
      $region36: #{tpu_custom_call.1} parent=5 // pred_fallthru
        _
      %p346 = scmp.le.s32.totalorder 1, %s20
      %p347 = scmp.lt.s32.totalorder %s20, 7
      %p348 = pnand %p346, %p347
      %p349 = pneg %p348
      // Predicated region
      $region45: #{tpu_custom_call.1} parent=5 // pred_check
        _
      $region46: #{tpu_custom_call.1} parent=5 // pred_check_branch
        %351 = sbr.rel (%p348) target = $region48
      $region47: #{tpu_custom_call.1} parent=5 // pred_region
        %s352 = ssub.s32 %s20, 1
        // Predicated region
        $region49: #{tpu_custom_call.1} parent=47 // pred_check
          %p353 = pneg %p41
        $region50: #{tpu_custom_call.1} parent=47 // pred_check_branch
          %355 = sbr.rel (%p353) target = $region52
        $region51: #{tpu_custom_call.1} parent=47 // pred_region
          %356 = dma.done [#allocation4], 128
        $region52: #{tpu_custom_call.1} parent=47 // pred_fallthru
          _
        // Predicated region
        $region53: #{tpu_custom_call.1} parent=47 // pred_check
          %p357 = pneg %p62
        $region54: #{tpu_custom_call.1} parent=47 // pred_check_branch
          %359 = sbr.rel (%p357) target = $region56
        $region55: #{tpu_custom_call.1} parent=47 // pred_region
          %360 = dma.done [#allocation7], 8192
        $region56: #{tpu_custom_call.1} parent=47 // pred_fallthru
          _
        // Predicated region
        $region57: #{tpu_custom_call.1} parent=47 // pred_check
          %p361 = pneg %p83
        $region58: #{tpu_custom_call.1} parent=47 // pred_check_branch
          %363 = sbr.rel (%p361) target = $region60
        $region59: #{tpu_custom_call.1} parent=47 // pred_region
          %364 = dma.done [#allocation7], 128
        $region60: #{tpu_custom_call.1} parent=47 // pred_fallthru
          _
        %s365 = sand.u32 %s25, 1
        %s366 = scalar_lea.sflag [#allocation10], %s365
        %s367 = sand.u32 %s106, 1
        %s368 = smul.addr %s367, 4096
        %s369 = scalar_lea.vmem [#allocation9], %s368
        // Predicated region
        $region61: #{tpu_custom_call.1} parent=47 // pred_check
          %p370 = pneg %p119
        $region62: #{tpu_custom_call.1} parent=47 // pred_check_branch
          %372 = sbr.rel (%p370) target = $region64
        $region63: #{tpu_custom_call.1} parent=47 // pred_region
          %373 = dma.done %s366, 65536
        $region64: #{tpu_custom_call.1} parent=47 // pred_fallthru
          _
        %s374 = sand.u32 %s25, 1
        %s375 = scalar_lea.sflag [#allocation10], %s374
        %s376 = sand.u32 %s142, 1
        %s377 = smul.addr %s376, 8
        %s378 = scalar_lea.vmem [#allocation11], %s377
        // Predicated region
        $region65: #{tpu_custom_call.1} parent=47 // pred_check
          %p379 = pneg %p155
        $region66: #{tpu_custom_call.1} parent=47 // pred_check_branch
          %381 = sbr.rel (%p379) target = $region68
        $region67: #{tpu_custom_call.1} parent=47 // pred_region
          %382 = dma.done %s375, 128
        $region68: #{tpu_custom_call.1} parent=47 // pred_fallthru
          _
        // Predicated region
        $region69: #{tpu_custom_call.1} parent=47 // pred_check
          %p383 = pneg %p176
        $region70: #{tpu_custom_call.1} parent=47 // pred_check_branch
          %385 = sbr.rel (%p383) target = $region72
        $region71: #{tpu_custom_call.1} parent=47 // pred_region
          %386 = dma.done [#allocation13], 8192
        $region72: #{tpu_custom_call.1} parent=47 // pred_fallthru
          _
        // Predicated region
        $region73: #{tpu_custom_call.1} parent=47 // pred_check
          %p387 = pneg %p197
        $region74: #{tpu_custom_call.1} parent=47 // pred_check_branch
          %389 = sbr.rel (%p387) target = $region76
        $region75: #{tpu_custom_call.1} parent=47 // pred_region
          %390 = dma.done [#allocation13], 16
        $region76: #{tpu_custom_call.1} parent=47 // pred_fallthru
          _
        %p391 = pneg %p41
        %p392 = pneg %p38
        %p393 = pneg %p62
        %p394 = pneg %p59
        %p395 = pneg %p83
        %p396 = pneg %p80
        %s397 = sand.u32 %s25, 1
        %s398 = scalar_lea.sflag [#allocation10], %s397
        %s399 = sand.u32 %s106, 1
        %s400 = smul.addr %s399, 4096
        %s401 = scalar_lea.vmem [#allocation9], %s400
        %p402 = pneg %p119
        %p403 = pneg %p116
        %s404 = sand.u32 %s25, 1
        %s405 = scalar_lea.sflag [#allocation10], %s404
        %s406 = sand.u32 %s142, 1
        %s407 = smul.addr %s406, 8
        %s408 = scalar_lea.vmem [#allocation11], %s407
        %p409 = pneg %p155
        %p410 = pneg %p152
        %p411 = pneg %p176
        %p412 = pneg %p173
        %p413 = pneg %p197
        %p414 = pneg %p194
        %p415 = pneg %p218
        %p416 = pneg %p215
        %s417 = ssub.s32 %s25, 1
        %p418 = scmp.gt.s32.totalorder %s417, 0
        %s419 = scalar_select %p418, %s417, 0
        %p420 = scmp.lt.s32.totalorder %s419, 3
        %s421 = scalar_select %p420, %s419, 3
        %s422 = ssub.s32 %s25, 1
        %p423 = scmp.gt.s32.totalorder %s422, 0
        %s424 = scalar_select %p423, %s422, 0
        %p425 = scmp.lt.s32.totalorder %s424, 3
        %s426 = scalar_select %p425, %s424, 3
        %p428 = scmp.eq.s32.totalorder %s25, 0
        // Predicated region
        $region77: #{tpu_custom_call.1} parent=47 // pred_check
          %p429 = pneg %p428
        $region78: #{tpu_custom_call.1} parent=47 // pred_check_branch
          %431 = sbr.rel (%p429) target = $region80
        $region79: #{tpu_custom_call.1} parent=47 // pred_region
          %v432 = vld [vmem:[#allocation3] sm:$0xff]
          %v433 = vpack.c.bf16 %v432, %v432
          %v434 = vld [vmem:[#allocation6] sm:$0xff]
          %v435 = vld [vmem:[#allocation6 + $0x8] sm:$0xff]
          %v436 = vld [vmem:[#allocation6 + $0x10] sm:$0xff]
          %v437 = vld [vmem:[#allocation6 + $0x18] sm:$0xff]
          %v438 = vld [vmem:[#allocation6 + $0x20] sm:$0xff]
          %v439 = vld [vmem:[#allocation6 + $0x28] sm:$0xff]
          %v440 = vld [vmem:[#allocation6 + $0x30] sm:$0xff]
          %v441 = vld [vmem:[#allocation6 + $0x38] sm:$0xff]
          %v442 = vld [vmem:[#allocation6 + $0x40] sm:$0xff]
          %v443 = vld [vmem:[#allocation6 + $0x48] sm:$0xff]
          %v444 = vld [vmem:[#allocation6 + $0x50] sm:$0xff]
          %v445 = vld [vmem:[#allocation6 + $0x58] sm:$0xff]
          %v446 = vld [vmem:[#allocation6 + $0x60] sm:$0xff]
          %v447 = vld [vmem:[#allocation6 + $0x68] sm:$0xff]
          %v448 = vld [vmem:[#allocation6 + $0x70] sm:$0xff]
          %v449 = vld [vmem:[#allocation6 + $0x78] sm:$0xff]
          %v450 = vld [vmem:[#allocation6 + $0x80] sm:$0xff]
          %v451 = vld [vmem:[#allocation6 + $0x88] sm:$0xff]
          %v452 = vld [vmem:[#allocation6 + $0x90] sm:$0xff]
          %v453 = vld [vmem:[#allocation6 + $0x98] sm:$0xff]
          %v454 = vld [vmem:[#allocation6 + $0xa0] sm:$0xff]
          %v455 = vld [vmem:[#allocation6 + $0xa8] sm:$0xff]
          %v456 = vld [vmem:[#allocation6 + $0xb0] sm:$0xff]
          %v457 = vld [vmem:[#allocation6 + $0xb8] sm:$0xff]
          %v458 = vld [vmem:[#allocation6 + $0xc0] sm:$0xff]
          %v459 = vld [vmem:[#allocation6 + $0xc8] sm:$0xff]
          %v460 = vld [vmem:[#allocation6 + $0xd0] sm:$0xff]
          %v461 = vld [vmem:[#allocation6 + $0xd8] sm:$0xff]
          %v462 = vld [vmem:[#allocation6 + $0xe0] sm:$0xff]
          %v463 = vld [vmem:[#allocation6 + $0xe8] sm:$0xff]
          %v464 = vld [vmem:[#allocation6 + $0xf0] sm:$0xff]
          %v465 = vld [vmem:[#allocation6 + $0xf8] sm:$0xff]
          %v466 = vld [vmem:[#allocation6 + $0x100] sm:$0xff]
          %v467 = vld [vmem:[#allocation6 + $0x108] sm:$0xff]
          %v468 = vld [vmem:[#allocation6 + $0x110] sm:$0xff]
          %v469 = vld [vmem:[#allocation6 + $0x118] sm:$0xff]
          %v470 = vld [vmem:[#allocation6 + $0x120] sm:$0xff]
          %v471 = vld [vmem:[#allocation6 + $0x128] sm:$0xff]
          %v472 = vld [vmem:[#allocation6 + $0x130] sm:$0xff]
          %v473 = vld [vmem:[#allocation6 + $0x138] sm:$0xff]
          %v474 = vld [vmem:[#allocation6 + $0x140] sm:$0xff]
          %v475 = vld [vmem:[#allocation6 + $0x148] sm:$0xff]
          %v476 = vld [vmem:[#allocation6 + $0x150] sm:$0xff]
          %v477 = vld [vmem:[#allocation6 + $0x158] sm:$0xff]
          %v478 = vld [vmem:[#allocation6 + $0x160] sm:$0xff]
          %v479 = vld [vmem:[#allocation6 + $0x168] sm:$0xff]
          %v480 = vld [vmem:[#allocation6 + $0x170] sm:$0xff]
          %v481 = vld [vmem:[#allocation6 + $0x178] sm:$0xff]
          %v482 = vld [vmem:[#allocation6 + $0x180] sm:$0xff]
          %v483 = vld [vmem:[#allocation6 + $0x188] sm:$0xff]
          %v484 = vld [vmem:[#allocation6 + $0x190] sm:$0xff]
          %v485 = vld [vmem:[#allocation6 + $0x198] sm:$0xff]
          %v486 = vld [vmem:[#allocation6 + $0x1a0] sm:$0xff]
          %v487 = vld [vmem:[#allocation6 + $0x1a8] sm:$0xff]
          %v488 = vld [vmem:[#allocation6 + $0x1b0] sm:$0xff]
          %v489 = vld [vmem:[#allocation6 + $0x1b8] sm:$0xff]
          %v490 = vld [vmem:[#allocation6 + $0x1c0] sm:$0xff]
          %v491 = vld [vmem:[#allocation6 + $0x1c8] sm:$0xff]
          %v492 = vld [vmem:[#allocation6 + $0x1d0] sm:$0xff]
          %v493 = vld [vmem:[#allocation6 + $0x1d8] sm:$0xff]
          %v494 = vld [vmem:[#allocation6 + $0x1e0] sm:$0xff]
          %v495 = vld [vmem:[#allocation6 + $0x1e8] sm:$0xff]
          %v496 = vld [vmem:[#allocation6 + $0x1f0] sm:$0xff]
          %v497 = vld [vmem:[#allocation6 + $0x1f8] sm:$0xff]
          %v498 = vld [vmem:[#allocation8] sm:$0xff]
          %v500 = vlaneseq
          %v501 = vshrl.u32 %v500, 7
          %v502 = vsub.s32 0, %v501
          %v503 = vrot.slane %v498, %v502
          %v504 = vlaneseq
          %v505 = vshrl.u32 %v504, 7
          %v506 = vsub.s32 1, %v505
          %v507 = vrot.slane %v498, %v506
          %v508 = vlaneseq
          %v509 = vshrl.u32 %v508, 7
          %v510 = vsub.s32 2, %v509
          %v511 = vrot.slane %v498, %v510
          %v512 = vlaneseq
          %v513 = vshrl.u32 %v512, 7
          %v514 = vsub.s32 3, %v513
          %v515 = vrot.slane %v498, %v514
          %v516 = vlaneseq
          %v517 = vshrl.u32 %v516, 7
          %v518 = vsub.s32 4, %v517
          %v519 = vrot.slane %v498, %v518
          %v520 = vlaneseq
          %v521 = vshrl.u32 %v520, 7
          %v522 = vsub.s32 5, %v521
          %v523 = vrot.slane %v498, %v522
          %v524 = vlaneseq
          %v525 = vshrl.u32 %v524, 7
          %v526 = vsub.s32 6, %v525
          %v527 = vrot.slane %v498, %v526
          %v528 = vlaneseq
          %v529 = vshrl.u32 %v528, 7
          %v530 = vsub.s32 7, %v529
          %v531 = vrot.slane %v498, %v530
          %v604 = vunpack.c.l.b16 %v434
          %v605 = vunpack.c.h.b16 %v434
          %v606 = vunpack.c.l.b16 %v435
          %v607 = vunpack.c.h.b16 %v435
          %v608 = vunpack.c.l.b16 %v436
          %v609 = vunpack.c.h.b16 %v436
          %v610 = vunpack.c.l.b16 %v437
          %v611 = vunpack.c.h.b16 %v437
          %v612 = vunpack.c.l.b16 %v438
          %v613 = vunpack.c.h.b16 %v438
          %v614 = vunpack.c.l.b16 %v439
          %v615 = vunpack.c.h.b16 %v439
          %v616 = vunpack.c.l.b16 %v440
          %v617 = vunpack.c.h.b16 %v440
          %v618 = vunpack.c.l.b16 %v441
          %v619 = vunpack.c.h.b16 %v441
          %v620 = vunpack.c.l.b16 %v442
          %v621 = vunpack.c.h.b16 %v442
          %v622 = vunpack.c.l.b16 %v443
          %v623 = vunpack.c.h.b16 %v443
          %v624 = vunpack.c.l.b16 %v444
          %v625 = vunpack.c.h.b16 %v444
          %v626 = vunpack.c.l.b16 %v445
          %v627 = vunpack.c.h.b16 %v445
          %v628 = vunpack.c.l.b16 %v446
          %v629 = vunpack.c.h.b16 %v446
          %v630 = vunpack.c.l.b16 %v447
          %v631 = vunpack.c.h.b16 %v447
          %v632 = vunpack.c.l.b16 %v448
          %v633 = vunpack.c.h.b16 %v448
          %v634 = vunpack.c.l.b16 %v449
          %v635 = vunpack.c.h.b16 %v449
          %v636 = vunpack.c.l.b16 %v450
          %v637 = vunpack.c.h.b16 %v450
          %v638 = vunpack.c.l.b16 %v451
          %v639 = vunpack.c.h.b16 %v451
          %v640 = vunpack.c.l.b16 %v452
          %v641 = vunpack.c.h.b16 %v452
          %v642 = vunpack.c.l.b16 %v453
          %v643 = vunpack.c.h.b16 %v453
          %v644 = vunpack.c.l.b16 %v454
          %v645 = vunpack.c.h.b16 %v454
          %v646 = vunpack.c.l.b16 %v455
          %v647 = vunpack.c.h.b16 %v455
          %v648 = vunpack.c.l.b16 %v456
          %v649 = vunpack.c.h.b16 %v456
          %v650 = vunpack.c.l.b16 %v457
          %v651 = vunpack.c.h.b16 %v457
          %v652 = vunpack.c.l.b16 %v458
          %v653 = vunpack.c.h.b16 %v458
          %v654 = vunpack.c.l.b16 %v459
          %v655 = vunpack.c.h.b16 %v459
          %v656 = vunpack.c.l.b16 %v460
          %v657 = vunpack.c.h.b16 %v460
          %v658 = vunpack.c.l.b16 %v461
          %v659 = vunpack.c.h.b16 %v461
          %v660 = vunpack.c.l.b16 %v462
          %v661 = vunpack.c.h.b16 %v462
          %v662 = vunpack.c.l.b16 %v463
          %v663 = vunpack.c.h.b16 %v463
          %v664 = vunpack.c.l.b16 %v464
          %v665 = vunpack.c.h.b16 %v464
          %v666 = vunpack.c.l.b16 %v465
          %v667 = vunpack.c.h.b16 %v465
          %v668 = vunpack.c.l.b16 %v466
          %v669 = vunpack.c.h.b16 %v466
          %v670 = vunpack.c.l.b16 %v467
          %v671 = vunpack.c.h.b16 %v467
          %v672 = vunpack.c.l.b16 %v468
          %v673 = vunpack.c.h.b16 %v468
          %v674 = vunpack.c.l.b16 %v469
          %v675 = vunpack.c.h.b16 %v469
          %v676 = vunpack.c.l.b16 %v470
          %v677 = vunpack.c.h.b16 %v470
          %v678 = vunpack.c.l.b16 %v471
          %v679 = vunpack.c.h.b16 %v471
          %v680 = vunpack.c.l.b16 %v472
          %v681 = vunpack.c.h.b16 %v472
          %v682 = vunpack.c.l.b16 %v473
          %v683 = vunpack.c.h.b16 %v473
          %v684 = vunpack.c.l.b16 %v474
          %v685 = vunpack.c.h.b16 %v474
          %v686 = vunpack.c.l.b16 %v475
          %v687 = vunpack.c.h.b16 %v475
          %v688 = vunpack.c.l.b16 %v476
          %v689 = vunpack.c.h.b16 %v476
          %v690 = vunpack.c.l.b16 %v477
          %v691 = vunpack.c.h.b16 %v477
          %v692 = vunpack.c.l.b16 %v478
          %v693 = vunpack.c.h.b16 %v478
          %v694 = vunpack.c.l.b16 %v479
          %v695 = vunpack.c.h.b16 %v479
          %v696 = vunpack.c.l.b16 %v480
          %v697 = vunpack.c.h.b16 %v480
          %v698 = vunpack.c.l.b16 %v481
          %v699 = vunpack.c.h.b16 %v481
          %v700 = vunpack.c.l.b16 %v482
          %v701 = vunpack.c.h.b16 %v482
          %v702 = vunpack.c.l.b16 %v483
          %v703 = vunpack.c.h.b16 %v483
          %v704 = vunpack.c.l.b16 %v484
          %v705 = vunpack.c.h.b16 %v484
          %v706 = vunpack.c.l.b16 %v485
          %v707 = vunpack.c.h.b16 %v485
          %v708 = vunpack.c.l.b16 %v486
          %v709 = vunpack.c.h.b16 %v486
          %v710 = vunpack.c.l.b16 %v487
          %v711 = vunpack.c.h.b16 %v487
          %v712 = vunpack.c.l.b16 %v488
          %v713 = vunpack.c.h.b16 %v488
          %v714 = vunpack.c.l.b16 %v489
          %v715 = vunpack.c.h.b16 %v489
          %v716 = vunpack.c.l.b16 %v490
          %v717 = vunpack.c.h.b16 %v490
          %v718 = vunpack.c.l.b16 %v491
          %v719 = vunpack.c.h.b16 %v491
          %v720 = vunpack.c.l.b16 %v492
          %v721 = vunpack.c.h.b16 %v492
          %v722 = vunpack.c.l.b16 %v493
          %v723 = vunpack.c.h.b16 %v493
          %v724 = vunpack.c.l.b16 %v494
          %v725 = vunpack.c.h.b16 %v494
          %v726 = vunpack.c.l.b16 %v495
          %v727 = vunpack.c.h.b16 %v495
          %v728 = vunpack.c.l.b16 %v496
          %v729 = vunpack.c.h.b16 %v496
          %v730 = vunpack.c.l.b16 %v497
          %v731 = vunpack.c.h.b16 %v497
          %v732 = vpack.c.b16 %v612, %v604
          %v733 = vpack.c.b16 %v613, %v605
          %v734 = vpack.c.b16 %v614, %v606
          %v735 = vpack.c.b16 %v615, %v607
          %v736 = vpack.c.b16 %v616, %v608
          %v737 = vpack.c.b16 %v617, %v609
          %v738 = vpack.c.b16 %v618, %v610
          %v739 = vpack.c.b16 %v619, %v611
          %v740 = vpack.c.b16 %v628, %v620
          %v741 = vpack.c.b16 %v629, %v621
          %v742 = vpack.c.b16 %v630, %v622
          %v743 = vpack.c.b16 %v631, %v623
          %v744 = vpack.c.b16 %v632, %v624
          %v745 = vpack.c.b16 %v633, %v625
          %v746 = vpack.c.b16 %v634, %v626
          %v747 = vpack.c.b16 %v635, %v627
          %v748 = vpack.c.b16 %v644, %v636
          %v749 = vpack.c.b16 %v645, %v637
          %v750 = vpack.c.b16 %v646, %v638
          %v751 = vpack.c.b16 %v647, %v639
          %v752 = vpack.c.b16 %v648, %v640
          %v753 = vpack.c.b16 %v649, %v641
          %v754 = vpack.c.b16 %v650, %v642
          %v755 = vpack.c.b16 %v651, %v643
          %v756 = vpack.c.b16 %v660, %v652
          %v757 = vpack.c.b16 %v661, %v653
          %v758 = vpack.c.b16 %v662, %v654
          %v759 = vpack.c.b16 %v663, %v655
          %v760 = vpack.c.b16 %v664, %v656
          %v761 = vpack.c.b16 %v665, %v657
          %v762 = vpack.c.b16 %v666, %v658
          %v763 = vpack.c.b16 %v667, %v659
          %v764 = vpack.c.b16 %v676, %v668
          %v765 = vpack.c.b16 %v677, %v669
          %v766 = vpack.c.b16 %v678, %v670
          %v767 = vpack.c.b16 %v679, %v671
          %v768 = vpack.c.b16 %v680, %v672
          %v769 = vpack.c.b16 %v681, %v673
          %v770 = vpack.c.b16 %v682, %v674
          %v771 = vpack.c.b16 %v683, %v675
          %v772 = vpack.c.b16 %v692, %v684
          %v773 = vpack.c.b16 %v693, %v685
          %v774 = vpack.c.b16 %v694, %v686
          %v775 = vpack.c.b16 %v695, %v687
          %v776 = vpack.c.b16 %v696, %v688
          %v777 = vpack.c.b16 %v697, %v689
          %v778 = vpack.c.b16 %v698, %v690
          %v779 = vpack.c.b16 %v699, %v691
          %v780 = vpack.c.b16 %v708, %v700
          %v781 = vpack.c.b16 %v709, %v701
          %v782 = vpack.c.b16 %v710, %v702
          %v783 = vpack.c.b16 %v711, %v703
          %v784 = vpack.c.b16 %v712, %v704
          %v785 = vpack.c.b16 %v713, %v705
          %v786 = vpack.c.b16 %v714, %v706
          %v787 = vpack.c.b16 %v715, %v707
          %v788 = vpack.c.b16 %v724, %v716
          %v789 = vpack.c.b16 %v725, %v717
          %v790 = vpack.c.b16 %v726, %v718
          %v791 = vpack.c.b16 %v727, %v719
          %v792 = vpack.c.b16 %v728, %v720
          %v793 = vpack.c.b16 %v729, %v721
          %v794 = vpack.c.b16 %v730, %v722
          %v795 = vpack.c.b16 %v731, %v723
          %860 = vmatprep.subr.bf16.mxu0 %v789
          %861 = vmatpush1.bf16.msra.mxu0 %v788
          %862 = vmatprep.subr.bf16.mxu0 %v781
          %863 = vmatpush1.bf16.msra.mxu0 %v780
          %864 = vmatprep.subr.bf16.mxu0 %v773
          %865 = vmatpush1.bf16.msra.mxu0 %v772
          %866 = vmatprep.subr.bf16.mxu0 %v765
          %867 = vmatpush1.bf16.msra.mxu0 %v764
          %868 = vmatprep.subr.bf16.mxu0 %v757
          %869 = vmatpush1.bf16.msra.mxu0 %v756
          %870 = vmatprep.subr.bf16.mxu0 %v749
          %871 = vmatpush1.bf16.msra.mxu0 %v748
          %872 = vmatprep.subr.bf16.mxu0 %v741
          %873 = vmatpush1.bf16.msra.mxu0 %v740
          %874 = vmatprep.subr.bf16.mxu0 %v733
          %875 = vmatpush1.bf16.msra.mxu0 %v732
          %876 = vmatprep.subr.bf16.mxu0 0
          %877 = vmatpush2.bf16.msra.mxu0 0
          %878 = vmatprep.subr.bf16.mxu0 0
          %879 = vmatpush2.bf16.msra.mxu0 0
          %880 = vmatprep.subr.bf16.mxu0 0
          %881 = vmatpush2.bf16.msra.mxu0 0
          %882 = vmatprep.subr.bf16.mxu0 0
          %883 = vmatpush2.bf16.msra.mxu0 0
          %884 = vmatprep.subr.bf16.mxu0 0
          %885 = vmatpush2.bf16.msra.mxu0 0
          %886 = vmatprep.subr.bf16.mxu0 0
          %887 = vmatpush2.bf16.msra.mxu0 0
          %888 = vmatprep.subr.bf16.mxu0 0
          %889 = vmatpush2.bf16.msra.mxu0 0
          %890 = vmatprep.subr.bf16.mxu0 0
          %891 = vmatpush2.bf16.msra.mxu0 0
          %892 = vmatprep.mubr.bf16.mxu0 0
          %893 = vmatmul.mubr.bf16.gmra.mxu0 %v433
          %v894 = vpop.f32.mrf.mxu0
          %v895 = vadd.f32 %v503, %v894
          %v896 = vpop.f32.mrf.mxu0
          %v897 = vadd.f32 %v507, %v896
          %v898 = vpop.f32.mrf.mxu0
          %v899 = vpop.f32.mrf.mxu0
          %900 = vdwg.mxu0
          %901 = vmatprep.subr.bf16.mxu0 %v791
          %902 = vmatpush1.bf16.msra.mxu0 %v790
          %903 = vmatprep.subr.bf16.mxu0 %v783
          %904 = vmatpush1.bf16.msra.mxu0 %v782
          %905 = vmatprep.subr.bf16.mxu0 %v775
          %906 = vmatpush1.bf16.msra.mxu0 %v774
          %907 = vmatprep.subr.bf16.mxu0 %v767
          %908 = vmatpush1.bf16.msra.mxu0 %v766
          %909 = vmatprep.subr.bf16.mxu0 %v759
          %910 = vmatpush1.bf16.msra.mxu0 %v758
          %911 = vmatprep.subr.bf16.mxu0 %v751
          %912 = vmatpush1.bf16.msra.mxu0 %v750
          %913 = vmatprep.subr.bf16.mxu0 %v743
          %914 = vmatpush1.bf16.msra.mxu0 %v742
          %915 = vmatprep.subr.bf16.mxu0 %v735
          %916 = vmatpush1.bf16.msra.mxu0 %v734
          %917 = vmatprep.subr.bf16.mxu0 0
          %918 = vmatpush2.bf16.msra.mxu0 0
          %919 = vmatprep.subr.bf16.mxu0 0
          %920 = vmatpush2.bf16.msra.mxu0 0
          %921 = vmatprep.subr.bf16.mxu0 0
          %922 = vmatpush2.bf16.msra.mxu0 0
          %923 = vmatprep.subr.bf16.mxu0 0
          %924 = vmatpush2.bf16.msra.mxu0 0
          %925 = vmatprep.subr.bf16.mxu0 0
          %926 = vmatpush2.bf16.msra.mxu0 0
          %927 = vmatprep.subr.bf16.mxu0 0
          %928 = vmatpush2.bf16.msra.mxu0 0
          %929 = vmatprep.subr.bf16.mxu0 0
          %930 = vmatpush2.bf16.msra.mxu0 0
          %931 = vmatprep.subr.bf16.mxu0 0
          %932 = vmatpush2.bf16.msra.mxu0 0
          %933 = vmatprep.mubr.bf16.mxu0 0
          %934 = vmatmul.mubr.bf16.gmra.mxu0 %v433
          %v935 = vpop.f32.mrf.mxu0
          %v936 = vadd.f32 %v511, %v935
          %v937 = vpop.f32.mrf.mxu0
          %v938 = vadd.f32 %v515, %v937
          %v939 = vpop.f32.mrf.mxu0
          %v940 = vpop.f32.mrf.mxu0
          %941 = vdwg.mxu0
          %942 = vmatprep.subr.bf16.mxu0 %v793
          %943 = vmatpush1.bf16.msra.mxu0 %v792
          %944 = vmatprep.subr.bf16.mxu0 %v785
          %945 = vmatpush1.bf16.msra.mxu0 %v784
          %946 = vmatprep.subr.bf16.mxu0 %v777
          %947 = vmatpush1.bf16.msra.mxu0 %v776
          %948 = vmatprep.subr.bf16.mxu0 %v769
          %949 = vmatpush1.bf16.msra.mxu0 %v768
          %950 = vmatprep.subr.bf16.mxu0 %v761
          %951 = vmatpush1.bf16.msra.mxu0 %v760
          %952 = vmatprep.subr.bf16.mxu0 %v753
          %953 = vmatpush1.bf16.msra.mxu0 %v752
          %954 = vmatprep.subr.bf16.mxu0 %v745
          %955 = vmatpush1.bf16.msra.mxu0 %v744
          %956 = vmatprep.subr.bf16.mxu0 %v737
          %957 = vmatpush1.bf16.msra.mxu0 %v736
          %958 = vmatprep.subr.bf16.mxu0 0
          %959 = vmatpush2.bf16.msra.mxu0 0
          %960 = vmatprep.subr.bf16.mxu0 0
          %961 = vmatpush2.bf16.msra.mxu0 0
          %962 = vmatprep.subr.bf16.mxu0 0
          %963 = vmatpush2.bf16.msra.mxu0 0
          %964 = vmatprep.subr.bf16.mxu0 0
          %965 = vmatpush2.bf16.msra.mxu0 0
          %966 = vmatprep.subr.bf16.mxu0 0
          %967 = vmatpush2.bf16.msra.mxu0 0
          %968 = vmatprep.subr.bf16.mxu0 0
          %969 = vmatpush2.bf16.msra.mxu0 0
          %970 = vmatprep.subr.bf16.mxu0 0
          %971 = vmatpush2.bf16.msra.mxu0 0
          %972 = vmatprep.subr.bf16.mxu0 0
          %973 = vmatpush2.bf16.msra.mxu0 0
          %974 = vmatprep.mubr.bf16.mxu0 0
          %975 = vmatmul.mubr.bf16.gmra.mxu0 %v433
          %v976 = vpop.f32.mrf.mxu0
          %v977 = vadd.f32 %v519, %v976
          %v978 = vpop.f32.mrf.mxu0
          %v979 = vadd.f32 %v523, %v978
          %v980 = vpop.f32.mrf.mxu0
          %v981 = vpop.f32.mrf.mxu0
          %982 = vdwg.mxu0
          %983 = vmatprep.subr.bf16.mxu0 %v795
          %984 = vmatpush1.bf16.msra.mxu0 %v794
          %985 = vmatprep.subr.bf16.mxu0 %v787
          %986 = vmatpush1.bf16.msra.mxu0 %v786
          %987 = vmatprep.subr.bf16.mxu0 %v779
          %988 = vmatpush1.bf16.msra.mxu0 %v778
          %989 = vmatprep.subr.bf16.mxu0 %v771
          %990 = vmatpush1.bf16.msra.mxu0 %v770
          %991 = vmatprep.subr.bf16.mxu0 %v763
          %992 = vmatpush1.bf16.msra.mxu0 %v762
          %993 = vmatprep.subr.bf16.mxu0 %v755
          %994 = vmatpush1.bf16.msra.mxu0 %v754
          %995 = vmatprep.subr.bf16.mxu0 %v747
          %996 = vmatpush1.bf16.msra.mxu0 %v746
          %997 = vmatprep.subr.bf16.mxu0 %v739
          %998 = vmatpush1.bf16.msra.mxu0 %v738
          %999 = vmatprep.subr.bf16.mxu0 0
          %1000 = vmatpush2.bf16.msra.mxu0 0
          %1001 = vmatprep.subr.bf16.mxu0 0
          %1002 = vmatpush2.bf16.msra.mxu0 0
          %1003 = vmatprep.subr.bf16.mxu0 0
          %1004 = vmatpush2.bf16.msra.mxu0 0
          %1005 = vmatprep.subr.bf16.mxu0 0
          %1006 = vmatpush2.bf16.msra.mxu0 0
          %1007 = vmatprep.subr.bf16.mxu0 0
          %1008 = vmatpush2.bf16.msra.mxu0 0
          %1009 = vmatprep.subr.bf16.mxu0 0
          %1010 = vmatpush2.bf16.msra.mxu0 0
          %1011 = vmatprep.subr.bf16.mxu0 0
          %1012 = vmatpush2.bf16.msra.mxu0 0
          %1013 = vmatprep.subr.bf16.mxu0 0
          %1014 = vmatpush2.bf16.msra.mxu0 0
          %1015 = vmatprep.mubr.bf16.mxu0 0
          %1016 = vmatmul.mubr.bf16.gmra.mxu0 %v433
          %v1017 = vpop.f32.mrf.mxu0
          %v1018 = vadd.f32 %v527, %v1017
          %v1019 = vpop.f32.mrf.mxu0
          %v1020 = vadd.f32 %v531, %v1019
          %v1021 = vpop.f32.mrf.mxu0
          %v1022 = vpop.f32.mrf.mxu0
          %1023 = vdwg.mxu0
          %vm1024 = vcmp.ge.f32.partialorder %v895, 0.0
          %vm1025 = vcmp.ge.f32.partialorder %v897, 0.0
          %vm1026 = vcmp.ge.f32.partialorder %v936, 0.0
          %vm1027 = vcmp.ge.f32.partialorder %v938, 0.0
          %vm1028 = vcmp.ge.f32.partialorder %v977, 0.0
          %vm1029 = vcmp.ge.f32.partialorder %v979, 0.0
          %vm1030 = vcmp.ge.f32.partialorder %v1018, 0.0
          %vm1031 = vcmp.ge.f32.partialorder %v1020, 0.0
          %v1032 = vmul.f32 %v895, 0.2
          %v1033 = vmul.f32 %v897, 0.2
          %v1034 = vmul.f32 %v936, 0.2
          %v1035 = vmul.f32 %v938, 0.2
          %v1036 = vmul.f32 %v977, 0.2
          %v1037 = vmul.f32 %v979, 0.2
          %v1038 = vmul.f32 %v1018, 0.2
          %v1039 = vmul.f32 %v1020, 0.2
          %v1040 = vsel %vm1024, %v895, %v1032
          %v1041 = vsel %vm1025, %v897, %v1033
          %v1042 = vsel %vm1026, %v936, %v1034
          %v1043 = vsel %vm1027, %v938, %v1035
          %v1044 = vsel %vm1028, %v977, %v1036
          %v1045 = vsel %vm1029, %v979, %v1037
          %v1046 = vsel %vm1030, %v1018, %v1038
          %v1047 = vsel %vm1031, %v1020, %v1039
          %1048 = vst [vmem:[#allocation2] sm:$0xff] %v1040
          %1049 = vst [vmem:[#allocation2 + $0x8] sm:$0xff] %v1041
          %1050 = vst [vmem:[#allocation2 + $0x10] sm:$0xff] %v1042
          %1051 = vst [vmem:[#allocation2 + $0x18] sm:$0xff] %v1043
          %1052 = vst [vmem:[#allocation2 + $0x20] sm:$0xff] %v1044
          %1053 = vst [vmem:[#allocation2 + $0x28] sm:$0xff] %v1045
          %1054 = vst [vmem:[#allocation2 + $0x30] sm:$0xff] %v1046
          %1055 = vst [vmem:[#allocation2 + $0x38] sm:$0xff] %v1047
        $region80: #{tpu_custom_call.1} parent=47 // pred_fallthru
          _
        %p1056 = scmp.gt.s32.totalorder %s25, 0
        %p1057 = scmp.lt.s32.totalorder %s25, 5
        %p1058 = pnand %p1056, %p1057
        %p1059 = pneg %p1058
        // Predicated region
        $region81: #{tpu_custom_call.1} parent=47 // pred_check
          _
        $region82: #{tpu_custom_call.1} parent=47 // pred_check_branch
          %1061 = sbr.rel (%p1058) target = $region84
        $region83: #{tpu_custom_call.1} parent=47 // pred_region
          %v1062 = vld [vmem:[#allocation2] sm:$0xff]
          %v1063 = vld [vmem:[#allocation2 + $0x8] sm:$0xff]
          %v1064 = vld [vmem:[#allocation2 + $0x10] sm:$0xff]
          %v1065 = vld [vmem:[#allocation2 + $0x18] sm:$0xff]
          %v1066 = vld [vmem:[#allocation2 + $0x20] sm:$0xff]
          %v1067 = vld [vmem:[#allocation2 + $0x28] sm:$0xff]
          %v1068 = vld [vmem:[#allocation2 + $0x30] sm:$0xff]
          %v1069 = vld [vmem:[#allocation2 + $0x38] sm:$0xff]
          %v1070 = vpack.c.bf16 %v1062, %v1062
          %v1071 = vpack.c.bf16 %v1063, %v1063
          %v1072 = vpack.c.bf16 %v1064, %v1064
          %v1073 = vpack.c.bf16 %v1065, %v1065
          %v1074 = vpack.c.bf16 %v1066, %v1066
          %v1075 = vpack.c.bf16 %v1067, %v1067
          %v1076 = vpack.c.bf16 %v1068, %v1068
          %v1077 = vpack.c.bf16 %v1069, %v1069
          %v1078 = vld [vmem:[%s369] sm:$0xff]
          %v1079 = vld [vmem:[%s369 + $0x8] sm:$0xff]
          %v1080 = vld [vmem:[%s369 + $0x10] sm:$0xff]
          %v1081 = vld [vmem:[%s369 + $0x18] sm:$0xff]
          %v1082 = vld [vmem:[%s369 + $0x20] sm:$0xff]
          %v1083 = vld [vmem:[%s369 + $0x28] sm:$0xff]
          %v1084 = vld [vmem:[%s369 + $0x30] sm:$0xff]
          %v1085 = vld [vmem:[%s369 + $0x38] sm:$0xff]
          %v1086 = vld [vmem:[%s369 + $0x40] sm:$0xff]
          %v1087 = vld [vmem:[%s369 + $0x48] sm:$0xff]
          %v1088 = vld [vmem:[%s369 + $0x50] sm:$0xff]
          %v1089 = vld [vmem:[%s369 + $0x58] sm:$0xff]
          %v1090 = vld [vmem:[%s369 + $0x60] sm:$0xff]
          %v1091 = vld [vmem:[%s369 + $0x68] sm:$0xff]
          %v1092 = vld [vmem:[%s369 + $0x70] sm:$0xff]
          %v1093 = vld [vmem:[%s369 + $0x78] sm:$0xff]
          %v1094 = vld [vmem:[%s369 + $0x80] sm:$0xff]
          %v1095 = vld [vmem:[%s369 + $0x88] sm:$0xff]
          %v1096 = vld [vmem:[%s369 + $0x90] sm:$0xff]
          %v1097 = vld [vmem:[%s369 + $0x98] sm:$0xff]
          %v1098 = vld [vmem:[%s369 + $0xa0] sm:$0xff]
          %v1099 = vld [vmem:[%s369 + $0xa8] sm:$0xff]
          %v1100 = vld [vmem:[%s369 + $0xb0] sm:$0xff]
          %v1101 = vld [vmem:[%s369 + $0xb8] sm:$0xff]
          %v1102 = vld [vmem:[%s369 + $0xc0] sm:$0xff]
          %v1103 = vld [vmem:[%s369 + $0xc8] sm:$0xff]
          %v1104 = vld [vmem:[%s369 + $0xd0] sm:$0xff]
          %v1105 = vld [vmem:[%s369 + $0xd8] sm:$0xff]
          %v1106 = vld [vmem:[%s369 + $0xe0] sm:$0xff]
          %v1107 = vld [vmem:[%s369 + $0xe8] sm:$0xff]
          %v1108 = vld [vmem:[%s369 + $0xf0] sm:$0xff]
          %v1109 = vld [vmem:[%s369 + $0xf8] sm:$0xff]
          %v1110 = vld [vmem:[%s369 + $0x100] sm:$0xff]
          %v1111 = vld [vmem:[%s369 + $0x108] sm:$0xff]
          %v1112 = vld [vmem:[%s369 + $0x110] sm:$0xff]
          %v1113 = vld [vmem:[%s369 + $0x118] sm:$0xff]
          %v1114 = vld [vmem:[%s369 + $0x120] sm:$0xff]
          %v1115 = vld [vmem:[%s369 + $0x128] sm:$0xff]
          %v1116 = vld [vmem:[%s369 + $0x130] sm:$0xff]
          %v1117 = vld [vmem:[%s369 + $0x138] sm:$0xff]
          %v1118 = vld [vmem:[%s369 + $0x140] sm:$0xff]
          %v1119 = vld [vmem:[%s369 + $0x148] sm:$0xff]
          %v1120 = vld [vmem:[%s369 + $0x150] sm:$0xff]
          %v1121 = vld [vmem:[%s369 + $0x158] sm:$0xff]
          %v1122 = vld [vmem:[%s369 + $0x160] sm:$0xff]
          %v1123 = vld [vmem:[%s369 + $0x168] sm:$0xff]
          %v1124 = vld [vmem:[%s369 + $0x170] sm:$0xff]
          %v1125 = vld [vmem:[%s369 + $0x178] sm:$0xff]
          %v1126 = vld [vmem:[%s369 + $0x180] sm:$0xff]
          %v1127 = vld [vmem:[%s369 + $0x188] sm:$0xff]
          %v1128 = vld [vmem:[%s369 + $0x190] sm:$0xff]
          %v1129 = vld [vmem:[%s369 + $0x198] sm:$0xff]
          %v1130 = vld [vmem:[%s369 + $0x1a0] sm:$0xff]
          %v1131 = vld [vmem:[%s369 + $0x1a8] sm:$0xff]
          %v1132 = vld [vmem:[%s369 + $0x1b0] sm:$0xff]
          %v1133 = vld [vmem:[%s369 + $0x1b8] sm:$0xff]
          %v1134 = vld [vmem:[%s369 + $0x1c0] sm:$0xff]
          %v1135 = vld [vmem:[%s369 + $0x1c8] sm:$0xff]
          %v1136 = vld [vmem:[%s369 + $0x1d0] sm:$0xff]
          %v1137 = vld [vmem:[%s369 + $0x1d8] sm:$0xff]
          %v1138 = vld [vmem:[%s369 + $0x1e0] sm:$0xff]
          %v1139 = vld [vmem:[%s369 + $0x1e8] sm:$0xff]
          %v1140 = vld [vmem:[%s369 + $0x1f0] sm:$0xff]
          %v1141 = vld [vmem:[%s369 + $0x1f8] sm:$0xff]
          %v1142 = vld [vmem:[%s369 + $0x200] sm:$0xff]
          %v1143 = vld [vmem:[%s369 + $0x208] sm:$0xff]
          %v1144 = vld [vmem:[%s369 + $0x210] sm:$0xff]
          %v1145 = vld [vmem:[%s369 + $0x218] sm:$0xff]
          %v1146 = vld [vmem:[%s369 + $0x220] sm:$0xff]
          %v1147 = vld [vmem:[%s369 + $0x228] sm:$0xff]
          %v1148 = vld [vmem:[%s369 + $0x230] sm:$0xff]
          %v1149 = vld [vmem:[%s369 + $0x238] sm:$0xff]
          %v1150 = vld [vmem:[%s369 + $0x240] sm:$0xff]
          %v1151 = vld [vmem:[%s369 + $0x248] sm:$0xff]
          %v1152 = vld [vmem:[%s369 + $0x250] sm:$0xff]
          %v1153 = vld [vmem:[%s369 + $0x258] sm:$0xff]
          %v1154 = vld [vmem:[%s369 + $0x260] sm:$0xff]
          %v1155 = vld [vmem:[%s369 + $0x268] sm:$0xff]
          %v1156 = vld [vmem:[%s369 + $0x270] sm:$0xff]
          %v1157 = vld [vmem:[%s369 + $0x278] sm:$0xff]
          %v1158 = vld [vmem:[%s369 + $0x280] sm:$0xff]
          %v1159 = vld [vmem:[%s369 + $0x288] sm:$0xff]
          %v1160 = vld [vmem:[%s369 + $0x290] sm:$0xff]
          %v1161 = vld [vmem:[%s369 + $0x298] sm:$0xff]
          %v1162 = vld [vmem:[%s369 + $0x2a0] sm:$0xff]
          %v1163 = vld [vmem:[%s369 + $0x2a8] sm:$0xff]
          %v1164 = vld [vmem:[%s369 + $0x2b0] sm:$0xff]
          %v1165 = vld [vmem:[%s369 + $0x2b8] sm:$0xff]
          %v1166 = vld [vmem:[%s369 + $0x2c0] sm:$0xff]
          %v1167 = vld [vmem:[%s369 + $0x2c8] sm:$0xff]
          %v1168 = vld [vmem:[%s369 + $0x2d0] sm:$0xff]
          %v1169 = vld [vmem:[%s369 + $0x2d8] sm:$0xff]
          %v1170 = vld [vmem:[%s369 + $0x2e0] sm:$0xff]
          %v1171 = vld [vmem:[%s369 + $0x2e8] sm:$0xff]
          %v1172 = vld [vmem:[%s369 + $0x2f0] sm:$0xff]
          %v1173 = vld [vmem:[%s369 + $0x2f8] sm:$0xff]
          %v1174 = vld [vmem:[%s369 + $0x300] sm:$0xff]
          %v1175 = vld [vmem:[%s369 + $0x308] sm:$0xff]
          %v1176 = vld [vmem:[%s369 + $0x310] sm:$0xff]
          %v1177 = vld [vmem:[%s369 + $0x318] sm:$0xff]
          %v1178 = vld [vmem:[%s369 + $0x320] sm:$0xff]
          %v1179 = vld [vmem:[%s369 + $0x328] sm:$0xff]
          %v1180 = vld [vmem:[%s369 + $0x330] sm:$0xff]
          %v1181 = vld [vmem:[%s369 + $0x338] sm:$0xff]
          %v1182 = vld [vmem:[%s369 + $0x340] sm:$0xff]
          %v1183 = vld [vmem:[%s369 + $0x348] sm:$0xff]
          %v1184 = vld [vmem:[%s369 + $0x350] sm:$0xff]
          %v1185 = vld [vmem:[%s369 + $0x358] sm:$0xff]
          %v1186 = vld [vmem:[%s369 + $0x360] sm:$0xff]
          %v1187 = vld [vmem:[%s369 + $0x368] sm:$0xff]
          %v1188 = vld [vmem:[%s369 + $0x370] sm:$0xff]
          %v1189 = vld [vmem:[%s369 + $0x378] sm:$0xff]
          %v1190 = vld [vmem:[%s369 + $0x380] sm:$0xff]
          %v1191 = vld [vmem:[%s369 + $0x388] sm:$0xff]
          %v1192 = vld [vmem:[%s369 + $0x390] sm:$0xff]
          %v1193 = vld [vmem:[%s369 + $0x398] sm:$0xff]
          %v1194 = vld [vmem:[%s369 + $0x3a0] sm:$0xff]
          %v1195 = vld [vmem:[%s369 + $0x3a8] sm:$0xff]
          %v1196 = vld [vmem:[%s369 + $0x3b0] sm:$0xff]
          %v1197 = vld [vmem:[%s369 + $0x3b8] sm:$0xff]
          %v1198 = vld [vmem:[%s369 + $0x3c0] sm:$0xff]
          %v1199 = vld [vmem:[%s369 + $0x3c8] sm:$0xff]
          %v1200 = vld [vmem:[%s369 + $0x3d0] sm:$0xff]
          %v1201 = vld [vmem:[%s369 + $0x3d8] sm:$0xff]
          %v1202 = vld [vmem:[%s369 + $0x3e0] sm:$0xff]
          %v1203 = vld [vmem:[%s369 + $0x3e8] sm:$0xff]
          %v1204 = vld [vmem:[%s369 + $0x3f0] sm:$0xff]
          %v1205 = vld [vmem:[%s369 + $0x3f8] sm:$0xff]
          %v1206 = vld [vmem:[%s369 + $0x400] sm:$0xff]
          %v1207 = vld [vmem:[%s369 + $0x408] sm:$0xff]
          %v1208 = vld [vmem:[%s369 + $0x410] sm:$0xff]
          %v1209 = vld [vmem:[%s369 + $0x418] sm:$0xff]
          %v1210 = vld [vmem:[%s369 + $0x420] sm:$0xff]
          %v1211 = vld [vmem:[%s369 + $0x428] sm:$0xff]
          %v1212 = vld [vmem:[%s369 + $0x430] sm:$0xff]
          %v1213 = vld [vmem:[%s369 + $0x438] sm:$0xff]
          %v1214 = vld [vmem:[%s369 + $0x440] sm:$0xff]
          %v1215 = vld [vmem:[%s369 + $0x448] sm:$0xff]
          %v1216 = vld [vmem:[%s369 + $0x450] sm:$0xff]
          %v1217 = vld [vmem:[%s369 + $0x458] sm:$0xff]
          %v1218 = vld [vmem:[%s369 + $0x460] sm:$0xff]
          %v1219 = vld [vmem:[%s369 + $0x468] sm:$0xff]
          %v1220 = vld [vmem:[%s369 + $0x470] sm:$0xff]
          %v1221 = vld [vmem:[%s369 + $0x478] sm:$0xff]
          %v1222 = vld [vmem:[%s369 + $0x480] sm:$0xff]
          %v1223 = vld [vmem:[%s369 + $0x488] sm:$0xff]
          %v1224 = vld [vmem:[%s369 + $0x490] sm:$0xff]
          %v1225 = vld [vmem:[%s369 + $0x498] sm:$0xff]
          %v1226 = vld [vmem:[%s369 + $0x4a0] sm:$0xff]
          %v1227 = vld [vmem:[%s369 + $0x4a8] sm:$0xff]
          %v1228 = vld [vmem:[%s369 + $0x4b0] sm:$0xff]
          %v1229 = vld [vmem:[%s369 + $0x4b8] sm:$0xff]
          %v1230 = vld [vmem:[%s369 + $0x4c0] sm:$0xff]
          %v1231 = vld [vmem:[%s369 + $0x4c8] sm:$0xff]
          %v1232 = vld [vmem:[%s369 + $0x4d0] sm:$0xff]
          %v1233 = vld [vmem:[%s369 + $0x4d8] sm:$0xff]
          %v1234 = vld [vmem:[%s369 + $0x4e0] sm:$0xff]
          %v1235 = vld [vmem:[%s369 + $0x4e8] sm:$0xff]
          %v1236 = vld [vmem:[%s369 + $0x4f0] sm:$0xff]
          %v1237 = vld [vmem:[%s369 + $0x4f8] sm:$0xff]
          %v1238 = vld [vmem:[%s369 + $0x500] sm:$0xff]
          %v1239 = vld [vmem:[%s369 + $0x508] sm:$0xff]
          %v1240 = vld [vmem:[%s369 + $0x510] sm:$0xff]
          %v1241 = vld [vmem:[%s369 + $0x518] sm:$0xff]
          %v1242 = vld [vmem:[%s369 + $0x520] sm:$0xff]
          %v1243 = vld [vmem:[%s369 + $0x528] sm:$0xff]
          %v1244 = vld [vmem:[%s369 + $0x530] sm:$0xff]
          %v1245 = vld [vmem:[%s369 + $0x538] sm:$0xff]
          %v1246 = vld [vmem:[%s369 + $0x540] sm:$0xff]
          %v1247 = vld [vmem:[%s369 + $0x548] sm:$0xff]
          %v1248 = vld [vmem:[%s369 + $0x550] sm:$0xff]
          %v1249 = vld [vmem:[%s369 + $0x558] sm:$0xff]
          %v1250 = vld [vmem:[%s369 + $0x560] sm:$0xff]
          %v1251 = vld [vmem:[%s369 + $0x568] sm:$0xff]
          %v1252 = vld [vmem:[%s369 + $0x570] sm:$0xff]
          %v1253 = vld [vmem:[%s369 + $0x578] sm:$0xff]
          %v1254 = vld [vmem:[%s369 + $0x580] sm:$0xff]
          %v1255 = vld [vmem:[%s369 + $0x588] sm:$0xff]
          %v1256 = vld [vmem:[%s369 + $0x590] sm:$0xff]
          %v1257 = vld [vmem:[%s369 + $0x598] sm:$0xff]
          %v1258 = vld [vmem:[%s369 + $0x5a0] sm:$0xff]
          %v1259 = vld [vmem:[%s369 + $0x5a8] sm:$0xff]
          %v1260 = vld [vmem:[%s369 + $0x5b0] sm:$0xff]
          %v1261 = vld [vmem:[%s369 + $0x5b8] sm:$0xff]
          %v1262 = vld [vmem:[%s369 + $0x5c0] sm:$0xff]
          %v1263 = vld [vmem:[%s369 + $0x5c8] sm:$0xff]
          %v1264 = vld [vmem:[%s369 + $0x5d0] sm:$0xff]
          %v1265 = vld [vmem:[%s369 + $0x5d8] sm:$0xff]
          %v1266 = vld [vmem:[%s369 + $0x5e0] sm:$0xff]
          %v1267 = vld [vmem:[%s369 + $0x5e8] sm:$0xff]
          %v1268 = vld [vmem:[%s369 + $0x5f0] sm:$0xff]
          %v1269 = vld [vmem:[%s369 + $0x5f8] sm:$0xff]
          %v1270 = vld [vmem:[%s369 + $0x600] sm:$0xff]
          %v1271 = vld [vmem:[%s369 + $0x608] sm:$0xff]
          %v1272 = vld [vmem:[%s369 + $0x610] sm:$0xff]
          %v1273 = vld [vmem:[%s369 + $0x618] sm:$0xff]
          %v1274 = vld [vmem:[%s369 + $0x620] sm:$0xff]
          %v1275 = vld [vmem:[%s369 + $0x628] sm:$0xff]
          %v1276 = vld [vmem:[%s369 + $0x630] sm:$0xff]
          %v1277 = vld [vmem:[%s369 + $0x638] sm:$0xff]
          %v1278 = vld [vmem:[%s369 + $0x640] sm:$0xff]
          %v1279 = vld [vmem:[%s369 + $0x648] sm:$0xff]
          %v1280 = vld [vmem:[%s369 + $0x650] sm:$0xff]
          %v1281 = vld [vmem:[%s369 + $0x658] sm:$0xff]
          %v1282 = vld [vmem:[%s369 + $0x660] sm:$0xff]
          %v1283 = vld [vmem:[%s369 + $0x668] sm:$0xff]
          %v1284 = vld [vmem:[%s369 + $0x670] sm:$0xff]
          %v1285 = vld [vmem:[%s369 + $0x678] sm:$0xff]
          %v1286 = vld [vmem:[%s369 + $0x680] sm:$0xff]
          %v1287 = vld [vmem:[%s369 + $0x688] sm:$0xff]
          %v1288 = vld [vmem:[%s369 + $0x690] sm:$0xff]
          %v1289 = vld [vmem:[%s369 + $0x698] sm:$0xff]
          %v1290 = vld [vmem:[%s369 + $0x6a0] sm:$0xff]
          %v1291 = vld [vmem:[%s369 + $0x6a8] sm:$0xff]
          %v1292 = vld [vmem:[%s369 + $0x6b0] sm:$0xff]
          %v1293 = vld [vmem:[%s369 + $0x6b8] sm:$0xff]
          %v1294 = vld [vmem:[%s369 + $0x6c0] sm:$0xff]
          %v1295 = vld [vmem:[%s369 + $0x6c8] sm:$0xff]
          %v1296 = vld [vmem:[%s369 + $0x6d0] sm:$0xff]
          %v1297 = vld [vmem:[%s369 + $0x6d8] sm:$0xff]
          %v1298 = vld [vmem:[%s369 + $0x6e0] sm:$0xff]
          %v1299 = vld [vmem:[%s369 + $0x6e8] sm:$0xff]
          %v1300 = vld [vmem:[%s369 + $0x6f0] sm:$0xff]
          %v1301 = vld [vmem:[%s369 + $0x6f8] sm:$0xff]
          %v1302 = vld [vmem:[%s369 + $0x700] sm:$0xff]
          %v1303 = vld [vmem:[%s369 + $0x708] sm:$0xff]
          %v1304 = vld [vmem:[%s369 + $0x710] sm:$0xff]
          %v1305 = vld [vmem:[%s369 + $0x718] sm:$0xff]
          %v1306 = vld [vmem:[%s369 + $0x720] sm:$0xff]
          %v1307 = vld [vmem:[%s369 + $0x728] sm:$0xff]
          %v1308 = vld [vmem:[%s369 + $0x730] sm:$0xff]
          %v1309 = vld [vmem:[%s369 + $0x738] sm:$0xff]
          %v1310 = vld [vmem:[%s369 + $0x740] sm:$0xff]
          %v1311 = vld [vmem:[%s369 + $0x748] sm:$0xff]
          %v1312 = vld [vmem:[%s369 + $0x750] sm:$0xff]
          %v1313 = vld [vmem:[%s369 + $0x758] sm:$0xff]
          %v1314 = vld [vmem:[%s369 + $0x760] sm:$0xff]
          %v1315 = vld [vmem:[%s369 + $0x768] sm:$0xff]
          %v1316 = vld [vmem:[%s369 + $0x770] sm:$0xff]
          %v1317 = vld [vmem:[%s369 + $0x778] sm:$0xff]
          %v1318 = vld [vmem:[%s369 + $0x780] sm:$0xff]
          %v1319 = vld [vmem:[%s369 + $0x788] sm:$0xff]
          %v1320 = vld [vmem:[%s369 + $0x790] sm:$0xff]
          %v1321 = vld [vmem:[%s369 + $0x798] sm:$0xff]
          %v1322 = vld [vmem:[%s369 + $0x7a0] sm:$0xff]
          %v1323 = vld [vmem:[%s369 + $0x7a8] sm:$0xff]
          %v1324 = vld [vmem:[%s369 + $0x7b0] sm:$0xff]
          %v1325 = vld [vmem:[%s369 + $0x7b8] sm:$0xff]
          %v1326 = vld [vmem:[%s369 + $0x7c0] sm:$0xff]
          %v1327 = vld [vmem:[%s369 + $0x7c8] sm:$0xff]
          %v1328 = vld [vmem:[%s369 + $0x7d0] sm:$0xff]
          %v1329 = vld [vmem:[%s369 + $0x7d8] sm:$0xff]
          %v1330 = vld [vmem:[%s369 + $0x7e0] sm:$0xff]
          %v1331 = vld [vmem:[%s369 + $0x7e8] sm:$0xff]
          %v1332 = vld [vmem:[%s369 + $0x7f0] sm:$0xff]
          %v1333 = vld [vmem:[%s369 + $0x7f8] sm:$0xff]
          %v1334 = vld [vmem:[%s369 + $0x800] sm:$0xff]
          %v1335 = vld [vmem:[%s369 + $0x808] sm:$0xff]
          %v1336 = vld [vmem:[%s369 + $0x810] sm:$0xff]
          %v1337 = vld [vmem:[%s369 + $0x818] sm:$0xff]
          %v1338 = vld [vmem:[%s369 + $0x820] sm:$0xff]
          %v1339 = vld [vmem:[%s369 + $0x828] sm:$0xff]
          %v1340 = vld [vmem:[%s369 + $0x830] sm:$0xff]
          %v1341 = vld [vmem:[%s369 + $0x838] sm:$0xff]
          %v1342 = vld [vmem:[%s369 + $0x840] sm:$0xff]
          %v1343 = vld [vmem:[%s369 + $0x848] sm:$0xff]
          %v1344 = vld [vmem:[%s369 + $0x850] sm:$0xff]
          %v1345 = vld [vmem:[%s369 + $0x858] sm:$0xff]
          %v1346 = vld [vmem:[%s369 + $0x860] sm:$0xff]
          %v1347 = vld [vmem:[%s369 + $0x868] sm:$0xff]
          %v1348 = vld [vmem:[%s369 + $0x870] sm:$0xff]
          %v1349 = vld [vmem:[%s369 + $0x878] sm:$0xff]
          %v1350 = vld [vmem:[%s369 + $0x880] sm:$0xff]
          %v1351 = vld [vmem:[%s369 + $0x888] sm:$0xff]
          %v1352 = vld [vmem:[%s369 + $0x890] sm:$0xff]
          %v1353 = vld [vmem:[%s369 + $0x898] sm:$0xff]
          %v1354 = vld [vmem:[%s369 + $0x8a0] sm:$0xff]
          %v1355 = vld [vmem:[%s369 + $0x8a8] sm:$0xff]
          %v1356 = vld [vmem:[%s369 + $0x8b0] sm:$0xff]
          %v1357 = vld [vmem:[%s369 + $0x8b8] sm:$0xff]
          %v1358 = vld [vmem:[%s369 + $0x8c0] sm:$0xff]
          %v1359 = vld [vmem:[%s369 + $0x8c8] sm:$0xff]
          %v1360 = vld [vmem:[%s369 + $0x8d0] sm:$0xff]
          %v1361 = vld [vmem:[%s369 + $0x8d8] sm:$0xff]
          %v1362 = vld [vmem:[%s369 + $0x8e0] sm:$0xff]
          %v1363 = vld [vmem:[%s369 + $0x8e8] sm:$0xff]
          %v1364 = vld [vmem:[%s369 + $0x8f0] sm:$0xff]
          %v1365 = vld [vmem:[%s369 + $0x8f8] sm:$0xff]
          %v1366 = vld [vmem:[%s369 + $0x900] sm:$0xff]
          %v1367 = vld [vmem:[%s369 + $0x908] sm:$0xff]
          %v1368 = vld [vmem:[%s369 + $0x910] sm:$0xff]
          %v1369 = vld [vmem:[%s369 + $0x918] sm:$0xff]
          %v1370 = vld [vmem:[%s369 + $0x920] sm:$0xff]
          %v1371 = vld [vmem:[%s369 + $0x928] sm:$0xff]
          %v1372 = vld [vmem:[%s369 + $0x930] sm:$0xff]
          %v1373 = vld [vmem:[%s369 + $0x938] sm:$0xff]
          %v1374 = vld [vmem:[%s369 + $0x940] sm:$0xff]
          %v1375 = vld [vmem:[%s369 + $0x948] sm:$0xff]
          %v1376 = vld [vmem:[%s369 + $0x950] sm:$0xff]
          %v1377 = vld [vmem:[%s369 + $0x958] sm:$0xff]
          %v1378 = vld [vmem:[%s369 + $0x960] sm:$0xff]
          %v1379 = vld [vmem:[%s369 + $0x968] sm:$0xff]
          %v1380 = vld [vmem:[%s369 + $0x970] sm:$0xff]
          %v1381 = vld [vmem:[%s369 + $0x978] sm:$0xff]
          %v1382 = vld [vmem:[%s369 + $0x980] sm:$0xff]
          %v1383 = vld [vmem:[%s369 + $0x988] sm:$0xff]
          %v1384 = vld [vmem:[%s369 + $0x990] sm:$0xff]
          %v1385 = vld [vmem:[%s369 + $0x998] sm:$0xff]
          %v1386 = vld [vmem:[%s369 + $0x9a0] sm:$0xff]
          %v1387 = vld [vmem:[%s369 + $0x9a8] sm:$0xff]
          %v1388 = vld [vmem:[%s369 + $0x9b0] sm:$0xff]
          %v1389 = vld [vmem:[%s369 + $0x9b8] sm:$0xff]
          %v1390 = vld [vmem:[%s369 + $0x9c0] sm:$0xff]
          %v1391 = vld [vmem:[%s369 + $0x9c8] sm:$0xff]
          %v1392 = vld [vmem:[%s369 + $0x9d0] sm:$0xff]
          %v1393 = vld [vmem:[%s369 + $0x9d8] sm:$0xff]
          %v1394 = vld [vmem:[%s369 + $0x9e0] sm:$0xff]
          %v1395 = vld [vmem:[%s369 + $0x9e8] sm:$0xff]
          %v1396 = vld [vmem:[%s369 + $0x9f0] sm:$0xff]
          %v1397 = vld [vmem:[%s369 + $0x9f8] sm:$0xff]
          %v1398 = vld [vmem:[%s369 + $0xa00] sm:$0xff]
          %v1399 = vld [vmem:[%s369 + $0xa08] sm:$0xff]
          %v1400 = vld [vmem:[%s369 + $0xa10] sm:$0xff]
          %v1401 = vld [vmem:[%s369 + $0xa18] sm:$0xff]
          %v1402 = vld [vmem:[%s369 + $0xa20] sm:$0xff]
          %v1403 = vld [vmem:[%s369 + $0xa28] sm:$0xff]
          %v1404 = vld [vmem:[%s369 + $0xa30] sm:$0xff]
          %v1405 = vld [vmem:[%s369 + $0xa38] sm:$0xff]
          %v1406 = vld [vmem:[%s369 + $0xa40] sm:$0xff]
          %v1407 = vld [vmem:[%s369 + $0xa48] sm:$0xff]
          %v1408 = vld [vmem:[%s369 + $0xa50] sm:$0xff]
          %v1409 = vld [vmem:[%s369 + $0xa58] sm:$0xff]
          %v1410 = vld [vmem:[%s369 + $0xa60] sm:$0xff]
          %v1411 = vld [vmem:[%s369 + $0xa68] sm:$0xff]
          %v1412 = vld [vmem:[%s369 + $0xa70] sm:$0xff]
          %v1413 = vld [vmem:[%s369 + $0xa78] sm:$0xff]
          %v1414 = vld [vmem:[%s369 + $0xa80] sm:$0xff]
          %v1415 = vld [vmem:[%s369 + $0xa88] sm:$0xff]
          %v1416 = vld [vmem:[%s369 + $0xa90] sm:$0xff]
          %v1417 = vld [vmem:[%s369 + $0xa98] sm:$0xff]
          %v1418 = vld [vmem:[%s369 + $0xaa0] sm:$0xff]
          %v1419 = vld [vmem:[%s369 + $0xaa8] sm:$0xff]
          %v1420 = vld [vmem:[%s369 + $0xab0] sm:$0xff]
          %v1421 = vld [vmem:[%s369 + $0xab8] sm:$0xff]
          %v1422 = vld [vmem:[%s369 + $0xac0] sm:$0xff]
          %v1423 = vld [vmem:[%s369 + $0xac8] sm:$0xff]
          %v1424 = vld [vmem:[%s369 + $0xad0] sm:$0xff]
          %v1425 = vld [vmem:[%s369 + $0xad8] sm:$0xff]
          %v1426 = vld [vmem:[%s369 + $0xae0] sm:$0xff]
          %v1427 = vld [vmem:[%s369 + $0xae8] sm:$0xff]
          %v1428 = vld [vmem:[%s369 + $0xaf0] sm:$0xff]
          %v1429 = vld [vmem:[%s369 + $0xaf8] sm:$0xff]
          %v1430 = vld [vmem:[%s369 + $0xb00] sm:$0xff]
          %v1431 = vld [vmem:[%s369 + $0xb08] sm:$0xff]
          %v1432 = vld [vmem:[%s369 + $0xb10] sm:$0xff]
          %v1433 = vld [vmem:[%s369 + $0xb18] sm:$0xff]
          %v1434 = vld [vmem:[%s369 + $0xb20] sm:$0xff]
          %v1435 = vld [vmem:[%s369 + $0xb28] sm:$0xff]
          %v1436 = vld [vmem:[%s369 + $0xb30] sm:$0xff]
          %v1437 = vld [vmem:[%s369 + $0xb38] sm:$0xff]
          %v1438 = vld [vmem:[%s369 + $0xb40] sm:$0xff]
          %v1439 = vld [vmem:[%s369 + $0xb48] sm:$0xff]
          %v1440 = vld [vmem:[%s369 + $0xb50] sm:$0xff]
          %v1441 = vld [vmem:[%s369 + $0xb58] sm:$0xff]
          %v1442 = vld [vmem:[%s369 + $0xb60] sm:$0xff]
          %v1443 = vld [vmem:[%s369 + $0xb68] sm:$0xff]
          %v1444 = vld [vmem:[%s369 + $0xb70] sm:$0xff]
          %v1445 = vld [vmem:[%s369 + $0xb78] sm:$0xff]
          %v1446 = vld [vmem:[%s369 + $0xb80] sm:$0xff]
          %v1447 = vld [vmem:[%s369 + $0xb88] sm:$0xff]
          %v1448 = vld [vmem:[%s369 + $0xb90] sm:$0xff]
          %v1449 = vld [vmem:[%s369 + $0xb98] sm:$0xff]
          %v1450 = vld [vmem:[%s369 + $0xba0] sm:$0xff]
          %v1451 = vld [vmem:[%s369 + $0xba8] sm:$0xff]
          %v1452 = vld [vmem:[%s369 + $0xbb0] sm:$0xff]
          %v1453 = vld [vmem:[%s369 + $0xbb8] sm:$0xff]
          %v1454 = vld [vmem:[%s369 + $0xbc0] sm:$0xff]
          %v1455 = vld [vmem:[%s369 + $0xbc8] sm:$0xff]
          %v1456 = vld [vmem:[%s369 + $0xbd0] sm:$0xff]
          %v1457 = vld [vmem:[%s369 + $0xbd8] sm:$0xff]
          %v1458 = vld [vmem:[%s369 + $0xbe0] sm:$0xff]
          %v1459 = vld [vmem:[%s369 + $0xbe8] sm:$0xff]
          %v1460 = vld [vmem:[%s369 + $0xbf0] sm:$0xff]
          %v1461 = vld [vmem:[%s369 + $0xbf8] sm:$0xff]
          %v1462 = vld [vmem:[%s369 + $0xc00] sm:$0xff]
          %v1463 = vld [vmem:[%s369 + $0xc08] sm:$0xff]
          %v1464 = vld [vmem:[%s369 + $0xc10] sm:$0xff]
          %v1465 = vld [vmem:[%s369 + $0xc18] sm:$0xff]
          %v1466 = vld [vmem:[%s369 + $0xc20] sm:$0xff]
          %v1467 = vld [vmem:[%s369 + $0xc28] sm:$0xff]
          %v1468 = vld [vmem:[%s369 + $0xc30] sm:$0xff]
          %v1469 = vld [vmem:[%s369 + $0xc38] sm:$0xff]
          %v1470 = vld [vmem:[%s369 + $0xc40] sm:$0xff]
          %v1471 = vld [vmem:[%s369 + $0xc48] sm:$0xff]
          %v1472 = vld [vmem:[%s369 + $0xc50] sm:$0xff]
          %v1473 = vld [vmem:[%s369 + $0xc58] sm:$0xff]
          %v1474 = vld [vmem:[%s369 + $0xc60] sm:$0xff]
          %v1475 = vld [vmem:[%s369 + $0xc68] sm:$0xff]
          %v1476 = vld [vmem:[%s369 + $0xc70] sm:$0xff]
          %v1477 = vld [vmem:[%s369 + $0xc78] sm:$0xff]
          %v1478 = vld [vmem:[%s369 + $0xc80] sm:$0xff]
          %v1479 = vld [vmem:[%s369 + $0xc88] sm:$0xff]
          %v1480 = vld [vmem:[%s369 + $0xc90] sm:$0xff]
          %v1481 = vld [vmem:[%s369 + $0xc98] sm:$0xff]
          %v1482 = vld [vmem:[%s369 + $0xca0] sm:$0xff]
          %v1483 = vld [vmem:[%s369 + $0xca8] sm:$0xff]
          %v1484 = vld [vmem:[%s369 + $0xcb0] sm:$0xff]
          %v1485 = vld [vmem:[%s369 + $0xcb8] sm:$0xff]
          %v1486 = vld [vmem:[%s369 + $0xcc0] sm:$0xff]
          %v1487 = vld [vmem:[%s369 + $0xcc8] sm:$0xff]
          %v1488 = vld [vmem:[%s369 + $0xcd0] sm:$0xff]
          %v1489 = vld [vmem:[%s369 + $0xcd8] sm:$0xff]
          %v1490 = vld [vmem:[%s369 + $0xce0] sm:$0xff]
          %v1491 = vld [vmem:[%s369 + $0xce8] sm:$0xff]
          %v1492 = vld [vmem:[%s369 + $0xcf0] sm:$0xff]
          %v1493 = vld [vmem:[%s369 + $0xcf8] sm:$0xff]
          %v1494 = vld [vmem:[%s369 + $0xd00] sm:$0xff]
          %v1495 = vld [vmem:[%s369 + $0xd08] sm:$0xff]
          %v1496 = vld [vmem:[%s369 + $0xd10] sm:$0xff]
          %v1497 = vld [vmem:[%s369 + $0xd18] sm:$0xff]
          %v1498 = vld [vmem:[%s369 + $0xd20] sm:$0xff]
          %v1499 = vld [vmem:[%s369 + $0xd28] sm:$0xff]
          %v1500 = vld [vmem:[%s369 + $0xd30] sm:$0xff]
          %v1501 = vld [vmem:[%s369 + $0xd38] sm:$0xff]
          %v1502 = vld [vmem:[%s369 + $0xd40] sm:$0xff]
          %v1503 = vld [vmem:[%s369 + $0xd48] sm:$0xff]
          %v1504 = vld [vmem:[%s369 + $0xd50] sm:$0xff]
          %v1505 = vld [vmem:[%s369 + $0xd58] sm:$0xff]
          %v1506 = vld [vmem:[%s369 + $0xd60] sm:$0xff]
          %v1507 = vld [vmem:[%s369 + $0xd68] sm:$0xff]
          %v1508 = vld [vmem:[%s369 + $0xd70] sm:$0xff]
          %v1509 = vld [vmem:[%s369 + $0xd78] sm:$0xff]
          %v1510 = vld [vmem:[%s369 + $0xd80] sm:$0xff]
          %v1511 = vld [vmem:[%s369 + $0xd88] sm:$0xff]
          %v1512 = vld [vmem:[%s369 + $0xd90] sm:$0xff]
          %v1513 = vld [vmem:[%s369 + $0xd98] sm:$0xff]
          %v1514 = vld [vmem:[%s369 + $0xda0] sm:$0xff]
          %v1515 = vld [vmem:[%s369 + $0xda8] sm:$0xff]
          %v1516 = vld [vmem:[%s369 + $0xdb0] sm:$0xff]
          %v1517 = vld [vmem:[%s369 + $0xdb8] sm:$0xff]
          %v1518 = vld [vmem:[%s369 + $0xdc0] sm:$0xff]
          %v1519 = vld [vmem:[%s369 + $0xdc8] sm:$0xff]
          %v1520 = vld [vmem:[%s369 + $0xdd0] sm:$0xff]
          %v1521 = vld [vmem:[%s369 + $0xdd8] sm:$0xff]
          %v1522 = vld [vmem:[%s369 + $0xde0] sm:$0xff]
          %v1523 = vld [vmem:[%s369 + $0xde8] sm:$0xff]
          %v1524 = vld [vmem:[%s369 + $0xdf0] sm:$0xff]
          %v1525 = vld [vmem:[%s369 + $0xdf8] sm:$0xff]
          %v1526 = vld [vmem:[%s369 + $0xe00] sm:$0xff]
          %v1527 = vld [vmem:[%s369 + $0xe08] sm:$0xff]
          %v1528 = vld [vmem:[%s369 + $0xe10] sm:$0xff]
          %v1529 = vld [vmem:[%s369 + $0xe18] sm:$0xff]
          %v1530 = vld [vmem:[%s369 + $0xe20] sm:$0xff]
          %v1531 = vld [vmem:[%s369 + $0xe28] sm:$0xff]
          %v1532 = vld [vmem:[%s369 + $0xe30] sm:$0xff]
          %v1533 = vld [vmem:[%s369 + $0xe38] sm:$0xff]
          %v1534 = vld [vmem:[%s369 + $0xe40] sm:$0xff]
          %v1535 = vld [vmem:[%s369 + $0xe48] sm:$0xff]
          %v1536 = vld [vmem:[%s369 + $0xe50] sm:$0xff]
          %v1537 = vld [vmem:[%s369 + $0xe58] sm:$0xff]
          %v1538 = vld [vmem:[%s369 + $0xe60] sm:$0xff]
          %v1539 = vld [vmem:[%s369 + $0xe68] sm:$0xff]
          %v1540 = vld [vmem:[%s369 + $0xe70] sm:$0xff]
          %v1541 = vld [vmem:[%s369 + $0xe78] sm:$0xff]
          %v1542 = vld [vmem:[%s369 + $0xe80] sm:$0xff]
          %v1543 = vld [vmem:[%s369 + $0xe88] sm:$0xff]
          %v1544 = vld [vmem:[%s369 + $0xe90] sm:$0xff]
          %v1545 = vld [vmem:[%s369 + $0xe98] sm:$0xff]
          %v1546 = vld [vmem:[%s369 + $0xea0] sm:$0xff]
          %v1547 = vld [vmem:[%s369 + $0xea8] sm:$0xff]
          %v1548 = vld [vmem:[%s369 + $0xeb0] sm:$0xff]
          %v1549 = vld [vmem:[%s369 + $0xeb8] sm:$0xff]
          %v1550 = vld [vmem:[%s369 + $0xec0] sm:$0xff]
          %v1551 = vld [vmem:[%s369 + $0xec8] sm:$0xff]
          %v1552 = vld [vmem:[%s369 + $0xed0] sm:$0xff]
          %v1553 = vld [vmem:[%s369 + $0xed8] sm:$0xff]
          %v1554 = vld [vmem:[%s369 + $0xee0] sm:$0xff]
          %v1555 = vld [vmem:[%s369 + $0xee8] sm:$0xff]
          %v1556 = vld [vmem:[%s369 + $0xef0] sm:$0xff]
          %v1557 = vld [vmem:[%s369 + $0xef8] sm:$0xff]
          %v1558 = vld [vmem:[%s369 + $0xf00] sm:$0xff]
          %v1559 = vld [vmem:[%s369 + $0xf08] sm:$0xff]
          %v1560 = vld [vmem:[%s369 + $0xf10] sm:$0xff]
          %v1561 = vld [vmem:[%s369 + $0xf18] sm:$0xff]
          %v1562 = vld [vmem:[%s369 + $0xf20] sm:$0xff]
          %v1563 = vld [vmem:[%s369 + $0xf28] sm:$0xff]
          %v1564 = vld [vmem:[%s369 + $0xf30] sm:$0xff]
          %v1565 = vld [vmem:[%s369 + $0xf38] sm:$0xff]
          %v1566 = vld [vmem:[%s369 + $0xf40] sm:$0xff]
          %v1567 = vld [vmem:[%s369 + $0xf48] sm:$0xff]
          %v1568 = vld [vmem:[%s369 + $0xf50] sm:$0xff]
          %v1569 = vld [vmem:[%s369 + $0xf58] sm:$0xff]
          %v1570 = vld [vmem:[%s369 + $0xf60] sm:$0xff]
          %v1571 = vld [vmem:[%s369 + $0xf68] sm:$0xff]
          %v1572 = vld [vmem:[%s369 + $0xf70] sm:$0xff]
          %v1573 = vld [vmem:[%s369 + $0xf78] sm:$0xff]
          %v1574 = vld [vmem:[%s369 + $0xf80] sm:$0xff]
          %v1575 = vld [vmem:[%s369 + $0xf88] sm:$0xff]
          %v1576 = vld [vmem:[%s369 + $0xf90] sm:$0xff]
          %v1577 = vld [vmem:[%s369 + $0xf98] sm:$0xff]
          %v1578 = vld [vmem:[%s369 + $0xfa0] sm:$0xff]
          %v1579 = vld [vmem:[%s369 + $0xfa8] sm:$0xff]
          %v1580 = vld [vmem:[%s369 + $0xfb0] sm:$0xff]
          %v1581 = vld [vmem:[%s369 + $0xfb8] sm:$0xff]
          %v1582 = vld [vmem:[%s369 + $0xfc0] sm:$0xff]
          %v1583 = vld [vmem:[%s369 + $0xfc8] sm:$0xff]
          %v1584 = vld [vmem:[%s369 + $0xfd0] sm:$0xff]
          %v1585 = vld [vmem:[%s369 + $0xfd8] sm:$0xff]
          %v1586 = vld [vmem:[%s369 + $0xfe0] sm:$0xff]
          %v1587 = vld [vmem:[%s369 + $0xfe8] sm:$0xff]
          %v1588 = vld [vmem:[%s369 + $0xff0] sm:$0xff]
          %v1589 = vld [vmem:[%s369 + $0xff8] sm:$0xff]
          %v1590 = vld [vmem:[%s378] sm:$0xff]
          %v1592 = vlaneseq
          %v1593 = vshrl.u32 %v1592, 7
          %v1594 = vsub.s32 0, %v1593
          %v1595 = vrot.slane %v1590, %v1594
          %v1596 = vlaneseq
          %v1597 = vshrl.u32 %v1596, 7
          %v1598 = vsub.s32 1, %v1597
          %v1599 = vrot.slane %v1590, %v1598
          %v1600 = vlaneseq
          %v1601 = vshrl.u32 %v1600, 7
          %v1602 = vsub.s32 2, %v1601
          %v1603 = vrot.slane %v1590, %v1602
          %v1604 = vlaneseq
          %v1605 = vshrl.u32 %v1604, 7
          %v1606 = vsub.s32 3, %v1605
          %v1607 = vrot.slane %v1590, %v1606
          %v1608 = vlaneseq
          %v1609 = vshrl.u32 %v1608, 7
          %v1610 = vsub.s32 4, %v1609
          %v1611 = vrot.slane %v1590, %v1610
          %v1612 = vlaneseq
          %v1613 = vshrl.u32 %v1612, 7
          %v1614 = vsub.s32 5, %v1613
          %v1615 = vrot.slane %v1590, %v1614
          %v1616 = vlaneseq
          %v1617 = vshrl.u32 %v1616, 7
          %v1618 = vsub.s32 6, %v1617
          %v1619 = vrot.slane %v1590, %v1618
          %v1620 = vlaneseq
          %v1621 = vshrl.u32 %v1620, 7
          %v1622 = vsub.s32 7, %v1621
          %v1623 = vrot.slane %v1590, %v1622
          %v2144 = vunpack.c.l.b16 %v1078
          %v2145 = vunpack.c.h.b16 %v1078
          %v2146 = vunpack.c.l.b16 %v1079
          %v2147 = vunpack.c.h.b16 %v1079
          %v2148 = vunpack.c.l.b16 %v1080
          %v2149 = vunpack.c.h.b16 %v1080
          %v2150 = vunpack.c.l.b16 %v1081
          %v2151 = vunpack.c.h.b16 %v1081
          %v2152 = vunpack.c.l.b16 %v1082
          %v2153 = vunpack.c.h.b16 %v1082
          %v2154 = vunpack.c.l.b16 %v1083
          %v2155 = vunpack.c.h.b16 %v1083
          %v2156 = vunpack.c.l.b16 %v1084
          %v2157 = vunpack.c.h.b16 %v1084
          %v2158 = vunpack.c.l.b16 %v1085
          %v2159 = vunpack.c.h.b16 %v1085
          %v2160 = vunpack.c.l.b16 %v1086
          %v2161 = vunpack.c.h.b16 %v1086
          %v2162 = vunpack.c.l.b16 %v1087
          %v2163 = vunpack.c.h.b16 %v1087
          %v2164 = vunpack.c.l.b16 %v1088
          %v2165 = vunpack.c.h.b16 %v1088
          %v2166 = vunpack.c.l.b16 %v1089
          %v2167 = vunpack.c.h.b16 %v1089
          %v2168 = vunpack.c.l.b16 %v1090
          %v2169 = vunpack.c.h.b16 %v1090
          %v2170 = vunpack.c.l.b16 %v1091
          %v2171 = vunpack.c.h.b16 %v1091
          %v2172 = vunpack.c.l.b16 %v1092
          %v2173 = vunpack.c.h.b16 %v1092
          %v2174 = vunpack.c.l.b16 %v1093
          %v2175 = vunpack.c.h.b16 %v1093
          %v2176 = vunpack.c.l.b16 %v1094
          %v2177 = vunpack.c.h.b16 %v1094
          %v2178 = vunpack.c.l.b16 %v1095
          %v2179 = vunpack.c.h.b16 %v1095
          %v2180 = vunpack.c.l.b16 %v1096
          %v2181 = vunpack.c.h.b16 %v1096
          %v2182 = vunpack.c.l.b16 %v1097
          %v2183 = vunpack.c.h.b16 %v1097
          %v2184 = vunpack.c.l.b16 %v1098
          %v2185 = vunpack.c.h.b16 %v1098
          %v2186 = vunpack.c.l.b16 %v1099
          %v2187 = vunpack.c.h.b16 %v1099
          %v2188 = vunpack.c.l.b16 %v1100
          %v2189 = vunpack.c.h.b16 %v1100
          %v2190 = vunpack.c.l.b16 %v1101
          %v2191 = vunpack.c.h.b16 %v1101
          %v2192 = vunpack.c.l.b16 %v1102
          %v2193 = vunpack.c.h.b16 %v1102
          %v2194 = vunpack.c.l.b16 %v1103
          %v2195 = vunpack.c.h.b16 %v1103
          %v2196 = vunpack.c.l.b16 %v1104
          %v2197 = vunpack.c.h.b16 %v1104
          %v2198 = vunpack.c.l.b16 %v1105
          %v2199 = vunpack.c.h.b16 %v1105
          %v2200 = vunpack.c.l.b16 %v1106
          %v2201 = vunpack.c.h.b16 %v1106
          %v2202 = vunpack.c.l.b16 %v1107
          %v2203 = vunpack.c.h.b16 %v1107
          %v2204 = vunpack.c.l.b16 %v1108
          %v2205 = vunpack.c.h.b16 %v1108
          %v2206 = vunpack.c.l.b16 %v1109
          %v2207 = vunpack.c.h.b16 %v1109
          %v2208 = vunpack.c.l.b16 %v1110
          %v2209 = vunpack.c.h.b16 %v1110
          %v2210 = vunpack.c.l.b16 %v1111
          %v2211 = vunpack.c.h.b16 %v1111
          %v2212 = vunpack.c.l.b16 %v1112
          %v2213 = vunpack.c.h.b16 %v1112
          %v2214 = vunpack.c.l.b16 %v1113
          %v2215 = vunpack.c.h.b16 %v1113
          %v2216 = vunpack.c.l.b16 %v1114
          %v2217 = vunpack.c.h.b16 %v1114
          %v2218 = vunpack.c.l.b16 %v1115
          %v2219 = vunpack.c.h.b16 %v1115
          %v2220 = vunpack.c.l.b16 %v1116
          %v2221 = vunpack.c.h.b16 %v1116
          %v2222 = vunpack.c.l.b16 %v1117
          %v2223 = vunpack.c.h.b16 %v1117
          %v2224 = vunpack.c.l.b16 %v1118
          %v2225 = vunpack.c.h.b16 %v1118
          %v2226 = vunpack.c.l.b16 %v1119
          %v2227 = vunpack.c.h.b16 %v1119
          %v2228 = vunpack.c.l.b16 %v1120
          %v2229 = vunpack.c.h.b16 %v1120
          %v2230 = vunpack.c.l.b16 %v1121
          %v2231 = vunpack.c.h.b16 %v1121
          %v2232 = vunpack.c.l.b16 %v1122
          %v2233 = vunpack.c.h.b16 %v1122
          %v2234 = vunpack.c.l.b16 %v1123
          %v2235 = vunpack.c.h.b16 %v1123
          %v2236 = vunpack.c.l.b16 %v1124
          %v2237 = vunpack.c.h.b16 %v1124
          %v2238 = vunpack.c.l.b16 %v1125
          %v2239 = vunpack.c.h.b16 %v1125
          %v2240 = vunpack.c.l.b16 %v1126
          %v2241 = vunpack.c.h.b16 %v1126
          %v2242 = vunpack.c.l.b16 %v1127
          %v2243 = vunpack.c.h.b16 %v1127
          %v2244 = vunpack.c.l.b16 %v1128
          %v2245 = vunpack.c.h.b16 %v1128
          %v2246 = vunpack.c.l.b16 %v1129
          %v2247 = vunpack.c.h.b16 %v1129
          %v2248 = vunpack.c.l.b16 %v1130
          %v2249 = vunpack.c.h.b16 %v1130
          %v2250 = vunpack.c.l.b16 %v1131
          %v2251 = vunpack.c.h.b16 %v1131
          %v2252 = vunpack.c.l.b16 %v1132
          %v2253 = vunpack.c.h.b16 %v1132
          %v2254 = vunpack.c.l.b16 %v1133
          %v2255 = vunpack.c.h.b16 %v1133
          %v2256 = vunpack.c.l.b16 %v1134
          %v2257 = vunpack.c.h.b16 %v1134
          %v2258 = vunpack.c.l.b16 %v1135
          %v2259 = vunpack.c.h.b16 %v1135
          %v2260 = vunpack.c.l.b16 %v1136
          %v2261 = vunpack.c.h.b16 %v1136
          %v2262 = vunpack.c.l.b16 %v1137
          %v2263 = vunpack.c.h.b16 %v1137
          %v2264 = vunpack.c.l.b16 %v1138
          %v2265 = vunpack.c.h.b16 %v1138
          %v2266 = vunpack.c.l.b16 %v1139
          %v2267 = vunpack.c.h.b16 %v1139
          %v2268 = vunpack.c.l.b16 %v1140
          %v2269 = vunpack.c.h.b16 %v1140
          %v2270 = vunpack.c.l.b16 %v1141
          %v2271 = vunpack.c.h.b16 %v1141
          %v2272 = vunpack.c.l.b16 %v1142
          %v2273 = vunpack.c.h.b16 %v1142
          %v2274 = vunpack.c.l.b16 %v1143
          %v2275 = vunpack.c.h.b16 %v1143
          %v2276 = vunpack.c.l.b16 %v1144
          %v2277 = vunpack.c.h.b16 %v1144
          %v2278 = vunpack.c.l.b16 %v1145
          %v2279 = vunpack.c.h.b16 %v1145
          %v2280 = vunpack.c.l.b16 %v1146
          %v2281 = vunpack.c.h.b16 %v1146
          %v2282 = vunpack.c.l.b16 %v1147
          %v2283 = vunpack.c.h.b16 %v1147
          %v2284 = vunpack.c.l.b16 %v1148
          %v2285 = vunpack.c.h.b16 %v1148
          %v2286 = vunpack.c.l.b16 %v1149
          %v2287 = vunpack.c.h.b16 %v1149
          %v2288 = vunpack.c.l.b16 %v1150
          %v2289 = vunpack.c.h.b16 %v1150
          %v2290 = vunpack.c.l.b16 %v1151
          %v2291 = vunpack.c.h.b16 %v1151
          %v2292 = vunpack.c.l.b16 %v1152
          %v2293 = vunpack.c.h.b16 %v1152
          %v2294 = vunpack.c.l.b16 %v1153
          %v2295 = vunpack.c.h.b16 %v1153
          %v2296 = vunpack.c.l.b16 %v1154
          %v2297 = vunpack.c.h.b16 %v1154
          %v2298 = vunpack.c.l.b16 %v1155
          %v2299 = vunpack.c.h.b16 %v1155
          %v2300 = vunpack.c.l.b16 %v1156
          %v2301 = vunpack.c.h.b16 %v1156
          %v2302 = vunpack.c.l.b16 %v1157
          %v2303 = vunpack.c.h.b16 %v1157
          %v2304 = vunpack.c.l.b16 %v1158
          %v2305 = vunpack.c.h.b16 %v1158
          %v2306 = vunpack.c.l.b16 %v1159
          %v2307 = vunpack.c.h.b16 %v1159
          %v2308 = vunpack.c.l.b16 %v1160
          %v2309 = vunpack.c.h.b16 %v1160
          %v2310 = vunpack.c.l.b16 %v1161
          %v2311 = vunpack.c.h.b16 %v1161
          %v2312 = vunpack.c.l.b16 %v1162
          %v2313 = vunpack.c.h.b16 %v1162
          %v2314 = vunpack.c.l.b16 %v1163
          %v2315 = vunpack.c.h.b16 %v1163
          %v2316 = vunpack.c.l.b16 %v1164
          %v2317 = vunpack.c.h.b16 %v1164
          %v2318 = vunpack.c.l.b16 %v1165
          %v2319 = vunpack.c.h.b16 %v1165
          %v2320 = vunpack.c.l.b16 %v1166
          %v2321 = vunpack.c.h.b16 %v1166
          %v2322 = vunpack.c.l.b16 %v1167
          %v2323 = vunpack.c.h.b16 %v1167
          %v2324 = vunpack.c.l.b16 %v1168
          %v2325 = vunpack.c.h.b16 %v1168
          %v2326 = vunpack.c.l.b16 %v1169
          %v2327 = vunpack.c.h.b16 %v1169
          %v2328 = vunpack.c.l.b16 %v1170
          %v2329 = vunpack.c.h.b16 %v1170
          %v2330 = vunpack.c.l.b16 %v1171
          %v2331 = vunpack.c.h.b16 %v1171
          %v2332 = vunpack.c.l.b16 %v1172
          %v2333 = vunpack.c.h.b16 %v1172
          %v2334 = vunpack.c.l.b16 %v1173
          %v2335 = vunpack.c.h.b16 %v1173
          %v2336 = vunpack.c.l.b16 %v1174
          %v2337 = vunpack.c.h.b16 %v1174
          %v2338 = vunpack.c.l.b16 %v1175
          %v2339 = vunpack.c.h.b16 %v1175
          %v2340 = vunpack.c.l.b16 %v1176
          %v2341 = vunpack.c.h.b16 %v1176
          %v2342 = vunpack.c.l.b16 %v1177
          %v2343 = vunpack.c.h.b16 %v1177
          %v2344 = vunpack.c.l.b16 %v1178
          %v2345 = vunpack.c.h.b16 %v1178
          %v2346 = vunpack.c.l.b16 %v1179
          %v2347 = vunpack.c.h.b16 %v1179
          %v2348 = vunpack.c.l.b16 %v1180
          %v2349 = vunpack.c.h.b16 %v1180
          %v2350 = vunpack.c.l.b16 %v1181
          %v2351 = vunpack.c.h.b16 %v1181
          %v2352 = vunpack.c.l.b16 %v1182
          %v2353 = vunpack.c.h.b16 %v1182
          %v2354 = vunpack.c.l.b16 %v1183
          %v2355 = vunpack.c.h.b16 %v1183
          %v2356 = vunpack.c.l.b16 %v1184
          %v2357 = vunpack.c.h.b16 %v1184
          %v2358 = vunpack.c.l.b16 %v1185
          %v2359 = vunpack.c.h.b16 %v1185
          %v2360 = vunpack.c.l.b16 %v1186
          %v2361 = vunpack.c.h.b16 %v1186
          %v2362 = vunpack.c.l.b16 %v1187
          %v2363 = vunpack.c.h.b16 %v1187
          %v2364 = vunpack.c.l.b16 %v1188
          %v2365 = vunpack.c.h.b16 %v1188
          %v2366 = vunpack.c.l.b16 %v1189
          %v2367 = vunpack.c.h.b16 %v1189
          %v2368 = vunpack.c.l.b16 %v1190
          %v2369 = vunpack.c.h.b16 %v1190
          %v2370 = vunpack.c.l.b16 %v1191
          %v2371 = vunpack.c.h.b16 %v1191
          %v2372 = vunpack.c.l.b16 %v1192
          %v2373 = vunpack.c.h.b16 %v1192
          %v2374 = vunpack.c.l.b16 %v1193
          %v2375 = vunpack.c.h.b16 %v1193
          %v2376 = vunpack.c.l.b16 %v1194
          %v2377 = vunpack.c.h.b16 %v1194
          %v2378 = vunpack.c.l.b16 %v1195
          %v2379 = vunpack.c.h.b16 %v1195
          %v2380 = vunpack.c.l.b16 %v1196
          %v2381 = vunpack.c.h.b16 %v1196
          %v2382 = vunpack.c.l.b16 %v1197
          %v2383 = vunpack.c.h.b16 %v1197
          %v2384 = vunpack.c.l.b16 %v1198
          %v2385 = vunpack.c.h.b16 %v1198
          %v2386 = vunpack.c.l.b16 %v1199
          %v2387 = vunpack.c.h.b16 %v1199
          %v2388 = vunpack.c.l.b16 %v1200
          %v2389 = vunpack.c.h.b16 %v1200
          %v2390 = vunpack.c.l.b16 %v1201
          %v2391 = vunpack.c.h.b16 %v1201
          %v2392 = vunpack.c.l.b16 %v1202
          %v2393 = vunpack.c.h.b16 %v1202
          %v2394 = vunpack.c.l.b16 %v1203
          %v2395 = vunpack.c.h.b16 %v1203
          %v2396 = vunpack.c.l.b16 %v1204
          %v2397 = vunpack.c.h.b16 %v1204
          %v2398 = vunpack.c.l.b16 %v1205
          %v2399 = vunpack.c.h.b16 %v1205
          %v2400 = vunpack.c.l.b16 %v1206
          %v2401 = vunpack.c.h.b16 %v1206
          %v2402 = vunpack.c.l.b16 %v1207
          %v2403 = vunpack.c.h.b16 %v1207
          %v2404 = vunpack.c.l.b16 %v1208
          %v2405 = vunpack.c.h.b16 %v1208
          %v2406 = vunpack.c.l.b16 %v1209
          %v2407 = vunpack.c.h.b16 %v1209
          %v2408 = vunpack.c.l.b16 %v1210
          %v2409 = vunpack.c.h.b16 %v1210
          %v2410 = vunpack.c.l.b16 %v1211
          %v2411 = vunpack.c.h.b16 %v1211
          %v2412 = vunpack.c.l.b16 %v1212
          %v2413 = vunpack.c.h.b16 %v1212
          %v2414 = vunpack.c.l.b16 %v1213
          %v2415 = vunpack.c.h.b16 %v1213
          %v2416 = vunpack.c.l.b16 %v1214
          %v2417 = vunpack.c.h.b16 %v1214
          %v2418 = vunpack.c.l.b16 %v1215
          %v2419 = vunpack.c.h.b16 %v1215
          %v2420 = vunpack.c.l.b16 %v1216
          %v2421 = vunpack.c.h.b16 %v1216
          %v2422 = vunpack.c.l.b16 %v1217
          %v2423 = vunpack.c.h.b16 %v1217
          %v2424 = vunpack.c.l.b16 %v1218
          %v2425 = vunpack.c.h.b16 %v1218
          %v2426 = vunpack.c.l.b16 %v1219
          %v2427 = vunpack.c.h.b16 %v1219
          %v2428 = vunpack.c.l.b16 %v1220
          %v2429 = vunpack.c.h.b16 %v1220
          %v2430 = vunpack.c.l.b16 %v1221
          %v2431 = vunpack.c.h.b16 %v1221
          %v2432 = vunpack.c.l.b16 %v1222
          %v2433 = vunpack.c.h.b16 %v1222
          %v2434 = vunpack.c.l.b16 %v1223
          %v2435 = vunpack.c.h.b16 %v1223
          %v2436 = vunpack.c.l.b16 %v1224
          %v2437 = vunpack.c.h.b16 %v1224
          %v2438 = vunpack.c.l.b16 %v1225
          %v2439 = vunpack.c.h.b16 %v1225
          %v2440 = vunpack.c.l.b16 %v1226
          %v2441 = vunpack.c.h.b16 %v1226
          %v2442 = vunpack.c.l.b16 %v1227
          %v2443 = vunpack.c.h.b16 %v1227
          %v2444 = vunpack.c.l.b16 %v1228
          %v2445 = vunpack.c.h.b16 %v1228
          %v2446 = vunpack.c.l.b16 %v1229
          %v2447 = vunpack.c.h.b16 %v1229
          %v2448 = vunpack.c.l.b16 %v1230
          %v2449 = vunpack.c.h.b16 %v1230
          %v2450 = vunpack.c.l.b16 %v1231
          %v2451 = vunpack.c.h.b16 %v1231
          %v2452 = vunpack.c.l.b16 %v1232
          %v2453 = vunpack.c.h.b16 %v1232
          %v2454 = vunpack.c.l.b16 %v1233
          %v2455 = vunpack.c.h.b16 %v1233
          %v2456 = vunpack.c.l.b16 %v1234
          %v2457 = vunpack.c.h.b16 %v1234
          %v2458 = vunpack.c.l.b16 %v1235
          %v2459 = vunpack.c.h.b16 %v1235
          %v2460 = vunpack.c.l.b16 %v1236
          %v2461 = vunpack.c.h.b16 %v1236
          %v2462 = vunpack.c.l.b16 %v1237
          %v2463 = vunpack.c.h.b16 %v1237
          %v2464 = vunpack.c.l.b16 %v1238
          %v2465 = vunpack.c.h.b16 %v1238
          %v2466 = vunpack.c.l.b16 %v1239
          %v2467 = vunpack.c.h.b16 %v1239
          %v2468 = vunpack.c.l.b16 %v1240
          %v2469 = vunpack.c.h.b16 %v1240
          %v2470 = vunpack.c.l.b16 %v1241
          %v2471 = vunpack.c.h.b16 %v1241
          %v2472 = vunpack.c.l.b16 %v1242
          %v2473 = vunpack.c.h.b16 %v1242
          %v2474 = vunpack.c.l.b16 %v1243
          %v2475 = vunpack.c.h.b16 %v1243
          %v2476 = vunpack.c.l.b16 %v1244
          %v2477 = vunpack.c.h.b16 %v1244
          %v2478 = vunpack.c.l.b16 %v1245
          %v2479 = vunpack.c.h.b16 %v1245
          %v2480 = vunpack.c.l.b16 %v1246
          %v2481 = vunpack.c.h.b16 %v1246
          %v2482 = vunpack.c.l.b16 %v1247
          %v2483 = vunpack.c.h.b16 %v1247
          %v2484 = vunpack.c.l.b16 %v1248
          %v2485 = vunpack.c.h.b16 %v1248
          %v2486 = vunpack.c.l.b16 %v1249
          %v2487 = vunpack.c.h.b16 %v1249
          %v2488 = vunpack.c.l.b16 %v1250
          %v2489 = vunpack.c.h.b16 %v1250
          %v2490 = vunpack.c.l.b16 %v1251
          %v2491 = vunpack.c.h.b16 %v1251
          %v2492 = vunpack.c.l.b16 %v1252
          %v2493 = vunpack.c.h.b16 %v1252
          %v2494 = vunpack.c.l.b16 %v1253
          %v2495 = vunpack.c.h.b16 %v1253
          %v2496 = vunpack.c.l.b16 %v1254
          %v2497 = vunpack.c.h.b16 %v1254
          %v2498 = vunpack.c.l.b16 %v1255
          %v2499 = vunpack.c.h.b16 %v1255
          %v2500 = vunpack.c.l.b16 %v1256
          %v2501 = vunpack.c.h.b16 %v1256
          %v2502 = vunpack.c.l.b16 %v1257
          %v2503 = vunpack.c.h.b16 %v1257
          %v2504 = vunpack.c.l.b16 %v1258
          %v2505 = vunpack.c.h.b16 %v1258
          %v2506 = vunpack.c.l.b16 %v1259
          %v2507 = vunpack.c.h.b16 %v1259
          %v2508 = vunpack.c.l.b16 %v1260
          %v2509 = vunpack.c.h.b16 %v1260
          %v2510 = vunpack.c.l.b16 %v1261
          %v2511 = vunpack.c.h.b16 %v1261
          %v2512 = vunpack.c.l.b16 %v1262
          %v2513 = vunpack.c.h.b16 %v1262
          %v2514 = vunpack.c.l.b16 %v1263
          %v2515 = vunpack.c.h.b16 %v1263
          %v2516 = vunpack.c.l.b16 %v1264
          %v2517 = vunpack.c.h.b16 %v1264
          %v2518 = vunpack.c.l.b16 %v1265
          %v2519 = vunpack.c.h.b16 %v1265
          %v2520 = vunpack.c.l.b16 %v1266
          %v2521 = vunpack.c.h.b16 %v1266
          %v2522 = vunpack.c.l.b16 %v1267
          %v2523 = vunpack.c.h.b16 %v1267
          %v2524 = vunpack.c.l.b16 %v1268
          %v2525 = vunpack.c.h.b16 %v1268
          %v2526 = vunpack.c.l.b16 %v1269
          %v2527 = vunpack.c.h.b16 %v1269
          %v2528 = vunpack.c.l.b16 %v1270
          %v2529 = vunpack.c.h.b16 %v1270
          %v2530 = vunpack.c.l.b16 %v1271
          %v2531 = vunpack.c.h.b16 %v1271
          %v2532 = vunpack.c.l.b16 %v1272
          %v2533 = vunpack.c.h.b16 %v1272
          %v2534 = vunpack.c.l.b16 %v1273
          %v2535 = vunpack.c.h.b16 %v1273
          %v2536 = vunpack.c.l.b16 %v1274
          %v2537 = vunpack.c.h.b16 %v1274
          %v2538 = vunpack.c.l.b16 %v1275
          %v2539 = vunpack.c.h.b16 %v1275
          %v2540 = vunpack.c.l.b16 %v1276
          %v2541 = vunpack.c.h.b16 %v1276
          %v2542 = vunpack.c.l.b16 %v1277
          %v2543 = vunpack.c.h.b16 %v1277
          %v2544 = vunpack.c.l.b16 %v1278
          %v2545 = vunpack.c.h.b16 %v1278
          %v2546 = vunpack.c.l.b16 %v1279
          %v2547 = vunpack.c.h.b16 %v1279
          %v2548 = vunpack.c.l.b16 %v1280
          %v2549 = vunpack.c.h.b16 %v1280
          %v2550 = vunpack.c.l.b16 %v1281
          %v2551 = vunpack.c.h.b16 %v1281
          %v2552 = vunpack.c.l.b16 %v1282
          %v2553 = vunpack.c.h.b16 %v1282
          %v2554 = vunpack.c.l.b16 %v1283
          %v2555 = vunpack.c.h.b16 %v1283
          %v2556 = vunpack.c.l.b16 %v1284
          %v2557 = vunpack.c.h.b16 %v1284
          %v2558 = vunpack.c.l.b16 %v1285
          %v2559 = vunpack.c.h.b16 %v1285
          %v2560 = vunpack.c.l.b16 %v1286
          %v2561 = vunpack.c.h.b16 %v1286
          %v2562 = vunpack.c.l.b16 %v1287
          %v2563 = vunpack.c.h.b16 %v1287
          %v2564 = vunpack.c.l.b16 %v1288
          %v2565 = vunpack.c.h.b16 %v1288
          %v2566 = vunpack.c.l.b16 %v1289
          %v2567 = vunpack.c.h.b16 %v1289
          %v2568 = vunpack.c.l.b16 %v1290
          %v2569 = vunpack.c.h.b16 %v1290
          %v2570 = vunpack.c.l.b16 %v1291
          %v2571 = vunpack.c.h.b16 %v1291
          %v2572 = vunpack.c.l.b16 %v1292
          %v2573 = vunpack.c.h.b16 %v1292
          %v2574 = vunpack.c.l.b16 %v1293
          %v2575 = vunpack.c.h.b16 %v1293
          %v2576 = vunpack.c.l.b16 %v1294
          %v2577 = vunpack.c.h.b16 %v1294
          %v2578 = vunpack.c.l.b16 %v1295
          %v2579 = vunpack.c.h.b16 %v1295
          %v2580 = vunpack.c.l.b16 %v1296
          %v2581 = vunpack.c.h.b16 %v1296
          %v2582 = vunpack.c.l.b16 %v1297
          %v2583 = vunpack.c.h.b16 %v1297
          %v2584 = vunpack.c.l.b16 %v1298
          %v2585 = vunpack.c.h.b16 %v1298
          %v2586 = vunpack.c.l.b16 %v1299
          %v2587 = vunpack.c.h.b16 %v1299
          %v2588 = vunpack.c.l.b16 %v1300
          %v2589 = vunpack.c.h.b16 %v1300
          %v2590 = vunpack.c.l.b16 %v1301
          %v2591 = vunpack.c.h.b16 %v1301
          %v2592 = vunpack.c.l.b16 %v1302
          %v2593 = vunpack.c.h.b16 %v1302
          %v2594 = vunpack.c.l.b16 %v1303
          %v2595 = vunpack.c.h.b16 %v1303
          %v2596 = vunpack.c.l.b16 %v1304
          %v2597 = vunpack.c.h.b16 %v1304
          %v2598 = vunpack.c.l.b16 %v1305
          %v2599 = vunpack.c.h.b16 %v1305
          %v2600 = vunpack.c.l.b16 %v1306
          %v2601 = vunpack.c.h.b16 %v1306
          %v2602 = vunpack.c.l.b16 %v1307
          %v2603 = vunpack.c.h.b16 %v1307
          %v2604 = vunpack.c.l.b16 %v1308
          %v2605 = vunpack.c.h.b16 %v1308
          %v2606 = vunpack.c.l.b16 %v1309
          %v2607 = vunpack.c.h.b16 %v1309
          %v2608 = vunpack.c.l.b16 %v1310
          %v2609 = vunpack.c.h.b16 %v1310
          %v2610 = vunpack.c.l.b16 %v1311
          %v2611 = vunpack.c.h.b16 %v1311
          %v2612 = vunpack.c.l.b16 %v1312
          %v2613 = vunpack.c.h.b16 %v1312
          %v2614 = vunpack.c.l.b16 %v1313
          %v2615 = vunpack.c.h.b16 %v1313
          %v2616 = vunpack.c.l.b16 %v1314
          %v2617 = vunpack.c.h.b16 %v1314
          %v2618 = vunpack.c.l.b16 %v1315
          %v2619 = vunpack.c.h.b16 %v1315
          %v2620 = vunpack.c.l.b16 %v1316
          %v2621 = vunpack.c.h.b16 %v1316
          %v2622 = vunpack.c.l.b16 %v1317
          %v2623 = vunpack.c.h.b16 %v1317
          %v2624 = vunpack.c.l.b16 %v1318
          %v2625 = vunpack.c.h.b16 %v1318
          %v2626 = vunpack.c.l.b16 %v1319
          %v2627 = vunpack.c.h.b16 %v1319
          %v2628 = vunpack.c.l.b16 %v1320
          %v2629 = vunpack.c.h.b16 %v1320
          %v2630 = vunpack.c.l.b16 %v1321
          %v2631 = vunpack.c.h.b16 %v1321
          %v2632 = vunpack.c.l.b16 %v1322
          %v2633 = vunpack.c.h.b16 %v1322
          %v2634 = vunpack.c.l.b16 %v1323
          %v2635 = vunpack.c.h.b16 %v1323
          %v2636 = vunpack.c.l.b16 %v1324
          %v2637 = vunpack.c.h.b16 %v1324
          %v2638 = vunpack.c.l.b16 %v1325
          %v2639 = vunpack.c.h.b16 %v1325
          %v2640 = vunpack.c.l.b16 %v1326
          %v2641 = vunpack.c.h.b16 %v1326
          %v2642 = vunpack.c.l.b16 %v1327
          %v2643 = vunpack.c.h.b16 %v1327
          %v2644 = vunpack.c.l.b16 %v1328
          %v2645 = vunpack.c.h.b16 %v1328
          %v2646 = vunpack.c.l.b16 %v1329
          %v2647 = vunpack.c.h.b16 %v1329
          %v2648 = vunpack.c.l.b16 %v1330
          %v2649 = vunpack.c.h.b16 %v1330
          %v2650 = vunpack.c.l.b16 %v1331
          %v2651 = vunpack.c.h.b16 %v1331
          %v2652 = vunpack.c.l.b16 %v1332
          %v2653 = vunpack.c.h.b16 %v1332
          %v2654 = vunpack.c.l.b16 %v1333
          %v2655 = vunpack.c.h.b16 %v1333
          %v2656 = vunpack.c.l.b16 %v1334
          %v2657 = vunpack.c.h.b16 %v1334
          %v2658 = vunpack.c.l.b16 %v1335
          %v2659 = vunpack.c.h.b16 %v1335
          %v2660 = vunpack.c.l.b16 %v1336
          %v2661 = vunpack.c.h.b16 %v1336
          %v2662 = vunpack.c.l.b16 %v1337
          %v2663 = vunpack.c.h.b16 %v1337
          %v2664 = vunpack.c.l.b16 %v1338
          %v2665 = vunpack.c.h.b16 %v1338
          %v2666 = vunpack.c.l.b16 %v1339
          %v2667 = vunpack.c.h.b16 %v1339
          %v2668 = vunpack.c.l.b16 %v1340
          %v2669 = vunpack.c.h.b16 %v1340
          %v2670 = vunpack.c.l.b16 %v1341
          %v2671 = vunpack.c.h.b16 %v1341
          %v2672 = vunpack.c.l.b16 %v1342
          %v2673 = vunpack.c.h.b16 %v1342
          %v2674 = vunpack.c.l.b16 %v1343
          %v2675 = vunpack.c.h.b16 %v1343
          %v2676 = vunpack.c.l.b16 %v1344
          %v2677 = vunpack.c.h.b16 %v1344
          %v2678 = vunpack.c.l.b16 %v1345
          %v2679 = vunpack.c.h.b16 %v1345
          %v2680 = vunpack.c.l.b16 %v1346
          %v2681 = vunpack.c.h.b16 %v1346
          %v2682 = vunpack.c.l.b16 %v1347
          %v2683 = vunpack.c.h.b16 %v1347
          %v2684 = vunpack.c.l.b16 %v1348
          %v2685 = vunpack.c.h.b16 %v1348
          %v2686 = vunpack.c.l.b16 %v1349
          %v2687 = vunpack.c.h.b16 %v1349
          %v2688 = vunpack.c.l.b16 %v1350
          %v2689 = vunpack.c.h.b16 %v1350
          %v2690 = vunpack.c.l.b16 %v1351
          %v2691 = vunpack.c.h.b16 %v1351
          %v2692 = vunpack.c.l.b16 %v1352
          %v2693 = vunpack.c.h.b16 %v1352
          %v2694 = vunpack.c.l.b16 %v1353
          %v2695 = vunpack.c.h.b16 %v1353
          %v2696 = vunpack.c.l.b16 %v1354
          %v2697 = vunpack.c.h.b16 %v1354
          %v2698 = vunpack.c.l.b16 %v1355
          %v2699 = vunpack.c.h.b16 %v1355
          %v2700 = vunpack.c.l.b16 %v1356
          %v2701 = vunpack.c.h.b16 %v1356
          %v2702 = vunpack.c.l.b16 %v1357
          %v2703 = vunpack.c.h.b16 %v1357
          %v2704 = vunpack.c.l.b16 %v1358
          %v2705 = vunpack.c.h.b16 %v1358
          %v2706 = vunpack.c.l.b16 %v1359
          %v2707 = vunpack.c.h.b16 %v1359
          %v2708 = vunpack.c.l.b16 %v1360
          %v2709 = vunpack.c.h.b16 %v1360
          %v2710 = vunpack.c.l.b16 %v1361
          %v2711 = vunpack.c.h.b16 %v1361
          %v2712 = vunpack.c.l.b16 %v1362
          %v2713 = vunpack.c.h.b16 %v1362
          %v2714 = vunpack.c.l.b16 %v1363
          %v2715 = vunpack.c.h.b16 %v1363
          %v2716 = vunpack.c.l.b16 %v1364
          %v2717 = vunpack.c.h.b16 %v1364
          %v2718 = vunpack.c.l.b16 %v1365
          %v2719 = vunpack.c.h.b16 %v1365
          %v2720 = vunpack.c.l.b16 %v1366
          %v2721 = vunpack.c.h.b16 %v1366
          %v2722 = vunpack.c.l.b16 %v1367
          %v2723 = vunpack.c.h.b16 %v1367
          %v2724 = vunpack.c.l.b16 %v1368
          %v2725 = vunpack.c.h.b16 %v1368
          %v2726 = vunpack.c.l.b16 %v1369
          %v2727 = vunpack.c.h.b16 %v1369
          %v2728 = vunpack.c.l.b16 %v1370
          %v2729 = vunpack.c.h.b16 %v1370
          %v2730 = vunpack.c.l.b16 %v1371
          %v2731 = vunpack.c.h.b16 %v1371
          %v2732 = vunpack.c.l.b16 %v1372
          %v2733 = vunpack.c.h.b16 %v1372
          %v2734 = vunpack.c.l.b16 %v1373
          %v2735 = vunpack.c.h.b16 %v1373
          %v2736 = vunpack.c.l.b16 %v1374
          %v2737 = vunpack.c.h.b16 %v1374
          %v2738 = vunpack.c.l.b16 %v1375
          %v2739 = vunpack.c.h.b16 %v1375
          %v2740 = vunpack.c.l.b16 %v1376
          %v2741 = vunpack.c.h.b16 %v1376
          %v2742 = vunpack.c.l.b16 %v1377
          %v2743 = vunpack.c.h.b16 %v1377
          %v2744 = vunpack.c.l.b16 %v1378
          %v2745 = vunpack.c.h.b16 %v1378
          %v2746 = vunpack.c.l.b16 %v1379
          %v2747 = vunpack.c.h.b16 %v1379
          %v2748 = vunpack.c.l.b16 %v1380
          %v2749 = vunpack.c.h.b16 %v1380
          %v2750 = vunpack.c.l.b16 %v1381
          %v2751 = vunpack.c.h.b16 %v1381
          %v2752 = vunpack.c.l.b16 %v1382
          %v2753 = vunpack.c.h.b16 %v1382
          %v2754 = vunpack.c.l.b16 %v1383
          %v2755 = vunpack.c.h.b16 %v1383
          %v2756 = vunpack.c.l.b16 %v1384
          %v2757 = vunpack.c.h.b16 %v1384
          %v2758 = vunpack.c.l.b16 %v1385
          %v2759 = vunpack.c.h.b16 %v1385
          %v2760 = vunpack.c.l.b16 %v1386
          %v2761 = vunpack.c.h.b16 %v1386
          %v2762 = vunpack.c.l.b16 %v1387
          %v2763 = vunpack.c.h.b16 %v1387
          %v2764 = vunpack.c.l.b16 %v1388
          %v2765 = vunpack.c.h.b16 %v1388
          %v2766 = vunpack.c.l.b16 %v1389
          %v2767 = vunpack.c.h.b16 %v1389
          %v2768 = vunpack.c.l.b16 %v1390
          %v2769 = vunpack.c.h.b16 %v1390
          %v2770 = vunpack.c.l.b16 %v1391
          %v2771 = vunpack.c.h.b16 %v1391
          %v2772 = vunpack.c.l.b16 %v1392
          %v2773 = vunpack.c.h.b16 %v1392
          %v2774 = vunpack.c.l.b16 %v1393
          %v2775 = vunpack.c.h.b16 %v1393
          %v2776 = vunpack.c.l.b16 %v1394
          %v2777 = vunpack.c.h.b16 %v1394
          %v2778 = vunpack.c.l.b16 %v1395
          %v2779 = vunpack.c.h.b16 %v1395
          %v2780 = vunpack.c.l.b16 %v1396
          %v2781 = vunpack.c.h.b16 %v1396
          %v2782 = vunpack.c.l.b16 %v1397
          %v2783 = vunpack.c.h.b16 %v1397
          %v2784 = vunpack.c.l.b16 %v1398
          %v2785 = vunpack.c.h.b16 %v1398
          %v2786 = vunpack.c.l.b16 %v1399
          %v2787 = vunpack.c.h.b16 %v1399
          %v2788 = vunpack.c.l.b16 %v1400
          %v2789 = vunpack.c.h.b16 %v1400
          %v2790 = vunpack.c.l.b16 %v1401
          %v2791 = vunpack.c.h.b16 %v1401
          %v2792 = vunpack.c.l.b16 %v1402
          %v2793 = vunpack.c.h.b16 %v1402
          %v2794 = vunpack.c.l.b16 %v1403
          %v2795 = vunpack.c.h.b16 %v1403
          %v2796 = vunpack.c.l.b16 %v1404
          %v2797 = vunpack.c.h.b16 %v1404
          %v2798 = vunpack.c.l.b16 %v1405
          %v2799 = vunpack.c.h.b16 %v1405
          %v2800 = vunpack.c.l.b16 %v1406
          %v2801 = vunpack.c.h.b16 %v1406
          %v2802 = vunpack.c.l.b16 %v1407
          %v2803 = vunpack.c.h.b16 %v1407
          %v2804 = vunpack.c.l.b16 %v1408
          %v2805 = vunpack.c.h.b16 %v1408
          %v2806 = vunpack.c.l.b16 %v1409
          %v2807 = vunpack.c.h.b16 %v1409
          %v2808 = vunpack.c.l.b16 %v1410
          %v2809 = vunpack.c.h.b16 %v1410
          %v2810 = vunpack.c.l.b16 %v1411
          %v2811 = vunpack.c.h.b16 %v1411
          %v2812 = vunpack.c.l.b16 %v1412
          %v2813 = vunpack.c.h.b16 %v1412
          %v2814 = vunpack.c.l.b16 %v1413
          %v2815 = vunpack.c.h.b16 %v1413
          %v2816 = vunpack.c.l.b16 %v1414
          %v2817 = vunpack.c.h.b16 %v1414
          %v2818 = vunpack.c.l.b16 %v1415
          %v2819 = vunpack.c.h.b16 %v1415
          %v2820 = vunpack.c.l.b16 %v1416
          %v2821 = vunpack.c.h.b16 %v1416
          %v2822 = vunpack.c.l.b16 %v1417
          %v2823 = vunpack.c.h.b16 %v1417
          %v2824 = vunpack.c.l.b16 %v1418
          %v2825 = vunpack.c.h.b16 %v1418
          %v2826 = vunpack.c.l.b16 %v1419
          %v2827 = vunpack.c.h.b16 %v1419
          %v2828 = vunpack.c.l.b16 %v1420
          %v2829 = vunpack.c.h.b16 %v1420
          %v2830 = vunpack.c.l.b16 %v1421
          %v2831 = vunpack.c.h.b16 %v1421
          %v2832 = vunpack.c.l.b16 %v1422
          %v2833 = vunpack.c.h.b16 %v1422
          %v2834 = vunpack.c.l.b16 %v1423
          %v2835 = vunpack.c.h.b16 %v1423
          %v2836 = vunpack.c.l.b16 %v1424
          %v2837 = vunpack.c.h.b16 %v1424
          %v2838 = vunpack.c.l.b16 %v1425
          %v2839 = vunpack.c.h.b16 %v1425
          %v2840 = vunpack.c.l.b16 %v1426
          %v2841 = vunpack.c.h.b16 %v1426
          %v2842 = vunpack.c.l.b16 %v1427
          %v2843 = vunpack.c.h.b16 %v1427
          %v2844 = vunpack.c.l.b16 %v1428
          %v2845 = vunpack.c.h.b16 %v1428
          %v2846 = vunpack.c.l.b16 %v1429
          %v2847 = vunpack.c.h.b16 %v1429
          %v2848 = vunpack.c.l.b16 %v1430
          %v2849 = vunpack.c.h.b16 %v1430
          %v2850 = vunpack.c.l.b16 %v1431
          %v2851 = vunpack.c.h.b16 %v1431
          %v2852 = vunpack.c.l.b16 %v1432
          %v2853 = vunpack.c.h.b16 %v1432
          %v2854 = vunpack.c.l.b16 %v1433
          %v2855 = vunpack.c.h.b16 %v1433
          %v2856 = vunpack.c.l.b16 %v1434
          %v2857 = vunpack.c.h.b16 %v1434
          %v2858 = vunpack.c.l.b16 %v1435
          %v2859 = vunpack.c.h.b16 %v1435
          %v2860 = vunpack.c.l.b16 %v1436
          %v2861 = vunpack.c.h.b16 %v1436
          %v2862 = vunpack.c.l.b16 %v1437
          %v2863 = vunpack.c.h.b16 %v1437
          %v2864 = vunpack.c.l.b16 %v1438
          %v2865 = vunpack.c.h.b16 %v1438
          %v2866 = vunpack.c.l.b16 %v1439
          %v2867 = vunpack.c.h.b16 %v1439
          %v2868 = vunpack.c.l.b16 %v1440
          %v2869 = vunpack.c.h.b16 %v1440
          %v2870 = vunpack.c.l.b16 %v1441
          %v2871 = vunpack.c.h.b16 %v1441
          %v2872 = vunpack.c.l.b16 %v1442
          %v2873 = vunpack.c.h.b16 %v1442
          %v2874 = vunpack.c.l.b16 %v1443
          %v2875 = vunpack.c.h.b16 %v1443
          %v2876 = vunpack.c.l.b16 %v1444
          %v2877 = vunpack.c.h.b16 %v1444
          %v2878 = vunpack.c.l.b16 %v1445
          %v2879 = vunpack.c.h.b16 %v1445
          %v2880 = vunpack.c.l.b16 %v1446
          %v2881 = vunpack.c.h.b16 %v1446
          %v2882 = vunpack.c.l.b16 %v1447
          %v2883 = vunpack.c.h.b16 %v1447
          %v2884 = vunpack.c.l.b16 %v1448
          %v2885 = vunpack.c.h.b16 %v1448
          %v2886 = vunpack.c.l.b16 %v1449
          %v2887 = vunpack.c.h.b16 %v1449
          %v2888 = vunpack.c.l.b16 %v1450
          %v2889 = vunpack.c.h.b16 %v1450
          %v2890 = vunpack.c.l.b16 %v1451
          %v2891 = vunpack.c.h.b16 %v1451
          %v2892 = vunpack.c.l.b16 %v1452
          %v2893 = vunpack.c.h.b16 %v1452
          %v2894 = vunpack.c.l.b16 %v1453
          %v2895 = vunpack.c.h.b16 %v1453
          %v2896 = vunpack.c.l.b16 %v1454
          %v2897 = vunpack.c.h.b16 %v1454
          %v2898 = vunpack.c.l.b16 %v1455
          %v2899 = vunpack.c.h.b16 %v1455
          %v2900 = vunpack.c.l.b16 %v1456
          %v2901 = vunpack.c.h.b16 %v1456
          %v2902 = vunpack.c.l.b16 %v1457
          %v2903 = vunpack.c.h.b16 %v1457
          %v2904 = vunpack.c.l.b16 %v1458
          %v2905 = vunpack.c.h.b16 %v1458
          %v2906 = vunpack.c.l.b16 %v1459
          %v2907 = vunpack.c.h.b16 %v1459
          %v2908 = vunpack.c.l.b16 %v1460
          %v2909 = vunpack.c.h.b16 %v1460
          %v2910 = vunpack.c.l.b16 %v1461
          %v2911 = vunpack.c.h.b16 %v1461
          %v2912 = vunpack.c.l.b16 %v1462
          %v2913 = vunpack.c.h.b16 %v1462
          %v2914 = vunpack.c.l.b16 %v1463
          %v2915 = vunpack.c.h.b16 %v1463
          %v2916 = vunpack.c.l.b16 %v1464
          %v2917 = vunpack.c.h.b16 %v1464
          %v2918 = vunpack.c.l.b16 %v1465
          %v2919 = vunpack.c.h.b16 %v1465
          %v2920 = vunpack.c.l.b16 %v1466
          %v2921 = vunpack.c.h.b16 %v1466
          %v2922 = vunpack.c.l.b16 %v1467
          %v2923 = vunpack.c.h.b16 %v1467
          %v2924 = vunpack.c.l.b16 %v1468
          %v2925 = vunpack.c.h.b16 %v1468
          %v2926 = vunpack.c.l.b16 %v1469
          %v2927 = vunpack.c.h.b16 %v1469
          %v2928 = vunpack.c.l.b16 %v1470
          %v2929 = vunpack.c.h.b16 %v1470
          %v2930 = vunpack.c.l.b16 %v1471
          %v2931 = vunpack.c.h.b16 %v1471
          %v2932 = vunpack.c.l.b16 %v1472
          %v2933 = vunpack.c.h.b16 %v1472
          %v2934 = vunpack.c.l.b16 %v1473
          %v2935 = vunpack.c.h.b16 %v1473
          %v2936 = vunpack.c.l.b16 %v1474
          %v2937 = vunpack.c.h.b16 %v1474
          %v2938 = vunpack.c.l.b16 %v1475
          %v2939 = vunpack.c.h.b16 %v1475
          %v2940 = vunpack.c.l.b16 %v1476
          %v2941 = vunpack.c.h.b16 %v1476
          %v2942 = vunpack.c.l.b16 %v1477
          %v2943 = vunpack.c.h.b16 %v1477
          %v2944 = vunpack.c.l.b16 %v1478
          %v2945 = vunpack.c.h.b16 %v1478
          %v2946 = vunpack.c.l.b16 %v1479
          %v2947 = vunpack.c.h.b16 %v1479
          %v2948 = vunpack.c.l.b16 %v1480
          %v2949 = vunpack.c.h.b16 %v1480
          %v2950 = vunpack.c.l.b16 %v1481
          %v2951 = vunpack.c.h.b16 %v1481
          %v2952 = vunpack.c.l.b16 %v1482
          %v2953 = vunpack.c.h.b16 %v1482
          %v2954 = vunpack.c.l.b16 %v1483
          %v2955 = vunpack.c.h.b16 %v1483
          %v2956 = vunpack.c.l.b16 %v1484
          %v2957 = vunpack.c.h.b16 %v1484
          %v2958 = vunpack.c.l.b16 %v1485
          %v2959 = vunpack.c.h.b16 %v1485
          %v2960 = vunpack.c.l.b16 %v1486
          %v2961 = vunpack.c.h.b16 %v1486
          %v2962 = vunpack.c.l.b16 %v1487
          %v2963 = vunpack.c.h.b16 %v1487
          %v2964 = vunpack.c.l.b16 %v1488
          %v2965 = vunpack.c.h.b16 %v1488
          %v2966 = vunpack.c.l.b16 %v1489
          %v2967 = vunpack.c.h.b16 %v1489
          %v2968 = vunpack.c.l.b16 %v1490
          %v2969 = vunpack.c.h.b16 %v1490
          %v2970 = vunpack.c.l.b16 %v1491
          %v2971 = vunpack.c.h.b16 %v1491
          %v2972 = vunpack.c.l.b16 %v1492
          %v2973 = vunpack.c.h.b16 %v1492
          %v2974 = vunpack.c.l.b16 %v1493
          %v2975 = vunpack.c.h.b16 %v1493
          %v2976 = vunpack.c.l.b16 %v1494
          %v2977 = vunpack.c.h.b16 %v1494
          %v2978 = vunpack.c.l.b16 %v1495
          %v2979 = vunpack.c.h.b16 %v1495
          %v2980 = vunpack.c.l.b16 %v1496
          %v2981 = vunpack.c.h.b16 %v1496
          %v2982 = vunpack.c.l.b16 %v1497
          %v2983 = vunpack.c.h.b16 %v1497
          %v2984 = vunpack.c.l.b16 %v1498
          %v2985 = vunpack.c.h.b16 %v1498
          %v2986 = vunpack.c.l.b16 %v1499
          %v2987 = vunpack.c.h.b16 %v1499
          %v2988 = vunpack.c.l.b16 %v1500
          %v2989 = vunpack.c.h.b16 %v1500
          %v2990 = vunpack.c.l.b16 %v1501
          %v2991 = vunpack.c.h.b16 %v1501
          %v2992 = vunpack.c.l.b16 %v1502
          %v2993 = vunpack.c.h.b16 %v1502
          %v2994 = vunpack.c.l.b16 %v1503
          %v2995 = vunpack.c.h.b16 %v1503
          %v2996 = vunpack.c.l.b16 %v1504
          %v2997 = vunpack.c.h.b16 %v1504
          %v2998 = vunpack.c.l.b16 %v1505
          %v2999 = vunpack.c.h.b16 %v1505
          %v3000 = vunpack.c.l.b16 %v1506
          %v3001 = vunpack.c.h.b16 %v1506
          %v3002 = vunpack.c.l.b16 %v1507
          %v3003 = vunpack.c.h.b16 %v1507
          %v3004 = vunpack.c.l.b16 %v1508
          %v3005 = vunpack.c.h.b16 %v1508
          %v3006 = vunpack.c.l.b16 %v1509
          %v3007 = vunpack.c.h.b16 %v1509
          %v3008 = vunpack.c.l.b16 %v1510
          %v3009 = vunpack.c.h.b16 %v1510
          %v3010 = vunpack.c.l.b16 %v1511
          %v3011 = vunpack.c.h.b16 %v1511
          %v3012 = vunpack.c.l.b16 %v1512
          %v3013 = vunpack.c.h.b16 %v1512
          %v3014 = vunpack.c.l.b16 %v1513
          %v3015 = vunpack.c.h.b16 %v1513
          %v3016 = vunpack.c.l.b16 %v1514
          %v3017 = vunpack.c.h.b16 %v1514
          %v3018 = vunpack.c.l.b16 %v1515
          %v3019 = vunpack.c.h.b16 %v1515
          %v3020 = vunpack.c.l.b16 %v1516
          %v3021 = vunpack.c.h.b16 %v1516
          %v3022 = vunpack.c.l.b16 %v1517
          %v3023 = vunpack.c.h.b16 %v1517
          %v3024 = vunpack.c.l.b16 %v1518
          %v3025 = vunpack.c.h.b16 %v1518
          %v3026 = vunpack.c.l.b16 %v1519
          %v3027 = vunpack.c.h.b16 %v1519
          %v3028 = vunpack.c.l.b16 %v1520
          %v3029 = vunpack.c.h.b16 %v1520
          %v3030 = vunpack.c.l.b16 %v1521
          %v3031 = vunpack.c.h.b16 %v1521
          %v3032 = vunpack.c.l.b16 %v1522
          %v3033 = vunpack.c.h.b16 %v1522
          %v3034 = vunpack.c.l.b16 %v1523
          %v3035 = vunpack.c.h.b16 %v1523
          %v3036 = vunpack.c.l.b16 %v1524
          %v3037 = vunpack.c.h.b16 %v1524
          %v3038 = vunpack.c.l.b16 %v1525
          %v3039 = vunpack.c.h.b16 %v1525
          %v3040 = vunpack.c.l.b16 %v1526
          %v3041 = vunpack.c.h.b16 %v1526
          %v3042 = vunpack.c.l.b16 %v1527
          %v3043 = vunpack.c.h.b16 %v1527
          %v3044 = vunpack.c.l.b16 %v1528
          %v3045 = vunpack.c.h.b16 %v1528
          %v3046 = vunpack.c.l.b16 %v1529
          %v3047 = vunpack.c.h.b16 %v1529
          %v3048 = vunpack.c.l.b16 %v1530
          %v3049 = vunpack.c.h.b16 %v1530
          %v3050 = vunpack.c.l.b16 %v1531
          %v3051 = vunpack.c.h.b16 %v1531
          %v3052 = vunpack.c.l.b16 %v1532
          %v3053 = vunpack.c.h.b16 %v1532
          %v3054 = vunpack.c.l.b16 %v1533
          %v3055 = vunpack.c.h.b16 %v1533
          %v3056 = vunpack.c.l.b16 %v1534
          %v3057 = vunpack.c.h.b16 %v1534
          %v3058 = vunpack.c.l.b16 %v1535
          %v3059 = vunpack.c.h.b16 %v1535
          %v3060 = vunpack.c.l.b16 %v1536
          %v3061 = vunpack.c.h.b16 %v1536
          %v3062 = vunpack.c.l.b16 %v1537
          %v3063 = vunpack.c.h.b16 %v1537
          %v3064 = vunpack.c.l.b16 %v1538
          %v3065 = vunpack.c.h.b16 %v1538
          %v3066 = vunpack.c.l.b16 %v1539
          %v3067 = vunpack.c.h.b16 %v1539
          %v3068 = vunpack.c.l.b16 %v1540
          %v3069 = vunpack.c.h.b16 %v1540
          %v3070 = vunpack.c.l.b16 %v1541
          %v3071 = vunpack.c.h.b16 %v1541
          %v3072 = vunpack.c.l.b16 %v1542
          %v3073 = vunpack.c.h.b16 %v1542
          %v3074 = vunpack.c.l.b16 %v1543
          %v3075 = vunpack.c.h.b16 %v1543
          %v3076 = vunpack.c.l.b16 %v1544
          %v3077 = vunpack.c.h.b16 %v1544
          %v3078 = vunpack.c.l.b16 %v1545
          %v3079 = vunpack.c.h.b16 %v1545
          %v3080 = vunpack.c.l.b16 %v1546
          %v3081 = vunpack.c.h.b16 %v1546
          %v3082 = vunpack.c.l.b16 %v1547
          %v3083 = vunpack.c.h.b16 %v1547
          %v3084 = vunpack.c.l.b16 %v1548
          %v3085 = vunpack.c.h.b16 %v1548
          %v3086 = vunpack.c.l.b16 %v1549
          %v3087 = vunpack.c.h.b16 %v1549
          %v3088 = vunpack.c.l.b16 %v1550
          %v3089 = vunpack.c.h.b16 %v1550
          %v3090 = vunpack.c.l.b16 %v1551
          %v3091 = vunpack.c.h.b16 %v1551
          %v3092 = vunpack.c.l.b16 %v1552
          %v3093 = vunpack.c.h.b16 %v1552
          %v3094 = vunpack.c.l.b16 %v1553
          %v3095 = vunpack.c.h.b16 %v1553
          %v3096 = vunpack.c.l.b16 %v1554
          %v3097 = vunpack.c.h.b16 %v1554
          %v3098 = vunpack.c.l.b16 %v1555
          %v3099 = vunpack.c.h.b16 %v1555
          %v3100 = vunpack.c.l.b16 %v1556
          %v3101 = vunpack.c.h.b16 %v1556
          %v3102 = vunpack.c.l.b16 %v1557
          %v3103 = vunpack.c.h.b16 %v1557
          %v3104 = vunpack.c.l.b16 %v1558
          %v3105 = vunpack.c.h.b16 %v1558
          %v3106 = vunpack.c.l.b16 %v1559
          %v3107 = vunpack.c.h.b16 %v1559
          %v3108 = vunpack.c.l.b16 %v1560
          %v3109 = vunpack.c.h.b16 %v1560
          %v3110 = vunpack.c.l.b16 %v1561
          %v3111 = vunpack.c.h.b16 %v1561
          %v3112 = vunpack.c.l.b16 %v1562
          %v3113 = vunpack.c.h.b16 %v1562
          %v3114 = vunpack.c.l.b16 %v1563
          %v3115 = vunpack.c.h.b16 %v1563
          %v3116 = vunpack.c.l.b16 %v1564
          %v3117 = vunpack.c.h.b16 %v1564
          %v3118 = vunpack.c.l.b16 %v1565
          %v3119 = vunpack.c.h.b16 %v1565
          %v3120 = vunpack.c.l.b16 %v1566
          %v3121 = vunpack.c.h.b16 %v1566
          %v3122 = vunpack.c.l.b16 %v1567
          %v3123 = vunpack.c.h.b16 %v1567
          %v3124 = vunpack.c.l.b16 %v1568
          %v3125 = vunpack.c.h.b16 %v1568
          %v3126 = vunpack.c.l.b16 %v1569
          %v3127 = vunpack.c.h.b16 %v1569
          %v3128 = vunpack.c.l.b16 %v1570
          %v3129 = vunpack.c.h.b16 %v1570
          %v3130 = vunpack.c.l.b16 %v1571
          %v3131 = vunpack.c.h.b16 %v1571
          %v3132 = vunpack.c.l.b16 %v1572
          %v3133 = vunpack.c.h.b16 %v1572
          %v3134 = vunpack.c.l.b16 %v1573
          %v3135 = vunpack.c.h.b16 %v1573
          %v3136 = vunpack.c.l.b16 %v1574
          %v3137 = vunpack.c.h.b16 %v1574
          %v3138 = vunpack.c.l.b16 %v1575
          %v3139 = vunpack.c.h.b16 %v1575
          %v3140 = vunpack.c.l.b16 %v1576
          %v3141 = vunpack.c.h.b16 %v1576
          %v3142 = vunpack.c.l.b16 %v1577
          %v3143 = vunpack.c.h.b16 %v1577
          %v3144 = vunpack.c.l.b16 %v1578
          %v3145 = vunpack.c.h.b16 %v1578
          %v3146 = vunpack.c.l.b16 %v1579
          %v3147 = vunpack.c.h.b16 %v1579
          %v3148 = vunpack.c.l.b16 %v1580
          %v3149 = vunpack.c.h.b16 %v1580
          %v3150 = vunpack.c.l.b16 %v1581
          %v3151 = vunpack.c.h.b16 %v1581
          %v3152 = vunpack.c.l.b16 %v1582
          %v3153 = vunpack.c.h.b16 %v1582
          %v3154 = vunpack.c.l.b16 %v1583
          %v3155 = vunpack.c.h.b16 %v1583
          %v3156 = vunpack.c.l.b16 %v1584
          %v3157 = vunpack.c.h.b16 %v1584
          %v3158 = vunpack.c.l.b16 %v1585
          %v3159 = vunpack.c.h.b16 %v1585
          %v3160 = vunpack.c.l.b16 %v1586
          %v3161 = vunpack.c.h.b16 %v1586
          %v3162 = vunpack.c.l.b16 %v1587
          %v3163 = vunpack.c.h.b16 %v1587
          %v3164 = vunpack.c.l.b16 %v1588
          %v3165 = vunpack.c.h.b16 %v1588
          %v3166 = vunpack.c.l.b16 %v1589
          %v3167 = vunpack.c.h.b16 %v1589
          %v3168 = vpack.c.b16 %v2152, %v2144
          %v3169 = vpack.c.b16 %v2153, %v2145
          %v3170 = vpack.c.b16 %v2154, %v2146
          %v3171 = vpack.c.b16 %v2155, %v2147
          %v3172 = vpack.c.b16 %v2156, %v2148
          %v3173 = vpack.c.b16 %v2157, %v2149
          %v3174 = vpack.c.b16 %v2158, %v2150
          %v3175 = vpack.c.b16 %v2159, %v2151
          %v3176 = vpack.c.b16 %v2168, %v2160
          %v3177 = vpack.c.b16 %v2169, %v2161
          %v3178 = vpack.c.b16 %v2170, %v2162
          %v3179 = vpack.c.b16 %v2171, %v2163
          %v3180 = vpack.c.b16 %v2172, %v2164
          %v3181 = vpack.c.b16 %v2173, %v2165
          %v3182 = vpack.c.b16 %v2174, %v2166
          %v3183 = vpack.c.b16 %v2175, %v2167
          %v3184 = vpack.c.b16 %v2184, %v2176
          %v3185 = vpack.c.b16 %v2185, %v2177
          %v3186 = vpack.c.b16 %v2186, %v2178
          %v3187 = vpack.c.b16 %v2187, %v2179
          %v3188 = vpack.c.b16 %v2188, %v2180
          %v3189 = vpack.c.b16 %v2189, %v2181
          %v3190 = vpack.c.b16 %v2190, %v2182
          %v3191 = vpack.c.b16 %v2191, %v2183
          %v3192 = vpack.c.b16 %v2200, %v2192
          %v3193 = vpack.c.b16 %v2201, %v2193
          %v3194 = vpack.c.b16 %v2202, %v2194
          %v3195 = vpack.c.b16 %v2203, %v2195
          %v3196 = vpack.c.b16 %v2204, %v2196
          %v3197 = vpack.c.b16 %v2205, %v2197
          %v3198 = vpack.c.b16 %v2206, %v2198
          %v3199 = vpack.c.b16 %v2207, %v2199
          %v3200 = vpack.c.b16 %v2216, %v2208
          %v3201 = vpack.c.b16 %v2217, %v2209
          %v3202 = vpack.c.b16 %v2218, %v2210
          %v3203 = vpack.c.b16 %v2219, %v2211
          %v3204 = vpack.c.b16 %v2220, %v2212
          %v3205 = vpack.c.b16 %v2221, %v2213
          %v3206 = vpack.c.b16 %v2222, %v2214
          %v3207 = vpack.c.b16 %v2223, %v2215
          %v3208 = vpack.c.b16 %v2232, %v2224
          %v3209 = vpack.c.b16 %v2233, %v2225
          %v3210 = vpack.c.b16 %v2234, %v2226
          %v3211 = vpack.c.b16 %v2235, %v2227
          %v3212 = vpack.c.b16 %v2236, %v2228
          %v3213 = vpack.c.b16 %v2237, %v2229
          %v3214 = vpack.c.b16 %v2238, %v2230
          %v3215 = vpack.c.b16 %v2239, %v2231
          %v3216 = vpack.c.b16 %v2248, %v2240
          %v3217 = vpack.c.b16 %v2249, %v2241
          %v3218 = vpack.c.b16 %v2250, %v2242
          %v3219 = vpack.c.b16 %v2251, %v2243
          %v3220 = vpack.c.b16 %v2252, %v2244
          %v3221 = vpack.c.b16 %v2253, %v2245
          %v3222 = vpack.c.b16 %v2254, %v2246
          %v3223 = vpack.c.b16 %v2255, %v2247
          %v3224 = vpack.c.b16 %v2264, %v2256
          %v3225 = vpack.c.b16 %v2265, %v2257
          %v3226 = vpack.c.b16 %v2266, %v2258
          %v3227 = vpack.c.b16 %v2267, %v2259
          %v3228 = vpack.c.b16 %v2268, %v2260
          %v3229 = vpack.c.b16 %v2269, %v2261
          %v3230 = vpack.c.b16 %v2270, %v2262
          %v3231 = vpack.c.b16 %v2271, %v2263
          %v3232 = vpack.c.b16 %v2280, %v2272
          %v3233 = vpack.c.b16 %v2281, %v2273
          %v3234 = vpack.c.b16 %v2282, %v2274
          %v3235 = vpack.c.b16 %v2283, %v2275
          %v3236 = vpack.c.b16 %v2284, %v2276
          %v3237 = vpack.c.b16 %v2285, %v2277
          %v3238 = vpack.c.b16 %v2286, %v2278
          %v3239 = vpack.c.b16 %v2287, %v2279
          %v3240 = vpack.c.b16 %v2296, %v2288
          %v3241 = vpack.c.b16 %v2297, %v2289
          %v3242 = vpack.c.b16 %v2298, %v2290
          %v3243 = vpack.c.b16 %v2299, %v2291
          %v3244 = vpack.c.b16 %v2300, %v2292
          %v3245 = vpack.c.b16 %v2301, %v2293
          %v3246 = vpack.c.b16 %v2302, %v2294
          %v3247 = vpack.c.b16 %v2303, %v2295
          %v3248 = vpack.c.b16 %v2312, %v2304
          %v3249 = vpack.c.b16 %v2313, %v2305
          %v3250 = vpack.c.b16 %v2314, %v2306
          %v3251 = vpack.c.b16 %v2315, %v2307
          %v3252 = vpack.c.b16 %v2316, %v2308
          %v3253 = vpack.c.b16 %v2317, %v2309
          %v3254 = vpack.c.b16 %v2318, %v2310
          %v3255 = vpack.c.b16 %v2319, %v2311
          %v3256 = vpack.c.b16 %v2328, %v2320
          %v3257 = vpack.c.b16 %v2329, %v2321
          %v3258 = vpack.c.b16 %v2330, %v2322
          %v3259 = vpack.c.b16 %v2331, %v2323
          %v3260 = vpack.c.b16 %v2332, %v2324
          %v3261 = vpack.c.b16 %v2333, %v2325
          %v3262 = vpack.c.b16 %v2334, %v2326
          %v3263 = vpack.c.b16 %v2335, %v2327
          %v3264 = vpack.c.b16 %v2344, %v2336
          %v3265 = vpack.c.b16 %v2345, %v2337
          %v3266 = vpack.c.b16 %v2346, %v2338
          %v3267 = vpack.c.b16 %v2347, %v2339
          %v3268 = vpack.c.b16 %v2348, %v2340
          %v3269 = vpack.c.b16 %v2349, %v2341
          %v3270 = vpack.c.b16 %v2350, %v2342
          %v3271 = vpack.c.b16 %v2351, %v2343
          %v3272 = vpack.c.b16 %v2360, %v2352
          %v3273 = vpack.c.b16 %v2361, %v2353
          %v3274 = vpack.c.b16 %v2362, %v2354
          %v3275 = vpack.c.b16 %v2363, %v2355
          %v3276 = vpack.c.b16 %v2364, %v2356
          %v3277 = vpack.c.b16 %v2365, %v2357
          %v3278 = vpack.c.b16 %v2366, %v2358
          %v3279 = vpack.c.b16 %v2367, %v2359
          %v3280 = vpack.c.b16 %v2376, %v2368
          %v3281 = vpack.c.b16 %v2377, %v2369
          %v3282 = vpack.c.b16 %v2378, %v2370
          %v3283 = vpack.c.b16 %v2379, %v2371
          %v3284 = vpack.c.b16 %v2380, %v2372
          %v3285 = vpack.c.b16 %v2381, %v2373
          %v3286 = vpack.c.b16 %v2382, %v2374
          %v3287 = vpack.c.b16 %v2383, %v2375
          %v3288 = vpack.c.b16 %v2392, %v2384
          %v3289 = vpack.c.b16 %v2393, %v2385
          %v3290 = vpack.c.b16 %v2394, %v2386
          %v3291 = vpack.c.b16 %v2395, %v2387
          %v3292 = vpack.c.b16 %v2396, %v2388
          %v3293 = vpack.c.b16 %v2397, %v2389
          %v3294 = vpack.c.b16 %v2398, %v2390
          %v3295 = vpack.c.b16 %v2399, %v2391
          %v3296 = vpack.c.b16 %v2408, %v2400
          %v3297 = vpack.c.b16 %v2409, %v2401
          %v3298 = vpack.c.b16 %v2410, %v2402
          %v3299 = vpack.c.b16 %v2411, %v2403
          %v3300 = vpack.c.b16 %v2412, %v2404
          %v3301 = vpack.c.b16 %v2413, %v2405
          %v3302 = vpack.c.b16 %v2414, %v2406
          %v3303 = vpack.c.b16 %v2415, %v2407
          %v3304 = vpack.c.b16 %v2424, %v2416
          %v3305 = vpack.c.b16 %v2425, %v2417
          %v3306 = vpack.c.b16 %v2426, %v2418
          %v3307 = vpack.c.b16 %v2427, %v2419
          %v3308 = vpack.c.b16 %v2428, %v2420
          %v3309 = vpack.c.b16 %v2429, %v2421
          %v3310 = vpack.c.b16 %v2430, %v2422
          %v3311 = vpack.c.b16 %v2431, %v2423
          %v3312 = vpack.c.b16 %v2440, %v2432
          %v3313 = vpack.c.b16 %v2441, %v2433
          %v3314 = vpack.c.b16 %v2442, %v2434
          %v3315 = vpack.c.b16 %v2443, %v2435
          %v3316 = vpack.c.b16 %v2444, %v2436
          %v3317 = vpack.c.b16 %v2445, %v2437
          %v3318 = vpack.c.b16 %v2446, %v2438
          %v3319 = vpack.c.b16 %v2447, %v2439
          %v3320 = vpack.c.b16 %v2456, %v2448
          %v3321 = vpack.c.b16 %v2457, %v2449
          %v3322 = vpack.c.b16 %v2458, %v2450
          %v3323 = vpack.c.b16 %v2459, %v2451
          %v3324 = vpack.c.b16 %v2460, %v2452
          %v3325 = vpack.c.b16 %v2461, %v2453
          %v3326 = vpack.c.b16 %v2462, %v2454
          %v3327 = vpack.c.b16 %v2463, %v2455
          %v3328 = vpack.c.b16 %v2472, %v2464
          %v3329 = vpack.c.b16 %v2473, %v2465
          %v3330 = vpack.c.b16 %v2474, %v2466
          %v3331 = vpack.c.b16 %v2475, %v2467
          %v3332 = vpack.c.b16 %v2476, %v2468
          %v3333 = vpack.c.b16 %v2477, %v2469
          %v3334 = vpack.c.b16 %v2478, %v2470
          %v3335 = vpack.c.b16 %v2479, %v2471
          %v3336 = vpack.c.b16 %v2488, %v2480
          %v3337 = vpack.c.b16 %v2489, %v2481
          %v3338 = vpack.c.b16 %v2490, %v2482
          %v3339 = vpack.c.b16 %v2491, %v2483
          %v3340 = vpack.c.b16 %v2492, %v2484
          %v3341 = vpack.c.b16 %v2493, %v2485
          %v3342 = vpack.c.b16 %v2494, %v2486
          %v3343 = vpack.c.b16 %v2495, %v2487
          %v3344 = vpack.c.b16 %v2504, %v2496
          %v3345 = vpack.c.b16 %v2505, %v2497
          %v3346 = vpack.c.b16 %v2506, %v2498
          %v3347 = vpack.c.b16 %v2507, %v2499
          %v3348 = vpack.c.b16 %v2508, %v2500
          %v3349 = vpack.c.b16 %v2509, %v2501
          %v3350 = vpack.c.b16 %v2510, %v2502
          %v3351 = vpack.c.b16 %v2511, %v2503
          %v3352 = vpack.c.b16 %v2520, %v2512
          %v3353 = vpack.c.b16 %v2521, %v2513
          %v3354 = vpack.c.b16 %v2522, %v2514
          %v3355 = vpack.c.b16 %v2523, %v2515
          %v3356 = vpack.c.b16 %v2524, %v2516
          %v3357 = vpack.c.b16 %v2525, %v2517
          %v3358 = vpack.c.b16 %v2526, %v2518
          %v3359 = vpack.c.b16 %v2527, %v2519
          %v3360 = vpack.c.b16 %v2536, %v2528
          %v3361 = vpack.c.b16 %v2537, %v2529
          %v3362 = vpack.c.b16 %v2538, %v2530
          %v3363 = vpack.c.b16 %v2539, %v2531
          %v3364 = vpack.c.b16 %v2540, %v2532
          %v3365 = vpack.c.b16 %v2541, %v2533
          %v3366 = vpack.c.b16 %v2542, %v2534
          %v3367 = vpack.c.b16 %v2543, %v2535
          %v3368 = vpack.c.b16 %v2552, %v2544
          %v3369 = vpack.c.b16 %v2553, %v2545
          %v3370 = vpack.c.b16 %v2554, %v2546
          %v3371 = vpack.c.b16 %v2555, %v2547
          %v3372 = vpack.c.b16 %v2556, %v2548
          %v3373 = vpack.c.b16 %v2557, %v2549
          %v3374 = vpack.c.b16 %v2558, %v2550
          %v3375 = vpack.c.b16 %v2559, %v2551
          %v3376 = vpack.c.b16 %v2568, %v2560
          %v3377 = vpack.c.b16 %v2569, %v2561
          %v3378 = vpack.c.b16 %v2570, %v2562
          %v3379 = vpack.c.b16 %v2571, %v2563
          %v3380 = vpack.c.b16 %v2572, %v2564
          %v3381 = vpack.c.b16 %v2573, %v2565
          %v3382 = vpack.c.b16 %v2574, %v2566
          %v3383 = vpack.c.b16 %v2575, %v2567
          %v3384 = vpack.c.b16 %v2584, %v2576
          %v3385 = vpack.c.b16 %v2585, %v2577
          %v3386 = vpack.c.b16 %v2586, %v2578
          %v3387 = vpack.c.b16 %v2587, %v2579
          %v3388 = vpack.c.b16 %v2588, %v2580
          %v3389 = vpack.c.b16 %v2589, %v2581
          %v3390 = vpack.c.b16 %v2590, %v2582
          %v3391 = vpack.c.b16 %v2591, %v2583
          %v3392 = vpack.c.b16 %v2600, %v2592
          %v3393 = vpack.c.b16 %v2601, %v2593
          %v3394 = vpack.c.b16 %v2602, %v2594
          %v3395 = vpack.c.b16 %v2603, %v2595
          %v3396 = vpack.c.b16 %v2604, %v2596
          %v3397 = vpack.c.b16 %v2605, %v2597
          %v3398 = vpack.c.b16 %v2606, %v2598
          %v3399 = vpack.c.b16 %v2607, %v2599
          %v3400 = vpack.c.b16 %v2616, %v2608
          %v3401 = vpack.c.b16 %v2617, %v2609
          %v3402 = vpack.c.b16 %v2618, %v2610
          %v3403 = vpack.c.b16 %v2619, %v2611
          %v3404 = vpack.c.b16 %v2620, %v2612
          %v3405 = vpack.c.b16 %v2621, %v2613
          %v3406 = vpack.c.b16 %v2622, %v2614
          %v3407 = vpack.c.b16 %v2623, %v2615
          %v3408 = vpack.c.b16 %v2632, %v2624
          %v3409 = vpack.c.b16 %v2633, %v2625
          %v3410 = vpack.c.b16 %v2634, %v2626
          %v3411 = vpack.c.b16 %v2635, %v2627
          %v3412 = vpack.c.b16 %v2636, %v2628
          %v3413 = vpack.c.b16 %v2637, %v2629
          %v3414 = vpack.c.b16 %v2638, %v2630
          %v3415 = vpack.c.b16 %v2639, %v2631
          %v3416 = vpack.c.b16 %v2648, %v2640
          %v3417 = vpack.c.b16 %v2649, %v2641
          %v3418 = vpack.c.b16 %v2650, %v2642
          %v3419 = vpack.c.b16 %v2651, %v2643
          %v3420 = vpack.c.b16 %v2652, %v2644
          %v3421 = vpack.c.b16 %v2653, %v2645
          %v3422 = vpack.c.b16 %v2654, %v2646
          %v3423 = vpack.c.b16 %v2655, %v2647
          %v3424 = vpack.c.b16 %v2664, %v2656
          %v3425 = vpack.c.b16 %v2665, %v2657
          %v3426 = vpack.c.b16 %v2666, %v2658
          %v3427 = vpack.c.b16 %v2667, %v2659
          %v3428 = vpack.c.b16 %v2668, %v2660
          %v3429 = vpack.c.b16 %v2669, %v2661
          %v3430 = vpack.c.b16 %v2670, %v2662
          %v3431 = vpack.c.b16 %v2671, %v2663
          %v3432 = vpack.c.b16 %v2680, %v2672
          %v3433 = vpack.c.b16 %v2681, %v2673
          %v3434 = vpack.c.b16 %v2682, %v2674
          %v3435 = vpack.c.b16 %v2683, %v2675
          %v3436 = vpack.c.b16 %v2684, %v2676
          %v3437 = vpack.c.b16 %v2685, %v2677
          %v3438 = vpack.c.b16 %v2686, %v2678
          %v3439 = vpack.c.b16 %v2687, %v2679
          %v3440 = vpack.c.b16 %v2696, %v2688
          %v3441 = vpack.c.b16 %v2697, %v2689
          %v3442 = vpack.c.b16 %v2698, %v2690
          %v3443 = vpack.c.b16 %v2699, %v2691
          %v3444 = vpack.c.b16 %v2700, %v2692
          %v3445 = vpack.c.b16 %v2701, %v2693
          %v3446 = vpack.c.b16 %v2702, %v2694
          %v3447 = vpack.c.b16 %v2703, %v2695
          %v3448 = vpack.c.b16 %v2712, %v2704
          %v3449 = vpack.c.b16 %v2713, %v2705
          %v3450 = vpack.c.b16 %v2714, %v2706
          %v3451 = vpack.c.b16 %v2715, %v2707
          %v3452 = vpack.c.b16 %v2716, %v2708
          %v3453 = vpack.c.b16 %v2717, %v2709
          %v3454 = vpack.c.b16 %v2718, %v2710
          %v3455 = vpack.c.b16 %v2719, %v2711
          %v3456 = vpack.c.b16 %v2728, %v2720
          %v3457 = vpack.c.b16 %v2729, %v2721
          %v3458 = vpack.c.b16 %v2730, %v2722
          %v3459 = vpack.c.b16 %v2731, %v2723
          %v3460 = vpack.c.b16 %v2732, %v2724
          %v3461 = vpack.c.b16 %v2733, %v2725
          %v3462 = vpack.c.b16 %v2734, %v2726
          %v3463 = vpack.c.b16 %v2735, %v2727
          %v3464 = vpack.c.b16 %v2744, %v2736
          %v3465 = vpack.c.b16 %v2745, %v2737
          %v3466 = vpack.c.b16 %v2746, %v2738
          %v3467 = vpack.c.b16 %v2747, %v2739
          %v3468 = vpack.c.b16 %v2748, %v2740
          %v3469 = vpack.c.b16 %v2749, %v2741
          %v3470 = vpack.c.b16 %v2750, %v2742
          %v3471 = vpack.c.b16 %v2751, %v2743
          %v3472 = vpack.c.b16 %v2760, %v2752
          %v3473 = vpack.c.b16 %v2761, %v2753
          %v3474 = vpack.c.b16 %v2762, %v2754
          %v3475 = vpack.c.b16 %v2763, %v2755
          %v3476 = vpack.c.b16 %v2764, %v2756
          %v3477 = vpack.c.b16 %v2765, %v2757
          %v3478 = vpack.c.b16 %v2766, %v2758
          %v3479 = vpack.c.b16 %v2767, %v2759
          %v3480 = vpack.c.b16 %v2776, %v2768
          %v3481 = vpack.c.b16 %v2777, %v2769
          %v3482 = vpack.c.b16 %v2778, %v2770
          %v3483 = vpack.c.b16 %v2779, %v2771
          %v3484 = vpack.c.b16 %v2780, %v2772
          %v3485 = vpack.c.b16 %v2781, %v2773
          %v3486 = vpack.c.b16 %v2782, %v2774
          %v3487 = vpack.c.b16 %v2783, %v2775
          %v3488 = vpack.c.b16 %v2792, %v2784
          %v3489 = vpack.c.b16 %v2793, %v2785
          %v3490 = vpack.c.b16 %v2794, %v2786
          %v3491 = vpack.c.b16 %v2795, %v2787
          %v3492 = vpack.c.b16 %v2796, %v2788
          %v3493 = vpack.c.b16 %v2797, %v2789
          %v3494 = vpack.c.b16 %v2798, %v2790
          %v3495 = vpack.c.b16 %v2799, %v2791
          %v3496 = vpack.c.b16 %v2808, %v2800
          %v3497 = vpack.c.b16 %v2809, %v2801
          %v3498 = vpack.c.b16 %v2810, %v2802
          %v3499 = vpack.c.b16 %v2811, %v2803
          %v3500 = vpack.c.b16 %v2812, %v2804
          %v3501 = vpack.c.b16 %v2813, %v2805
          %v3502 = vpack.c.b16 %v2814, %v2806
          %v3503 = vpack.c.b16 %v2815, %v2807
          %v3504 = vpack.c.b16 %v2824, %v2816
          %v3505 = vpack.c.b16 %v2825, %v2817
          %v3506 = vpack.c.b16 %v2826, %v2818
          %v3507 = vpack.c.b16 %v2827, %v2819
          %v3508 = vpack.c.b16 %v2828, %v2820
          %v3509 = vpack.c.b16 %v2829, %v2821
          %v3510 = vpack.c.b16 %v2830, %v2822
          %v3511 = vpack.c.b16 %v2831, %v2823
          %v3512 = vpack.c.b16 %v2840, %v2832
          %v3513 = vpack.c.b16 %v2841, %v2833
          %v3514 = vpack.c.b16 %v2842, %v2834
          %v3515 = vpack.c.b16 %v2843, %v2835
          %v3516 = vpack.c.b16 %v2844, %v2836
          %v3517 = vpack.c.b16 %v2845, %v2837
          %v3518 = vpack.c.b16 %v2846, %v2838
          %v3519 = vpack.c.b16 %v2847, %v2839
          %v3520 = vpack.c.b16 %v2856, %v2848
          %v3521 = vpack.c.b16 %v2857, %v2849
          %v3522 = vpack.c.b16 %v2858, %v2850
          %v3523 = vpack.c.b16 %v2859, %v2851
          %v3524 = vpack.c.b16 %v2860, %v2852
          %v3525 = vpack.c.b16 %v2861, %v2853
          %v3526 = vpack.c.b16 %v2862, %v2854
          %v3527 = vpack.c.b16 %v2863, %v2855
          %v3528 = vpack.c.b16 %v2872, %v2864
          %v3529 = vpack.c.b16 %v2873, %v2865
          %v3530 = vpack.c.b16 %v2874, %v2866
          %v3531 = vpack.c.b16 %v2875, %v2867
          %v3532 = vpack.c.b16 %v2876, %v2868
          %v3533 = vpack.c.b16 %v2877, %v2869
          %v3534 = vpack.c.b16 %v2878, %v2870
          %v3535 = vpack.c.b16 %v2879, %v2871
          %v3536 = vpack.c.b16 %v2888, %v2880
          %v3537 = vpack.c.b16 %v2889, %v2881
          %v3538 = vpack.c.b16 %v2890, %v2882
          %v3539 = vpack.c.b16 %v2891, %v2883
          %v3540 = vpack.c.b16 %v2892, %v2884
          %v3541 = vpack.c.b16 %v2893, %v2885
          %v3542 = vpack.c.b16 %v2894, %v2886
          %v3543 = vpack.c.b16 %v2895, %v2887
          %v3544 = vpack.c.b16 %v2904, %v2896
          %v3545 = vpack.c.b16 %v2905, %v2897
          %v3546 = vpack.c.b16 %v2906, %v2898
          %v3547 = vpack.c.b16 %v2907, %v2899
          %v3548 = vpack.c.b16 %v2908, %v2900
          %v3549 = vpack.c.b16 %v2909, %v2901
          %v3550 = vpack.c.b16 %v2910, %v2902
          %v3551 = vpack.c.b16 %v2911, %v2903
          %v3552 = vpack.c.b16 %v2920, %v2912
          %v3553 = vpack.c.b16 %v2921, %v2913
          %v3554 = vpack.c.b16 %v2922, %v2914
          %v3555 = vpack.c.b16 %v2923, %v2915
          %v3556 = vpack.c.b16 %v2924, %v2916
          %v3557 = vpack.c.b16 %v2925, %v2917
          %v3558 = vpack.c.b16 %v2926, %v2918
          %v3559 = vpack.c.b16 %v2927, %v2919
          %v3560 = vpack.c.b16 %v2936, %v2928
          %v3561 = vpack.c.b16 %v2937, %v2929
          %v3562 = vpack.c.b16 %v2938, %v2930
          %v3563 = vpack.c.b16 %v2939, %v2931
          %v3564 = vpack.c.b16 %v2940, %v2932
          %v3565 = vpack.c.b16 %v2941, %v2933
          %v3566 = vpack.c.b16 %v2942, %v2934
          %v3567 = vpack.c.b16 %v2943, %v2935
          %v3568 = vpack.c.b16 %v2952, %v2944
          %v3569 = vpack.c.b16 %v2953, %v2945
          %v3570 = vpack.c.b16 %v2954, %v2946
          %v3571 = vpack.c.b16 %v2955, %v2947
          %v3572 = vpack.c.b16 %v2956, %v2948
          %v3573 = vpack.c.b16 %v2957, %v2949
          %v3574 = vpack.c.b16 %v2958, %v2950
          %v3575 = vpack.c.b16 %v2959, %v2951
          %v3576 = vpack.c.b16 %v2968, %v2960
          %v3577 = vpack.c.b16 %v2969, %v2961
          %v3578 = vpack.c.b16 %v2970, %v2962
          %v3579 = vpack.c.b16 %v2971, %v2963
          %v3580 = vpack.c.b16 %v2972, %v2964
          %v3581 = vpack.c.b16 %v2973, %v2965
          %v3582 = vpack.c.b16 %v2974, %v2966
          %v3583 = vpack.c.b16 %v2975, %v2967
          %v3584 = vpack.c.b16 %v2984, %v2976
          %v3585 = vpack.c.b16 %v2985, %v2977
          %v3586 = vpack.c.b16 %v2986, %v2978
          %v3587 = vpack.c.b16 %v2987, %v2979
          %v3588 = vpack.c.b16 %v2988, %v2980
          %v3589 = vpack.c.b16 %v2989, %v2981
          %v3590 = vpack.c.b16 %v2990, %v2982
          %v3591 = vpack.c.b16 %v2991, %v2983
          %v3592 = vpack.c.b16 %v3000, %v2992
          %v3593 = vpack.c.b16 %v3001, %v2993
          %v3594 = vpack.c.b16 %v3002, %v2994
          %v3595 = vpack.c.b16 %v3003, %v2995
          %v3596 = vpack.c.b16 %v3004, %v2996
          %v3597 = vpack.c.b16 %v3005, %v2997
          %v3598 = vpack.c.b16 %v3006, %v2998
          %v3599 = vpack.c.b16 %v3007, %v2999
          %v3600 = vpack.c.b16 %v3016, %v3008
          %v3601 = vpack.c.b16 %v3017, %v3009
          %v3602 = vpack.c.b16 %v3018, %v3010
          %v3603 = vpack.c.b16 %v3019, %v3011
          %v3604 = vpack.c.b16 %v3020, %v3012
          %v3605 = vpack.c.b16 %v3021, %v3013
          %v3606 = vpack.c.b16 %v3022, %v3014
          %v3607 = vpack.c.b16 %v3023, %v3015
          %v3608 = vpack.c.b16 %v3032, %v3024
          %v3609 = vpack.c.b16 %v3033, %v3025
          %v3610 = vpack.c.b16 %v3034, %v3026
          %v3611 = vpack.c.b16 %v3035, %v3027
          %v3612 = vpack.c.b16 %v3036, %v3028
          %v3613 = vpack.c.b16 %v3037, %v3029
          %v3614 = vpack.c.b16 %v3038, %v3030
          %v3615 = vpack.c.b16 %v3039, %v3031
          %v3616 = vpack.c.b16 %v3048, %v3040
          %v3617 = vpack.c.b16 %v3049, %v3041
          %v3618 = vpack.c.b16 %v3050, %v3042
          %v3619 = vpack.c.b16 %v3051, %v3043
          %v3620 = vpack.c.b16 %v3052, %v3044
          %v3621 = vpack.c.b16 %v3053, %v3045
          %v3622 = vpack.c.b16 %v3054, %v3046
          %v3623 = vpack.c.b16 %v3055, %v3047
          %v3624 = vpack.c.b16 %v3064, %v3056
          %v3625 = vpack.c.b16 %v3065, %v3057
          %v3626 = vpack.c.b16 %v3066, %v3058
          %v3627 = vpack.c.b16 %v3067, %v3059
          %v3628 = vpack.c.b16 %v3068, %v3060
          %v3629 = vpack.c.b16 %v3069, %v3061
          %v3630 = vpack.c.b16 %v3070, %v3062
          %v3631 = vpack.c.b16 %v3071, %v3063
          %v3632 = vpack.c.b16 %v3080, %v3072
          %v3633 = vpack.c.b16 %v3081, %v3073
          %v3634 = vpack.c.b16 %v3082, %v3074
          %v3635 = vpack.c.b16 %v3083, %v3075
          %v3636 = vpack.c.b16 %v3084, %v3076
          %v3637 = vpack.c.b16 %v3085, %v3077
          %v3638 = vpack.c.b16 %v3086, %v3078
          %v3639 = vpack.c.b16 %v3087, %v3079
          %v3640 = vpack.c.b16 %v3096, %v3088
          %v3641 = vpack.c.b16 %v3097, %v3089
          %v3642 = vpack.c.b16 %v3098, %v3090
          %v3643 = vpack.c.b16 %v3099, %v3091
          %v3644 = vpack.c.b16 %v3100, %v3092
          %v3645 = vpack.c.b16 %v3101, %v3093
          %v3646 = vpack.c.b16 %v3102, %v3094
          %v3647 = vpack.c.b16 %v3103, %v3095
          %v3648 = vpack.c.b16 %v3112, %v3104
          %v3649 = vpack.c.b16 %v3113, %v3105
          %v3650 = vpack.c.b16 %v3114, %v3106
          %v3651 = vpack.c.b16 %v3115, %v3107
          %v3652 = vpack.c.b16 %v3116, %v3108
          %v3653 = vpack.c.b16 %v3117, %v3109
          %v3654 = vpack.c.b16 %v3118, %v3110
          %v3655 = vpack.c.b16 %v3119, %v3111
          %v3656 = vpack.c.b16 %v3128, %v3120
          %v3657 = vpack.c.b16 %v3129, %v3121
          %v3658 = vpack.c.b16 %v3130, %v3122
          %v3659 = vpack.c.b16 %v3131, %v3123
          %v3660 = vpack.c.b16 %v3132, %v3124
          %v3661 = vpack.c.b16 %v3133, %v3125
          %v3662 = vpack.c.b16 %v3134, %v3126
          %v3663 = vpack.c.b16 %v3135, %v3127
          %v3664 = vpack.c.b16 %v3144, %v3136
          %v3665 = vpack.c.b16 %v3145, %v3137
          %v3666 = vpack.c.b16 %v3146, %v3138
          %v3667 = vpack.c.b16 %v3147, %v3139
          %v3668 = vpack.c.b16 %v3148, %v3140
          %v3669 = vpack.c.b16 %v3149, %v3141
          %v3670 = vpack.c.b16 %v3150, %v3142
          %v3671 = vpack.c.b16 %v3151, %v3143
          %v3672 = vpack.c.b16 %v3160, %v3152
          %v3673 = vpack.c.b16 %v3161, %v3153
          %v3674 = vpack.c.b16 %v3162, %v3154
          %v3675 = vpack.c.b16 %v3163, %v3155
          %v3676 = vpack.c.b16 %v3164, %v3156
          %v3677 = vpack.c.b16 %v3165, %v3157
          %v3678 = vpack.c.b16 %v3166, %v3158
          %v3679 = vpack.c.b16 %v3167, %v3159
          %4192 = vmatprep.subr.bf16.mxu0 %v3225
          %4193 = vmatpush1.bf16.msra.mxu0 %v3224
          %4194 = vmatprep.subr.bf16.mxu0 %v3217
          %4195 = vmatpush1.bf16.msra.mxu0 %v3216
          %4196 = vmatprep.subr.bf16.mxu0 %v3209
          %4197 = vmatpush1.bf16.msra.mxu0 %v3208
          %4198 = vmatprep.subr.bf16.mxu0 %v3201
          %4199 = vmatpush1.bf16.msra.mxu0 %v3200
          %4200 = vmatprep.subr.bf16.mxu0 %v3193
          %4201 = vmatpush1.bf16.msra.mxu0 %v3192
          %4202 = vmatprep.subr.bf16.mxu0 %v3185
          %4203 = vmatpush1.bf16.msra.mxu0 %v3184
          %4204 = vmatprep.subr.bf16.mxu0 %v3177
          %4205 = vmatpush1.bf16.msra.mxu0 %v3176
          %4206 = vmatprep.subr.bf16.mxu0 %v3169
          %4207 = vmatpush1.bf16.msra.mxu0 %v3168
          %4208 = vmatprep.subr.bf16.mxu0 %v3289
          %4209 = vmatpush2.bf16.msra.mxu0 %v3288
          %4210 = vmatprep.subr.bf16.mxu0 %v3281
          %4211 = vmatpush2.bf16.msra.mxu0 %v3280
          %4212 = vmatprep.subr.bf16.mxu0 %v3273
          %4213 = vmatpush2.bf16.msra.mxu0 %v3272
          %4214 = vmatprep.subr.bf16.mxu0 %v3265
          %4215 = vmatpush2.bf16.msra.mxu0 %v3264
          %4216 = vmatprep.subr.bf16.mxu0 %v3257
          %4217 = vmatpush2.bf16.msra.mxu0 %v3256
          %4218 = vmatprep.subr.bf16.mxu0 %v3249
          %4219 = vmatpush2.bf16.msra.mxu0 %v3248
          %4220 = vmatprep.subr.bf16.mxu0 %v3241
          %4221 = vmatpush2.bf16.msra.mxu0 %v3240
          %4222 = vmatprep.subr.bf16.mxu0 %v3233
          %4223 = vmatpush2.bf16.msra.mxu0 %v3232
          %4224 = vmatprep.mubr.bf16.mxu0 %v1071
          %4225 = vmatmul.mubr.bf16.gmra.mxu0 %v1070
          %v4226 = vpop.f32.mrf.mxu0
          %v4227 = vadd.f32 %v1595, %v4226
          %v4228 = vpop.f32.mrf.mxu0
          %v4229 = vadd.f32 %v1599, %v4228
          %v4230 = vpop.f32.mrf.mxu0
          %v4231 = vpop.f32.mrf.mxu0
          %4232 = vdwg.mxu0
          %4233 = vmatprep.subr.bf16.mxu0 %v3353
          %4234 = vmatpush1.bf16.msra.mxu0 %v3352
          %4235 = vmatprep.subr.bf16.mxu0 %v3345
          %4236 = vmatpush1.bf16.msra.mxu0 %v3344
          %4237 = vmatprep.subr.bf16.mxu0 %v3337
          %4238 = vmatpush1.bf16.msra.mxu0 %v3336
          %4239 = vmatprep.subr.bf16.mxu0 %v3329
          %4240 = vmatpush1.bf16.msra.mxu0 %v3328
          %4241 = vmatprep.subr.bf16.mxu0 %v3321
          %4242 = vmatpush1.bf16.msra.mxu0 %v3320
          %4243 = vmatprep.subr.bf16.mxu0 %v3313
          %4244 = vmatpush1.bf16.msra.mxu0 %v3312
          %4245 = vmatprep.subr.bf16.mxu0 %v3305
          %4246 = vmatpush1.bf16.msra.mxu0 %v3304
          %4247 = vmatprep.subr.bf16.mxu0 %v3297
          %4248 = vmatpush1.bf16.msra.mxu0 %v3296
          %4249 = vmatprep.subr.bf16.mxu0 %v3417
          %4250 = vmatpush2.bf16.msra.mxu0 %v3416
          %4251 = vmatprep.subr.bf16.mxu0 %v3409
          %4252 = vmatpush2.bf16.msra.mxu0 %v3408
          %4253 = vmatprep.subr.bf16.mxu0 %v3401
          %4254 = vmatpush2.bf16.msra.mxu0 %v3400
          %4255 = vmatprep.subr.bf16.mxu0 %v3393
          %4256 = vmatpush2.bf16.msra.mxu0 %v3392
          %4257 = vmatprep.subr.bf16.mxu0 %v3385
          %4258 = vmatpush2.bf16.msra.mxu0 %v3384
          %4259 = vmatprep.subr.bf16.mxu0 %v3377
          %4260 = vmatpush2.bf16.msra.mxu0 %v3376
          %4261 = vmatprep.subr.bf16.mxu0 %v3369
          %4262 = vmatpush2.bf16.msra.mxu0 %v3368
          %4263 = vmatprep.subr.bf16.mxu0 %v3361
          %4264 = vmatpush2.bf16.msra.mxu0 %v3360
          %4265 = vmatprep.mubr.bf16.mxu0 %v1073
          %4266 = vmatmul.mubr.bf16.gmra.mxu0 %v1072
          %v4267 = vpop.f32.mrf.mxu0
          %v4268 = vadd.f32 %v4227, %v4267
          %v4269 = vpop.f32.mrf.mxu0
          %v4270 = vadd.f32 %v4229, %v4269
          %v4271 = vpop.f32.mrf.mxu0
          %v4272 = vpop.f32.mrf.mxu0
          %4273 = vdwg.mxu0
          %4274 = vmatprep.subr.bf16.mxu0 %v3481
          %4275 = vmatpush1.bf16.msra.mxu0 %v3480
          %4276 = vmatprep.subr.bf16.mxu0 %v3473
          %4277 = vmatpush1.bf16.msra.mxu0 %v3472
          %4278 = vmatprep.subr.bf16.mxu0 %v3465
          %4279 = vmatpush1.bf16.msra.mxu0 %v3464
          %4280 = vmatprep.subr.bf16.mxu0 %v3457
          %4281 = vmatpush1.bf16.msra.mxu0 %v3456
          %4282 = vmatprep.subr.bf16.mxu0 %v3449
          %4283 = vmatpush1.bf16.msra.mxu0 %v3448
          %4284 = vmatprep.subr.bf16.mxu0 %v3441
          %4285 = vmatpush1.bf16.msra.mxu0 %v3440
          %4286 = vmatprep.subr.bf16.mxu0 %v3433
          %4287 = vmatpush1.bf16.msra.mxu0 %v3432
          %4288 = vmatprep.subr.bf16.mxu0 %v3425
          %4289 = vmatpush1.bf16.msra.mxu0 %v3424
          %4290 = vmatprep.subr.bf16.mxu0 %v3545
          %4291 = vmatpush2.bf16.msra.mxu0 %v3544
          %4292 = vmatprep.subr.bf16.mxu0 %v3537
          %4293 = vmatpush2.bf16.msra.mxu0 %v3536
          %4294 = vmatprep.subr.bf16.mxu0 %v3529
          %4295 = vmatpush2.bf16.msra.mxu0 %v3528
          %4296 = vmatprep.subr.bf16.mxu0 %v3521
          %4297 = vmatpush2.bf16.msra.mxu0 %v3520
          %4298 = vmatprep.subr.bf16.mxu0 %v3513
          %4299 = vmatpush2.bf16.msra.mxu0 %v3512
          %4300 = vmatprep.subr.bf16.mxu0 %v3505
          %4301 = vmatpush2.bf16.msra.mxu0 %v3504
          %4302 = vmatprep.subr.bf16.mxu0 %v3497
          %4303 = vmatpush2.bf16.msra.mxu0 %v3496
          %4304 = vmatprep.subr.bf16.mxu0 %v3489
          %4305 = vmatpush2.bf16.msra.mxu0 %v3488
          %4306 = vmatprep.mubr.bf16.mxu0 %v1075
          %4307 = vmatmul.mubr.bf16.gmra.mxu0 %v1074
          %v4308 = vpop.f32.mrf.mxu0
          %v4309 = vadd.f32 %v4268, %v4308
          %v4310 = vpop.f32.mrf.mxu0
          %v4311 = vadd.f32 %v4270, %v4310
          %v4312 = vpop.f32.mrf.mxu0
          %v4313 = vpop.f32.mrf.mxu0
          %4314 = vdwg.mxu0
          %4315 = vmatprep.subr.bf16.mxu0 %v3609
          %4316 = vmatpush1.bf16.msra.mxu0 %v3608
          %4317 = vmatprep.subr.bf16.mxu0 %v3601
          %4318 = vmatpush1.bf16.msra.mxu0 %v3600
          %4319 = vmatprep.subr.bf16.mxu0 %v3593
          %4320 = vmatpush1.bf16.msra.mxu0 %v3592
          %4321 = vmatprep.subr.bf16.mxu0 %v3585
          %4322 = vmatpush1.bf16.msra.mxu0 %v3584
          %4323 = vmatprep.subr.bf16.mxu0 %v3577
          %4324 = vmatpush1.bf16.msra.mxu0 %v3576
          %4325 = vmatprep.subr.bf16.mxu0 %v3569
          %4326 = vmatpush1.bf16.msra.mxu0 %v3568
          %4327 = vmatprep.subr.bf16.mxu0 %v3561
          %4328 = vmatpush1.bf16.msra.mxu0 %v3560
          %4329 = vmatprep.subr.bf16.mxu0 %v3553
          %4330 = vmatpush1.bf16.msra.mxu0 %v3552
          %4331 = vmatprep.subr.bf16.mxu0 %v3673
          %4332 = vmatpush2.bf16.msra.mxu0 %v3672
          %4333 = vmatprep.subr.bf16.mxu0 %v3665
          %4334 = vmatpush2.bf16.msra.mxu0 %v3664
          %4335 = vmatprep.subr.bf16.mxu0 %v3657
          %4336 = vmatpush2.bf16.msra.mxu0 %v3656
          %4337 = vmatprep.subr.bf16.mxu0 %v3649
          %4338 = vmatpush2.bf16.msra.mxu0 %v3648
          %4339 = vmatprep.subr.bf16.mxu0 %v3641
          %4340 = vmatpush2.bf16.msra.mxu0 %v3640
          %4341 = vmatprep.subr.bf16.mxu0 %v3633
          %4342 = vmatpush2.bf16.msra.mxu0 %v3632
          %4343 = vmatprep.subr.bf16.mxu0 %v3625
          %4344 = vmatpush2.bf16.msra.mxu0 %v3624
          %4345 = vmatprep.subr.bf16.mxu0 %v3617
          %4346 = vmatpush2.bf16.msra.mxu0 %v3616
          %4347 = vmatprep.mubr.bf16.mxu0 %v1077
          %4348 = vmatmul.mubr.bf16.gmra.mxu0 %v1076
          %v4349 = vpop.f32.mrf.mxu0
          %v4350 = vadd.f32 %v4309, %v4349
          %v4351 = vpop.f32.mrf.mxu0
          %v4352 = vadd.f32 %v4311, %v4351
          %v4353 = vpop.f32.mrf.mxu0
          %v4354 = vpop.f32.mrf.mxu0
          %4355 = vdwg.mxu0
          %4356 = vmatprep.subr.bf16.mxu0 %v3227
          %4357 = vmatpush1.bf16.msra.mxu0 %v3226
          %4358 = vmatprep.subr.bf16.mxu0 %v3219
          %4359 = vmatpush1.bf16.msra.mxu0 %v3218
          %4360 = vmatprep.subr.bf16.mxu0 %v3211
          %4361 = vmatpush1.bf16.msra.mxu0 %v3210
          %4362 = vmatprep.subr.bf16.mxu0 %v3203
          %4363 = vmatpush1.bf16.msra.mxu0 %v3202
          %4364 = vmatprep.subr.bf16.mxu0 %v3195
          %4365 = vmatpush1.bf16.msra.mxu0 %v3194
          %4366 = vmatprep.subr.bf16.mxu0 %v3187
          %4367 = vmatpush1.bf16.msra.mxu0 %v3186
          %4368 = vmatprep.subr.bf16.mxu0 %v3179
          %4369 = vmatpush1.bf16.msra.mxu0 %v3178
          %4370 = vmatprep.subr.bf16.mxu0 %v3171
          %4371 = vmatpush1.bf16.msra.mxu0 %v3170
          %4372 = vmatprep.subr.bf16.mxu0 %v3291
          %4373 = vmatpush2.bf16.msra.mxu0 %v3290
          %4374 = vmatprep.subr.bf16.mxu0 %v3283
          %4375 = vmatpush2.bf16.msra.mxu0 %v3282
          %4376 = vmatprep.subr.bf16.mxu0 %v3275
          %4377 = vmatpush2.bf16.msra.mxu0 %v3274
          %4378 = vmatprep.subr.bf16.mxu0 %v3267
          %4379 = vmatpush2.bf16.msra.mxu0 %v3266
          %4380 = vmatprep.subr.bf16.mxu0 %v3259
          %4381 = vmatpush2.bf16.msra.mxu0 %v3258
          %4382 = vmatprep.subr.bf16.mxu0 %v3251
          %4383 = vmatpush2.bf16.msra.mxu0 %v3250
          %4384 = vmatprep.subr.bf16.mxu0 %v3243
          %4385 = vmatpush2.bf16.msra.mxu0 %v3242
          %4386 = vmatprep.subr.bf16.mxu0 %v3235
          %4387 = vmatpush2.bf16.msra.mxu0 %v3234
          %4388 = vmatprep.mubr.bf16.mxu0 %v1071
          %4389 = vmatmul.mubr.bf16.gmra.mxu0 %v1070
          %v4390 = vpop.f32.mrf.mxu0
          %v4391 = vadd.f32 %v1603, %v4390
          %v4392 = vpop.f32.mrf.mxu0
          %v4393 = vadd.f32 %v1607, %v4392
          %v4394 = vpop.f32.mrf.mxu0
          %v4395 = vpop.f32.mrf.mxu0
          %4396 = vdwg.mxu0
          %4397 = vmatprep.subr.bf16.mxu0 %v3355
          %4398 = vmatpush1.bf16.msra.mxu0 %v3354
          %4399 = vmatprep.subr.bf16.mxu0 %v3347
          %4400 = vmatpush1.bf16.msra.mxu0 %v3346
          %4401 = vmatprep.subr.bf16.mxu0 %v3339
          %4402 = vmatpush1.bf16.msra.mxu0 %v3338
          %4403 = vmatprep.subr.bf16.mxu0 %v3331
          %4404 = vmatpush1.bf16.msra.mxu0 %v3330
          %4405 = vmatprep.subr.bf16.mxu0 %v3323
          %4406 = vmatpush1.bf16.msra.mxu0 %v3322
          %4407 = vmatprep.subr.bf16.mxu0 %v3315
          %4408 = vmatpush1.bf16.msra.mxu0 %v3314
          %4409 = vmatprep.subr.bf16.mxu0 %v3307
          %4410 = vmatpush1.bf16.msra.mxu0 %v3306
          %4411 = vmatprep.subr.bf16.mxu0 %v3299
          %4412 = vmatpush1.bf16.msra.mxu0 %v3298
          %4413 = vmatprep.subr.bf16.mxu0 %v3419
          %4414 = vmatpush2.bf16.msra.mxu0 %v3418
          %4415 = vmatprep.subr.bf16.mxu0 %v3411
          %4416 = vmatpush2.bf16.msra.mxu0 %v3410
          %4417 = vmatprep.subr.bf16.mxu0 %v3403
          %4418 = vmatpush2.bf16.msra.mxu0 %v3402
          %4419 = vmatprep.subr.bf16.mxu0 %v3395
          %4420 = vmatpush2.bf16.msra.mxu0 %v3394
          %4421 = vmatprep.subr.bf16.mxu0 %v3387
          %4422 = vmatpush2.bf16.msra.mxu0 %v3386
          %4423 = vmatprep.subr.bf16.mxu0 %v3379
          %4424 = vmatpush2.bf16.msra.mxu0 %v3378
          %4425 = vmatprep.subr.bf16.mxu0 %v3371
          %4426 = vmatpush2.bf16.msra.mxu0 %v3370
          %4427 = vmatprep.subr.bf16.mxu0 %v3363
          %4428 = vmatpush2.bf16.msra.mxu0 %v3362
          %4429 = vmatprep.mubr.bf16.mxu0 %v1073
          %4430 = vmatmul.mubr.bf16.gmra.mxu0 %v1072
          %v4431 = vpop.f32.mrf.mxu0
          %v4432 = vadd.f32 %v4391, %v4431
          %v4433 = vpop.f32.mrf.mxu0
          %v4434 = vadd.f32 %v4393, %v4433
          %v4435 = vpop.f32.mrf.mxu0
          %v4436 = vpop.f32.mrf.mxu0
          %4437 = vdwg.mxu0
          %4438 = vmatprep.subr.bf16.mxu0 %v3483
          %4439 = vmatpush1.bf16.msra.mxu0 %v3482
          %4440 = vmatprep.subr.bf16.mxu0 %v3475
          %4441 = vmatpush1.bf16.msra.mxu0 %v3474
          %4442 = vmatprep.subr.bf16.mxu0 %v3467
          %4443 = vmatpush1.bf16.msra.mxu0 %v3466
          %4444 = vmatprep.subr.bf16.mxu0 %v3459
          %4445 = vmatpush1.bf16.msra.mxu0 %v3458
          %4446 = vmatprep.subr.bf16.mxu0 %v3451
          %4447 = vmatpush1.bf16.msra.mxu0 %v3450
          %4448 = vmatprep.subr.bf16.mxu0 %v3443
          %4449 = vmatpush1.bf16.msra.mxu0 %v3442
          %4450 = vmatprep.subr.bf16.mxu0 %v3435
          %4451 = vmatpush1.bf16.msra.mxu0 %v3434
          %4452 = vmatprep.subr.bf16.mxu0 %v3427
          %4453 = vmatpush1.bf16.msra.mxu0 %v3426
          %4454 = vmatprep.subr.bf16.mxu0 %v3547
          %4455 = vmatpush2.bf16.msra.mxu0 %v3546
          %4456 = vmatprep.subr.bf16.mxu0 %v3539
          %4457 = vmatpush2.bf16.msra.mxu0 %v3538
          %4458 = vmatprep.subr.bf16.mxu0 %v3531
          %4459 = vmatpush2.bf16.msra.mxu0 %v3530
          %4460 = vmatprep.subr.bf16.mxu0 %v3523
          %4461 = vmatpush2.bf16.msra.mxu0 %v3522
          %4462 = vmatprep.subr.bf16.mxu0 %v3515
          %4463 = vmatpush2.bf16.msra.mxu0 %v3514
          %4464 = vmatprep.subr.bf16.mxu0 %v3507
          %4465 = vmatpush2.bf16.msra.mxu0 %v3506
          %4466 = vmatprep.subr.bf16.mxu0 %v3499
          %4467 = vmatpush2.bf16.msra.mxu0 %v3498
          %4468 = vmatprep.subr.bf16.mxu0 %v3491
          %4469 = vmatpush2.bf16.msra.mxu0 %v3490
          %4470 = vmatprep.mubr.bf16.mxu0 %v1075
          %4471 = vmatmul.mubr.bf16.gmra.mxu0 %v1074
          %v4472 = vpop.f32.mrf.mxu0
          %v4473 = vadd.f32 %v4432, %v4472
          %v4474 = vpop.f32.mrf.mxu0
          %v4475 = vadd.f32 %v4434, %v4474
          %v4476 = vpop.f32.mrf.mxu0
          %v4477 = vpop.f32.mrf.mxu0
          %4478 = vdwg.mxu0
          %4479 = vmatprep.subr.bf16.mxu0 %v3611
          %4480 = vmatpush1.bf16.msra.mxu0 %v3610
          %4481 = vmatprep.subr.bf16.mxu0 %v3603
          %4482 = vmatpush1.bf16.msra.mxu0 %v3602
          %4483 = vmatprep.subr.bf16.mxu0 %v3595
          %4484 = vmatpush1.bf16.msra.mxu0 %v3594
          %4485 = vmatprep.subr.bf16.mxu0 %v3587
          %4486 = vmatpush1.bf16.msra.mxu0 %v3586
          %4487 = vmatprep.subr.bf16.mxu0 %v3579
          %4488 = vmatpush1.bf16.msra.mxu0 %v3578
          %4489 = vmatprep.subr.bf16.mxu0 %v3571
          %4490 = vmatpush1.bf16.msra.mxu0 %v3570
          %4491 = vmatprep.subr.bf16.mxu0 %v3563
          %4492 = vmatpush1.bf16.msra.mxu0 %v3562
          %4493 = vmatprep.subr.bf16.mxu0 %v3555
          %4494 = vmatpush1.bf16.msra.mxu0 %v3554
          %4495 = vmatprep.subr.bf16.mxu0 %v3675
          %4496 = vmatpush2.bf16.msra.mxu0 %v3674
          %4497 = vmatprep.subr.bf16.mxu0 %v3667
          %4498 = vmatpush2.bf16.msra.mxu0 %v3666
          %4499 = vmatprep.subr.bf16.mxu0 %v3659
          %4500 = vmatpush2.bf16.msra.mxu0 %v3658
          %4501 = vmatprep.subr.bf16.mxu0 %v3651
          %4502 = vmatpush2.bf16.msra.mxu0 %v3650
          %4503 = vmatprep.subr.bf16.mxu0 %v3643
          %4504 = vmatpush2.bf16.msra.mxu0 %v3642
          %4505 = vmatprep.subr.bf16.mxu0 %v3635
          %4506 = vmatpush2.bf16.msra.mxu0 %v3634
          %4507 = vmatprep.subr.bf16.mxu0 %v3627
          %4508 = vmatpush2.bf16.msra.mxu0 %v3626
          %4509 = vmatprep.subr.bf16.mxu0 %v3619
          %4510 = vmatpush2.bf16.msra.mxu0 %v3618
          %4511 = vmatprep.mubr.bf16.mxu0 %v1077
          %4512 = vmatmul.mubr.bf16.gmra.mxu0 %v1076
          %v4513 = vpop.f32.mrf.mxu0
          %v4514 = vadd.f32 %v4473, %v4513
          %v4515 = vpop.f32.mrf.mxu0
          %v4516 = vadd.f32 %v4475, %v4515
          %v4517 = vpop.f32.mrf.mxu0
          %v4518 = vpop.f32.mrf.mxu0
          %4519 = vdwg.mxu0
          %4520 = vmatprep.subr.bf16.mxu0 %v3229
          %4521 = vmatpush1.bf16.msra.mxu0 %v3228
          %4522 = vmatprep.subr.bf16.mxu0 %v3221
          %4523 = vmatpush1.bf16.msra.mxu0 %v3220
          %4524 = vmatprep.subr.bf16.mxu0 %v3213
          %4525 = vmatpush1.bf16.msra.mxu0 %v3212
          %4526 = vmatprep.subr.bf16.mxu0 %v3205
          %4527 = vmatpush1.bf16.msra.mxu0 %v3204
          %4528 = vmatprep.subr.bf16.mxu0 %v3197
          %4529 = vmatpush1.bf16.msra.mxu0 %v3196
          %4530 = vmatprep.subr.bf16.mxu0 %v3189
          %4531 = vmatpush1.bf16.msra.mxu0 %v3188
          %4532 = vmatprep.subr.bf16.mxu0 %v3181
          %4533 = vmatpush1.bf16.msra.mxu0 %v3180
          %4534 = vmatprep.subr.bf16.mxu0 %v3173
          %4535 = vmatpush1.bf16.msra.mxu0 %v3172
          %4536 = vmatprep.subr.bf16.mxu0 %v3293
          %4537 = vmatpush2.bf16.msra.mxu0 %v3292
          %4538 = vmatprep.subr.bf16.mxu0 %v3285
          %4539 = vmatpush2.bf16.msra.mxu0 %v3284
          %4540 = vmatprep.subr.bf16.mxu0 %v3277
          %4541 = vmatpush2.bf16.msra.mxu0 %v3276
          %4542 = vmatprep.subr.bf16.mxu0 %v3269
          %4543 = vmatpush2.bf16.msra.mxu0 %v3268
          %4544 = vmatprep.subr.bf16.mxu0 %v3261
          %4545 = vmatpush2.bf16.msra.mxu0 %v3260
          %4546 = vmatprep.subr.bf16.mxu0 %v3253
          %4547 = vmatpush2.bf16.msra.mxu0 %v3252
          %4548 = vmatprep.subr.bf16.mxu0 %v3245
          %4549 = vmatpush2.bf16.msra.mxu0 %v3244
          %4550 = vmatprep.subr.bf16.mxu0 %v3237
          %4551 = vmatpush2.bf16.msra.mxu0 %v3236
          %4552 = vmatprep.mubr.bf16.mxu0 %v1071
          %4553 = vmatmul.mubr.bf16.gmra.mxu0 %v1070
          %v4554 = vpop.f32.mrf.mxu0
          %v4555 = vadd.f32 %v1611, %v4554
          %v4556 = vpop.f32.mrf.mxu0
          %v4557 = vadd.f32 %v1615, %v4556
          %v4558 = vpop.f32.mrf.mxu0
          %v4559 = vpop.f32.mrf.mxu0
          %4560 = vdwg.mxu0
          %4561 = vmatprep.subr.bf16.mxu0 %v3357
          %4562 = vmatpush1.bf16.msra.mxu0 %v3356
          %4563 = vmatprep.subr.bf16.mxu0 %v3349
          %4564 = vmatpush1.bf16.msra.mxu0 %v3348
          %4565 = vmatprep.subr.bf16.mxu0 %v3341
          %4566 = vmatpush1.bf16.msra.mxu0 %v3340
          %4567 = vmatprep.subr.bf16.mxu0 %v3333
          %4568 = vmatpush1.bf16.msra.mxu0 %v3332
          %4569 = vmatprep.subr.bf16.mxu0 %v3325
          %4570 = vmatpush1.bf16.msra.mxu0 %v3324
          %4571 = vmatprep.subr.bf16.mxu0 %v3317
          %4572 = vmatpush1.bf16.msra.mxu0 %v3316
          %4573 = vmatprep.subr.bf16.mxu0 %v3309
          %4574 = vmatpush1.bf16.msra.mxu0 %v3308
          %4575 = vmatprep.subr.bf16.mxu0 %v3301
          %4576 = vmatpush1.bf16.msra.mxu0 %v3300
          %4577 = vmatprep.subr.bf16.mxu0 %v3421
          %4578 = vmatpush2.bf16.msra.mxu0 %v3420
          %4579 = vmatprep.subr.bf16.mxu0 %v3413
          %4580 = vmatpush2.bf16.msra.mxu0 %v3412
          %4581 = vmatprep.subr.bf16.mxu0 %v3405
          %4582 = vmatpush2.bf16.msra.mxu0 %v3404
          %4583 = vmatprep.subr.bf16.mxu0 %v3397
          %4584 = vmatpush2.bf16.msra.mxu0 %v3396
          %4585 = vmatprep.subr.bf16.mxu0 %v3389
          %4586 = vmatpush2.bf16.msra.mxu0 %v3388
          %4587 = vmatprep.subr.bf16.mxu0 %v3381
          %4588 = vmatpush2.bf16.msra.mxu0 %v3380
          %4589 = vmatprep.subr.bf16.mxu0 %v3373
          %4590 = vmatpush2.bf16.msra.mxu0 %v3372
          %4591 = vmatprep.subr.bf16.mxu0 %v3365
          %4592 = vmatpush2.bf16.msra.mxu0 %v3364
          %4593 = vmatprep.mubr.bf16.mxu0 %v1073
          %4594 = vmatmul.mubr.bf16.gmra.mxu0 %v1072
          %v4595 = vpop.f32.mrf.mxu0
          %v4596 = vadd.f32 %v4555, %v4595
          %v4597 = vpop.f32.mrf.mxu0
          %v4598 = vadd.f32 %v4557, %v4597
          %v4599 = vpop.f32.mrf.mxu0
          %v4600 = vpop.f32.mrf.mxu0
          %4601 = vdwg.mxu0
          %4602 = vmatprep.subr.bf16.mxu0 %v3485
          %4603 = vmatpush1.bf16.msra.mxu0 %v3484
          %4604 = vmatprep.subr.bf16.mxu0 %v3477
          %4605 = vmatpush1.bf16.msra.mxu0 %v3476
          %4606 = vmatprep.subr.bf16.mxu0 %v3469
          %4607 = vmatpush1.bf16.msra.mxu0 %v3468
          %4608 = vmatprep.subr.bf16.mxu0 %v3461
          %4609 = vmatpush1.bf16.msra.mxu0 %v3460
          %4610 = vmatprep.subr.bf16.mxu0 %v3453
          %4611 = vmatpush1.bf16.msra.mxu0 %v3452
          %4612 = vmatprep.subr.bf16.mxu0 %v3445
          %4613 = vmatpush1.bf16.msra.mxu0 %v3444
          %4614 = vmatprep.subr.bf16.mxu0 %v3437
          %4615 = vmatpush1.bf16.msra.mxu0 %v3436
          %4616 = vmatprep.subr.bf16.mxu0 %v3429
          %4617 = vmatpush1.bf16.msra.mxu0 %v3428
          %4618 = vmatprep.subr.bf16.mxu0 %v3549
          %4619 = vmatpush2.bf16.msra.mxu0 %v3548
          %4620 = vmatprep.subr.bf16.mxu0 %v3541
          %4621 = vmatpush2.bf16.msra.mxu0 %v3540
          %4622 = vmatprep.subr.bf16.mxu0 %v3533
          %4623 = vmatpush2.bf16.msra.mxu0 %v3532
          %4624 = vmatprep.subr.bf16.mxu0 %v3525
          %4625 = vmatpush2.bf16.msra.mxu0 %v3524
          %4626 = vmatprep.subr.bf16.mxu0 %v3517
          %4627 = vmatpush2.bf16.msra.mxu0 %v3516
          %4628 = vmatprep.subr.bf16.mxu0 %v3509
          %4629 = vmatpush2.bf16.msra.mxu0 %v3508
          %4630 = vmatprep.subr.bf16.mxu0 %v3501
          %4631 = vmatpush2.bf16.msra.mxu0 %v3500
          %4632 = vmatprep.subr.bf16.mxu0 %v3493
          %4633 = vmatpush2.bf16.msra.mxu0 %v3492
          %4634 = vmatprep.mubr.bf16.mxu0 %v1075
          %4635 = vmatmul.mubr.bf16.gmra.mxu0 %v1074
          %v4636 = vpop.f32.mrf.mxu0
          %v4637 = vadd.f32 %v4596, %v4636
          %v4638 = vpop.f32.mrf.mxu0
          %v4639 = vadd.f32 %v4598, %v4638
          %v4640 = vpop.f32.mrf.mxu0
          %v4641 = vpop.f32.mrf.mxu0
          %4642 = vdwg.mxu0
          %4643 = vmatprep.subr.bf16.mxu0 %v3613
          %4644 = vmatpush1.bf16.msra.mxu0 %v3612
          %4645 = vmatprep.subr.bf16.mxu0 %v3605
          %4646 = vmatpush1.bf16.msra.mxu0 %v3604
          %4647 = vmatprep.subr.bf16.mxu0 %v3597
          %4648 = vmatpush1.bf16.msra.mxu0 %v3596
          %4649 = vmatprep.subr.bf16.mxu0 %v3589
          %4650 = vmatpush1.bf16.msra.mxu0 %v3588
          %4651 = vmatprep.subr.bf16.mxu0 %v3581
          %4652 = vmatpush1.bf16.msra.mxu0 %v3580
          %4653 = vmatprep.subr.bf16.mxu0 %v3573
          %4654 = vmatpush1.bf16.msra.mxu0 %v3572
          %4655 = vmatprep.subr.bf16.mxu0 %v3565
          %4656 = vmatpush1.bf16.msra.mxu0 %v3564
          %4657 = vmatprep.subr.bf16.mxu0 %v3557
          %4658 = vmatpush1.bf16.msra.mxu0 %v3556
          %4659 = vmatprep.subr.bf16.mxu0 %v3677
          %4660 = vmatpush2.bf16.msra.mxu0 %v3676
          %4661 = vmatprep.subr.bf16.mxu0 %v3669
          %4662 = vmatpush2.bf16.msra.mxu0 %v3668
          %4663 = vmatprep.subr.bf16.mxu0 %v3661
          %4664 = vmatpush2.bf16.msra.mxu0 %v3660
          %4665 = vmatprep.subr.bf16.mxu0 %v3653
          %4666 = vmatpush2.bf16.msra.mxu0 %v3652
          %4667 = vmatprep.subr.bf16.mxu0 %v3645
          %4668 = vmatpush2.bf16.msra.mxu0 %v3644
          %4669 = vmatprep.subr.bf16.mxu0 %v3637
          %4670 = vmatpush2.bf16.msra.mxu0 %v3636
          %4671 = vmatprep.subr.bf16.mxu0 %v3629
          %4672 = vmatpush2.bf16.msra.mxu0 %v3628
          %4673 = vmatprep.subr.bf16.mxu0 %v3621
          %4674 = vmatpush2.bf16.msra.mxu0 %v3620
          %4675 = vmatprep.mubr.bf16.mxu0 %v1077
          %4676 = vmatmul.mubr.bf16.gmra.mxu0 %v1076
          %v4677 = vpop.f32.mrf.mxu0
          %v4678 = vadd.f32 %v4637, %v4677
          %v4679 = vpop.f32.mrf.mxu0
          %v4680 = vadd.f32 %v4639, %v4679
          %v4681 = vpop.f32.mrf.mxu0
          %v4682 = vpop.f32.mrf.mxu0
          %4683 = vdwg.mxu0
          %4684 = vmatprep.subr.bf16.mxu0 %v3231
          %4685 = vmatpush1.bf16.msra.mxu0 %v3230
          %4686 = vmatprep.subr.bf16.mxu0 %v3223
          %4687 = vmatpush1.bf16.msra.mxu0 %v3222
          %4688 = vmatprep.subr.bf16.mxu0 %v3215
          %4689 = vmatpush1.bf16.msra.mxu0 %v3214
          %4690 = vmatprep.subr.bf16.mxu0 %v3207
          %4691 = vmatpush1.bf16.msra.mxu0 %v3206
          %4692 = vmatprep.subr.bf16.mxu0 %v3199
          %4693 = vmatpush1.bf16.msra.mxu0 %v3198
          %4694 = vmatprep.subr.bf16.mxu0 %v3191
          %4695 = vmatpush1.bf16.msra.mxu0 %v3190
          %4696 = vmatprep.subr.bf16.mxu0 %v3183
          %4697 = vmatpush1.bf16.msra.mxu0 %v3182
          %4698 = vmatprep.subr.bf16.mxu0 %v3175
          %4699 = vmatpush1.bf16.msra.mxu0 %v3174
          %4700 = vmatprep.subr.bf16.mxu0 %v3295
          %4701 = vmatpush2.bf16.msra.mxu0 %v3294
          %4702 = vmatprep.subr.bf16.mxu0 %v3287
          %4703 = vmatpush2.bf16.msra.mxu0 %v3286
          %4704 = vmatprep.subr.bf16.mxu0 %v3279
          %4705 = vmatpush2.bf16.msra.mxu0 %v3278
          %4706 = vmatprep.subr.bf16.mxu0 %v3271
          %4707 = vmatpush2.bf16.msra.mxu0 %v3270
          %4708 = vmatprep.subr.bf16.mxu0 %v3263
          %4709 = vmatpush2.bf16.msra.mxu0 %v3262
          %4710 = vmatprep.subr.bf16.mxu0 %v3255
          %4711 = vmatpush2.bf16.msra.mxu0 %v3254
          %4712 = vmatprep.subr.bf16.mxu0 %v3247
          %4713 = vmatpush2.bf16.msra.mxu0 %v3246
          %4714 = vmatprep.subr.bf16.mxu0 %v3239
          %4715 = vmatpush2.bf16.msra.mxu0 %v3238
          %4716 = vmatprep.mubr.bf16.mxu0 %v1071
          %4717 = vmatmul.mubr.bf16.gmra.mxu0 %v1070
          %v4718 = vpop.f32.mrf.mxu0
          %v4719 = vadd.f32 %v1619, %v4718
          %v4720 = vpop.f32.mrf.mxu0
          %v4721 = vadd.f32 %v1623, %v4720
          %v4722 = vpop.f32.mrf.mxu0
          %v4723 = vpop.f32.mrf.mxu0
          %4724 = vdwg.mxu0
          %4725 = vmatprep.subr.bf16.mxu0 %v3359
          %4726 = vmatpush1.bf16.msra.mxu0 %v3358
          %4727 = vmatprep.subr.bf16.mxu0 %v3351
          %4728 = vmatpush1.bf16.msra.mxu0 %v3350
          %4729 = vmatprep.subr.bf16.mxu0 %v3343
          %4730 = vmatpush1.bf16.msra.mxu0 %v3342
          %4731 = vmatprep.subr.bf16.mxu0 %v3335
          %4732 = vmatpush1.bf16.msra.mxu0 %v3334
          %4733 = vmatprep.subr.bf16.mxu0 %v3327
          %4734 = vmatpush1.bf16.msra.mxu0 %v3326
          %4735 = vmatprep.subr.bf16.mxu0 %v3319
          %4736 = vmatpush1.bf16.msra.mxu0 %v3318
          %4737 = vmatprep.subr.bf16.mxu0 %v3311
          %4738 = vmatpush1.bf16.msra.mxu0 %v3310
          %4739 = vmatprep.subr.bf16.mxu0 %v3303
          %4740 = vmatpush1.bf16.msra.mxu0 %v3302
          %4741 = vmatprep.subr.bf16.mxu0 %v3423
          %4742 = vmatpush2.bf16.msra.mxu0 %v3422
          %4743 = vmatprep.subr.bf16.mxu0 %v3415
          %4744 = vmatpush2.bf16.msra.mxu0 %v3414
          %4745 = vmatprep.subr.bf16.mxu0 %v3407
          %4746 = vmatpush2.bf16.msra.mxu0 %v3406
          %4747 = vmatprep.subr.bf16.mxu0 %v3399
          %4748 = vmatpush2.bf16.msra.mxu0 %v3398
          %4749 = vmatprep.subr.bf16.mxu0 %v3391
          %4750 = vmatpush2.bf16.msra.mxu0 %v3390
          %4751 = vmatprep.subr.bf16.mxu0 %v3383
          %4752 = vmatpush2.bf16.msra.mxu0 %v3382
          %4753 = vmatprep.subr.bf16.mxu0 %v3375
          %4754 = vmatpush2.bf16.msra.mxu0 %v3374
          %4755 = vmatprep.subr.bf16.mxu0 %v3367
          %4756 = vmatpush2.bf16.msra.mxu0 %v3366
          %4757 = vmatprep.mubr.bf16.mxu0 %v1073
          %4758 = vmatmul.mubr.bf16.gmra.mxu0 %v1072
          %v4759 = vpop.f32.mrf.mxu0
          %v4760 = vadd.f32 %v4719, %v4759
          %v4761 = vpop.f32.mrf.mxu0
          %v4762 = vadd.f32 %v4721, %v4761
          %v4763 = vpop.f32.mrf.mxu0
          %v4764 = vpop.f32.mrf.mxu0
          %4765 = vdwg.mxu0
          %4766 = vmatprep.subr.bf16.mxu0 %v3487
          %4767 = vmatpush1.bf16.msra.mxu0 %v3486
          %4768 = vmatprep.subr.bf16.mxu0 %v3479
          %4769 = vmatpush1.bf16.msra.mxu0 %v3478
          %4770 = vmatprep.subr.bf16.mxu0 %v3471
          %4771 = vmatpush1.bf16.msra.mxu0 %v3470
          %4772 = vmatprep.subr.bf16.mxu0 %v3463
          %4773 = vmatpush1.bf16.msra.mxu0 %v3462
          %4774 = vmatprep.subr.bf16.mxu0 %v3455
          %4775 = vmatpush1.bf16.msra.mxu0 %v3454
          %4776 = vmatprep.subr.bf16.mxu0 %v3447
          %4777 = vmatpush1.bf16.msra.mxu0 %v3446
          %4778 = vmatprep.subr.bf16.mxu0 %v3439
          %4779 = vmatpush1.bf16.msra.mxu0 %v3438
          %4780 = vmatprep.subr.bf16.mxu0 %v3431
          %4781 = vmatpush1.bf16.msra.mxu0 %v3430
          %4782 = vmatprep.subr.bf16.mxu0 %v3551
          %4783 = vmatpush2.bf16.msra.mxu0 %v3550
          %4784 = vmatprep.subr.bf16.mxu0 %v3543
          %4785 = vmatpush2.bf16.msra.mxu0 %v3542
          %4786 = vmatprep.subr.bf16.mxu0 %v3535
          %4787 = vmatpush2.bf16.msra.mxu0 %v3534
          %4788 = vmatprep.subr.bf16.mxu0 %v3527
          %4789 = vmatpush2.bf16.msra.mxu0 %v3526
          %4790 = vmatprep.subr.bf16.mxu0 %v3519
          %4791 = vmatpush2.bf16.msra.mxu0 %v3518
          %4792 = vmatprep.subr.bf16.mxu0 %v3511
          %4793 = vmatpush2.bf16.msra.mxu0 %v3510
          %4794 = vmatprep.subr.bf16.mxu0 %v3503
          %4795 = vmatpush2.bf16.msra.mxu0 %v3502
          %4796 = vmatprep.subr.bf16.mxu0 %v3495
          %4797 = vmatpush2.bf16.msra.mxu0 %v3494
          %4798 = vmatprep.mubr.bf16.mxu0 %v1075
          %4799 = vmatmul.mubr.bf16.gmra.mxu0 %v1074
          %v4800 = vpop.f32.mrf.mxu0
          %v4801 = vadd.f32 %v4760, %v4800
          %v4802 = vpop.f32.mrf.mxu0
          %v4803 = vadd.f32 %v4762, %v4802
          %v4804 = vpop.f32.mrf.mxu0
          %v4805 = vpop.f32.mrf.mxu0
          %4806 = vdwg.mxu0
          %4807 = vmatprep.subr.bf16.mxu0 %v3615
          %4808 = vmatpush1.bf16.msra.mxu0 %v3614
          %4809 = vmatprep.subr.bf16.mxu0 %v3607
          %4810 = vmatpush1.bf16.msra.mxu0 %v3606
          %4811 = vmatprep.subr.bf16.mxu0 %v3599
          %4812 = vmatpush1.bf16.msra.mxu0 %v3598
          %4813 = vmatprep.subr.bf16.mxu0 %v3591
          %4814 = vmatpush1.bf16.msra.mxu0 %v3590
          %4815 = vmatprep.subr.bf16.mxu0 %v3583
          %4816 = vmatpush1.bf16.msra.mxu0 %v3582
          %4817 = vmatprep.subr.bf16.mxu0 %v3575
          %4818 = vmatpush1.bf16.msra.mxu0 %v3574
          %4819 = vmatprep.subr.bf16.mxu0 %v3567
          %4820 = vmatpush1.bf16.msra.mxu0 %v3566
          %4821 = vmatprep.subr.bf16.mxu0 %v3559
          %4822 = vmatpush1.bf16.msra.mxu0 %v3558
          %4823 = vmatprep.subr.bf16.mxu0 %v3679
          %4824 = vmatpush2.bf16.msra.mxu0 %v3678
          %4825 = vmatprep.subr.bf16.mxu0 %v3671
          %4826 = vmatpush2.bf16.msra.mxu0 %v3670
          %4827 = vmatprep.subr.bf16.mxu0 %v3663
          %4828 = vmatpush2.bf16.msra.mxu0 %v3662
          %4829 = vmatprep.subr.bf16.mxu0 %v3655
          %4830 = vmatpush2.bf16.msra.mxu0 %v3654
          %4831 = vmatprep.subr.bf16.mxu0 %v3647
          %4832 = vmatpush2.bf16.msra.mxu0 %v3646
          %4833 = vmatprep.subr.bf16.mxu0 %v3639
          %4834 = vmatpush2.bf16.msra.mxu0 %v3638
          %4835 = vmatprep.subr.bf16.mxu0 %v3631
          %4836 = vmatpush2.bf16.msra.mxu0 %v3630
          %4837 = vmatprep.subr.bf16.mxu0 %v3623
          %4838 = vmatpush2.bf16.msra.mxu0 %v3622
          %4839 = vmatprep.mubr.bf16.mxu0 %v1077
          %4840 = vmatmul.mubr.bf16.gmra.mxu0 %v1076
          %v4841 = vpop.f32.mrf.mxu0
          %v4842 = vadd.f32 %v4801, %v4841
          %v4843 = vpop.f32.mrf.mxu0
          %v4844 = vadd.f32 %v4803, %v4843
          %v4845 = vpop.f32.mrf.mxu0
          %v4846 = vpop.f32.mrf.mxu0
          %4847 = vdwg.mxu0
          %vm4848 = vcmp.ge.f32.partialorder %v4350, 0.0
          %vm4849 = vcmp.ge.f32.partialorder %v4352, 0.0
          %vm4850 = vcmp.ge.f32.partialorder %v4514, 0.0
          %vm4851 = vcmp.ge.f32.partialorder %v4516, 0.0
          %vm4852 = vcmp.ge.f32.partialorder %v4678, 0.0
          %vm4853 = vcmp.ge.f32.partialorder %v4680, 0.0
          %vm4854 = vcmp.ge.f32.partialorder %v4842, 0.0
          %vm4855 = vcmp.ge.f32.partialorder %v4844, 0.0
          %v4856 = vmul.f32 %v4350, 0.2
          %v4857 = vmul.f32 %v4352, 0.2
          %v4858 = vmul.f32 %v4514, 0.2
          %v4859 = vmul.f32 %v4516, 0.2
          %v4860 = vmul.f32 %v4678, 0.2
          %v4861 = vmul.f32 %v4680, 0.2
          %v4862 = vmul.f32 %v4842, 0.2
          %v4863 = vmul.f32 %v4844, 0.2
          %v4864 = vsel %vm4848, %v4350, %v4856
          %v4865 = vsel %vm4849, %v4352, %v4857
          %v4866 = vsel %vm4850, %v4514, %v4858
          %v4867 = vsel %vm4851, %v4516, %v4859
          %v4868 = vsel %vm4852, %v4678, %v4860
          %v4869 = vsel %vm4853, %v4680, %v4861
          %v4870 = vsel %vm4854, %v4842, %v4862
          %v4871 = vsel %vm4855, %v4844, %v4863
          %4872 = vst [vmem:[#allocation2] sm:$0xff] %v4864
          %4873 = vst [vmem:[#allocation2 + $0x8] sm:$0xff] %v4865
          %4874 = vst [vmem:[#allocation2 + $0x10] sm:$0xff] %v4866
          %4875 = vst [vmem:[#allocation2 + $0x18] sm:$0xff] %v4867
          %4876 = vst [vmem:[#allocation2 + $0x20] sm:$0xff] %v4868
          %4877 = vst [vmem:[#allocation2 + $0x28] sm:$0xff] %v4869
          %4878 = vst [vmem:[#allocation2 + $0x30] sm:$0xff] %v4870
          %4879 = vst [vmem:[#allocation2 + $0x38] sm:$0xff] %v4871
        $region84: #{tpu_custom_call.1} parent=47 // pred_fallthru
          _
        %p4880 = scmp.eq.s32.totalorder %s25, 5
        // Predicated region
        $region85: #{tpu_custom_call.1} parent=47 // pred_check
          %p4881 = pneg %p4880
        $region86: #{tpu_custom_call.1} parent=47 // pred_check_branch
          %4883 = sbr.rel (%p4881) target = $region88
        $region87: #{tpu_custom_call.1} parent=47 // pred_region
          %v4884 = vld [vmem:[#allocation2] sm:$0xff]
          %v4885 = vld [vmem:[#allocation2 + $0x8] sm:$0xff]
          %v4886 = vld [vmem:[#allocation2 + $0x10] sm:$0xff]
          %v4887 = vld [vmem:[#allocation2 + $0x18] sm:$0xff]
          %v4888 = vld [vmem:[#allocation2 + $0x20] sm:$0xff]
          %v4889 = vld [vmem:[#allocation2 + $0x28] sm:$0xff]
          %v4890 = vld [vmem:[#allocation2 + $0x30] sm:$0xff]
          %v4891 = vld [vmem:[#allocation2 + $0x38] sm:$0xff]
          %v4892 = vpack.c.bf16 %v4884, %v4884
          %v4893 = vpack.c.bf16 %v4885, %v4885
          %v4894 = vpack.c.bf16 %v4886, %v4886
          %v4895 = vpack.c.bf16 %v4887, %v4887
          %v4896 = vpack.c.bf16 %v4888, %v4888
          %v4897 = vpack.c.bf16 %v4889, %v4889
          %v4898 = vpack.c.bf16 %v4890, %v4890
          %v4899 = vpack.c.bf16 %v4891, %v4891
          %v4900 = vld [vmem:[#allocation12] sm:$0xf]
          %v4901 = vld [vmem:[#allocation12 + $0x4] sm:$0xf]
          %v4902 = vld [vmem:[#allocation12 + $0x8] sm:$0xf]
          %v4903 = vld [vmem:[#allocation12 + $0xc] sm:$0xf]
          %v4904 = vld [vmem:[#allocation12 + $0x10] sm:$0xf]
          %v4905 = vld [vmem:[#allocation12 + $0x14] sm:$0xf]
          %v4906 = vld [vmem:[#allocation12 + $0x18] sm:$0xf]
          %v4907 = vld [vmem:[#allocation12 + $0x1c] sm:$0xf]
          %v4908 = vld [vmem:[#allocation12 + $0x20] sm:$0xf]
          %v4909 = vld [vmem:[#allocation12 + $0x24] sm:$0xf]
          %v4910 = vld [vmem:[#allocation12 + $0x28] sm:$0xf]
          %v4911 = vld [vmem:[#allocation12 + $0x2c] sm:$0xf]
          %v4912 = vld [vmem:[#allocation12 + $0x30] sm:$0xf]
          %v4913 = vld [vmem:[#allocation12 + $0x34] sm:$0xf]
          %v4914 = vld [vmem:[#allocation12 + $0x38] sm:$0xf]
          %v4915 = vld [vmem:[#allocation12 + $0x3c] sm:$0xf]
          %v4916 = vld [vmem:[#allocation12 + $0x40] sm:$0xf]
          %v4917 = vld [vmem:[#allocation12 + $0x44] sm:$0xf]
          %v4918 = vld [vmem:[#allocation12 + $0x48] sm:$0xf]
          %v4919 = vld [vmem:[#allocation12 + $0x4c] sm:$0xf]
          %v4920 = vld [vmem:[#allocation12 + $0x50] sm:$0xf]
          %v4921 = vld [vmem:[#allocation12 + $0x54] sm:$0xf]
          %v4922 = vld [vmem:[#allocation12 + $0x58] sm:$0xf]
          %v4923 = vld [vmem:[#allocation12 + $0x5c] sm:$0xf]
          %v4924 = vld [vmem:[#allocation12 + $0x60] sm:$0xf]
          %v4925 = vld [vmem:[#allocation12 + $0x64] sm:$0xf]
          %v4926 = vld [vmem:[#allocation12 + $0x68] sm:$0xf]
          %v4927 = vld [vmem:[#allocation12 + $0x6c] sm:$0xf]
          %v4928 = vld [vmem:[#allocation12 + $0x70] sm:$0xf]
          %v4929 = vld [vmem:[#allocation12 + $0x74] sm:$0xf]
          %v4930 = vld [vmem:[#allocation12 + $0x78] sm:$0xf]
          %v4931 = vld [vmem:[#allocation12 + $0x7c] sm:$0xf]
          %v4932 = vld [vmem:[#allocation12 + $0x80] sm:$0xf]
          %v4933 = vld [vmem:[#allocation12 + $0x84] sm:$0xf]
          %v4934 = vld [vmem:[#allocation12 + $0x88] sm:$0xf]
          %v4935 = vld [vmem:[#allocation12 + $0x8c] sm:$0xf]
          %v4936 = vld [vmem:[#allocation12 + $0x90] sm:$0xf]
          %v4937 = vld [vmem:[#allocation12 + $0x94] sm:$0xf]
          %v4938 = vld [vmem:[#allocation12 + $0x98] sm:$0xf]
          %v4939 = vld [vmem:[#allocation12 + $0x9c] sm:$0xf]
          %v4940 = vld [vmem:[#allocation12 + $0xa0] sm:$0xf]
          %v4941 = vld [vmem:[#allocation12 + $0xa4] sm:$0xf]
          %v4942 = vld [vmem:[#allocation12 + $0xa8] sm:$0xf]
          %v4943 = vld [vmem:[#allocation12 + $0xac] sm:$0xf]
          %v4944 = vld [vmem:[#allocation12 + $0xb0] sm:$0xf]
          %v4945 = vld [vmem:[#allocation12 + $0xb4] sm:$0xf]
          %v4946 = vld [vmem:[#allocation12 + $0xb8] sm:$0xf]
          %v4947 = vld [vmem:[#allocation12 + $0xbc] sm:$0xf]
          %v4948 = vld [vmem:[#allocation12 + $0xc0] sm:$0xf]
          %v4949 = vld [vmem:[#allocation12 + $0xc4] sm:$0xf]
          %v4950 = vld [vmem:[#allocation12 + $0xc8] sm:$0xf]
          %v4951 = vld [vmem:[#allocation12 + $0xcc] sm:$0xf]
          %v4952 = vld [vmem:[#allocation12 + $0xd0] sm:$0xf]
          %v4953 = vld [vmem:[#allocation12 + $0xd4] sm:$0xf]
          %v4954 = vld [vmem:[#allocation12 + $0xd8] sm:$0xf]
          %v4955 = vld [vmem:[#allocation12 + $0xdc] sm:$0xf]
          %v4956 = vld [vmem:[#allocation12 + $0xe0] sm:$0xf]
          %v4957 = vld [vmem:[#allocation12 + $0xe4] sm:$0xf]
          %v4958 = vld [vmem:[#allocation12 + $0xe8] sm:$0xf]
          %v4959 = vld [vmem:[#allocation12 + $0xec] sm:$0xf]
          %v4960 = vld [vmem:[#allocation12 + $0xf0] sm:$0xf]
          %v4961 = vld [vmem:[#allocation12 + $0xf4] sm:$0xf]
          %v4962 = vld [vmem:[#allocation12 + $0xf8] sm:$0xf]
          %v4963 = vld [vmem:[#allocation12 + $0xfc] sm:$0xf]
          %v4964 = vld [vmem:[#allocation12 + $0x100] sm:$0xf]
          %v4965 = vld [vmem:[#allocation12 + $0x104] sm:$0xf]
          %v4966 = vld [vmem:[#allocation12 + $0x108] sm:$0xf]
          %v4967 = vld [vmem:[#allocation12 + $0x10c] sm:$0xf]
          %v4968 = vld [vmem:[#allocation12 + $0x110] sm:$0xf]
          %v4969 = vld [vmem:[#allocation12 + $0x114] sm:$0xf]
          %v4970 = vld [vmem:[#allocation12 + $0x118] sm:$0xf]
          %v4971 = vld [vmem:[#allocation12 + $0x11c] sm:$0xf]
          %v4972 = vld [vmem:[#allocation12 + $0x120] sm:$0xf]
          %v4973 = vld [vmem:[#allocation12 + $0x124] sm:$0xf]
          %v4974 = vld [vmem:[#allocation12 + $0x128] sm:$0xf]
          %v4975 = vld [vmem:[#allocation12 + $0x12c] sm:$0xf]
          %v4976 = vld [vmem:[#allocation12 + $0x130] sm:$0xf]
          %v4977 = vld [vmem:[#allocation12 + $0x134] sm:$0xf]
          %v4978 = vld [vmem:[#allocation12 + $0x138] sm:$0xf]
          %v4979 = vld [vmem:[#allocation12 + $0x13c] sm:$0xf]
          %v4980 = vld [vmem:[#allocation12 + $0x140] sm:$0xf]
          %v4981 = vld [vmem:[#allocation12 + $0x144] sm:$0xf]
          %v4982 = vld [vmem:[#allocation12 + $0x148] sm:$0xf]
          %v4983 = vld [vmem:[#allocation12 + $0x14c] sm:$0xf]
          %v4984 = vld [vmem:[#allocation12 + $0x150] sm:$0xf]
          %v4985 = vld [vmem:[#allocation12 + $0x154] sm:$0xf]
          %v4986 = vld [vmem:[#allocation12 + $0x158] sm:$0xf]
          %v4987 = vld [vmem:[#allocation12 + $0x15c] sm:$0xf]
          %v4988 = vld [vmem:[#allocation12 + $0x160] sm:$0xf]
          %v4989 = vld [vmem:[#allocation12 + $0x164] sm:$0xf]
          %v4990 = vld [vmem:[#allocation12 + $0x168] sm:$0xf]
          %v4991 = vld [vmem:[#allocation12 + $0x16c] sm:$0xf]
          %v4992 = vld [vmem:[#allocation12 + $0x170] sm:$0xf]
          %v4993 = vld [vmem:[#allocation12 + $0x174] sm:$0xf]
          %v4994 = vld [vmem:[#allocation12 + $0x178] sm:$0xf]
          %v4995 = vld [vmem:[#allocation12 + $0x17c] sm:$0xf]
          %v4996 = vld [vmem:[#allocation12 + $0x180] sm:$0xf]
          %v4997 = vld [vmem:[#allocation12 + $0x184] sm:$0xf]
          %v4998 = vld [vmem:[#allocation12 + $0x188] sm:$0xf]
          %v4999 = vld [vmem:[#allocation12 + $0x18c] sm:$0xf]
          %v5000 = vld [vmem:[#allocation12 + $0x190] sm:$0xf]
          %v5001 = vld [vmem:[#allocation12 + $0x194] sm:$0xf]
          %v5002 = vld [vmem:[#allocation12 + $0x198] sm:$0xf]
          %v5003 = vld [vmem:[#allocation12 + $0x19c] sm:$0xf]
          %v5004 = vld [vmem:[#allocation12 + $0x1a0] sm:$0xf]
          %v5005 = vld [vmem:[#allocation12 + $0x1a4] sm:$0xf]
          %v5006 = vld [vmem:[#allocation12 + $0x1a8] sm:$0xf]
          %v5007 = vld [vmem:[#allocation12 + $0x1ac] sm:$0xf]
          %v5008 = vld [vmem:[#allocation12 + $0x1b0] sm:$0xf]
          %v5009 = vld [vmem:[#allocation12 + $0x1b4] sm:$0xf]
          %v5010 = vld [vmem:[#allocation12 + $0x1b8] sm:$0xf]
          %v5011 = vld [vmem:[#allocation12 + $0x1bc] sm:$0xf]
          %v5012 = vld [vmem:[#allocation12 + $0x1c0] sm:$0xf]
          %v5013 = vld [vmem:[#allocation12 + $0x1c4] sm:$0xf]
          %v5014 = vld [vmem:[#allocation12 + $0x1c8] sm:$0xf]
          %v5015 = vld [vmem:[#allocation12 + $0x1cc] sm:$0xf]
          %v5016 = vld [vmem:[#allocation12 + $0x1d0] sm:$0xf]
          %v5017 = vld [vmem:[#allocation12 + $0x1d4] sm:$0xf]
          %v5018 = vld [vmem:[#allocation12 + $0x1d8] sm:$0xf]
          %v5019 = vld [vmem:[#allocation12 + $0x1dc] sm:$0xf]
          %v5020 = vld [vmem:[#allocation12 + $0x1e0] sm:$0xf]
          %v5021 = vld [vmem:[#allocation12 + $0x1e4] sm:$0xf]
          %v5022 = vld [vmem:[#allocation12 + $0x1e8] sm:$0xf]
          %v5023 = vld [vmem:[#allocation12 + $0x1ec] sm:$0xf]
          %v5024 = vld [vmem:[#allocation12 + $0x1f0] sm:$0xf]
          %v5025 = vld [vmem:[#allocation12 + $0x1f4] sm:$0xf]
          %v5026 = vld [vmem:[#allocation12 + $0x1f8] sm:$0xf]
          %v5027 = vld [vmem:[#allocation12 + $0x1fc] sm:$0xf]
          %v5028 = vld [vmem:[#allocation14] sm:$0x1]
          %v5030 = vlaneseq
          %v5031 = vshrl.u32 %v5030, 7
          %v5032 = vsub.s32 0, %v5031
          %v5033 = vrot.slane %v5028, %v5032
          %v5163 = vunpack.c.l.b16 %v4900
          %v5164 = vunpack.c.l.b16 %v4901
          %v5165 = vunpack.c.l.b16 %v4902
          %v5166 = vunpack.c.l.b16 %v4903
          %v5167 = vunpack.c.l.b16 %v4904
          %v5168 = vunpack.c.l.b16 %v4905
          %v5169 = vunpack.c.l.b16 %v4906
          %v5170 = vunpack.c.l.b16 %v4907
          %v5171 = vunpack.c.l.b16 %v4908
          %v5172 = vunpack.c.l.b16 %v4909
          %v5173 = vunpack.c.l.b16 %v4910
          %v5174 = vunpack.c.l.b16 %v4911
          %v5175 = vunpack.c.l.b16 %v4912
          %v5176 = vunpack.c.l.b16 %v4913
          %v5177 = vunpack.c.l.b16 %v4914
          %v5178 = vunpack.c.l.b16 %v4915
          %v5179 = vunpack.c.l.b16 %v4916
          %v5180 = vunpack.c.l.b16 %v4917
          %v5181 = vunpack.c.l.b16 %v4918
          %v5182 = vunpack.c.l.b16 %v4919
          %v5183 = vunpack.c.l.b16 %v4920
          %v5184 = vunpack.c.l.b16 %v4921
          %v5185 = vunpack.c.l.b16 %v4922
          %v5186 = vunpack.c.l.b16 %v4923
          %v5187 = vunpack.c.l.b16 %v4924
          %v5188 = vunpack.c.l.b16 %v4925
          %v5189 = vunpack.c.l.b16 %v4926
          %v5190 = vunpack.c.l.b16 %v4927
          %v5191 = vunpack.c.l.b16 %v4928
          %v5192 = vunpack.c.l.b16 %v4929
          %v5193 = vunpack.c.l.b16 %v4930
          %v5194 = vunpack.c.l.b16 %v4931
          %v5195 = vunpack.c.l.b16 %v4932
          %v5196 = vunpack.c.l.b16 %v4933
          %v5197 = vunpack.c.l.b16 %v4934
          %v5198 = vunpack.c.l.b16 %v4935
          %v5199 = vunpack.c.l.b16 %v4936
          %v5200 = vunpack.c.l.b16 %v4937
          %v5201 = vunpack.c.l.b16 %v4938
          %v5202 = vunpack.c.l.b16 %v4939
          %v5203 = vunpack.c.l.b16 %v4940
          %v5204 = vunpack.c.l.b16 %v4941
          %v5205 = vunpack.c.l.b16 %v4942
          %v5206 = vunpack.c.l.b16 %v4943
          %v5207 = vunpack.c.l.b16 %v4944
          %v5208 = vunpack.c.l.b16 %v4945
          %v5209 = vunpack.c.l.b16 %v4946
          %v5210 = vunpack.c.l.b16 %v4947
          %v5211 = vunpack.c.l.b16 %v4948
          %v5212 = vunpack.c.l.b16 %v4949
          %v5213 = vunpack.c.l.b16 %v4950
          %v5214 = vunpack.c.l.b16 %v4951
          %v5215 = vunpack.c.l.b16 %v4952
          %v5216 = vunpack.c.l.b16 %v4953
          %v5217 = vunpack.c.l.b16 %v4954
          %v5218 = vunpack.c.l.b16 %v4955
          %v5219 = vunpack.c.l.b16 %v4956
          %v5220 = vunpack.c.l.b16 %v4957
          %v5221 = vunpack.c.l.b16 %v4958
          %v5222 = vunpack.c.l.b16 %v4959
          %v5223 = vunpack.c.l.b16 %v4960
          %v5224 = vunpack.c.l.b16 %v4961
          %v5225 = vunpack.c.l.b16 %v4962
          %v5226 = vunpack.c.l.b16 %v4963
          %v5227 = vunpack.c.l.b16 %v4964
          %v5228 = vunpack.c.l.b16 %v4965
          %v5229 = vunpack.c.l.b16 %v4966
          %v5230 = vunpack.c.l.b16 %v4967
          %v5231 = vunpack.c.l.b16 %v4968
          %v5232 = vunpack.c.l.b16 %v4969
          %v5233 = vunpack.c.l.b16 %v4970
          %v5234 = vunpack.c.l.b16 %v4971
          %v5235 = vunpack.c.l.b16 %v4972
          %v5236 = vunpack.c.l.b16 %v4973
          %v5237 = vunpack.c.l.b16 %v4974
          %v5238 = vunpack.c.l.b16 %v4975
          %v5239 = vunpack.c.l.b16 %v4976
          %v5240 = vunpack.c.l.b16 %v4977
          %v5241 = vunpack.c.l.b16 %v4978
          %v5242 = vunpack.c.l.b16 %v4979
          %v5243 = vunpack.c.l.b16 %v4980
          %v5244 = vunpack.c.l.b16 %v4981
          %v5245 = vunpack.c.l.b16 %v4982
          %v5246 = vunpack.c.l.b16 %v4983
          %v5247 = vunpack.c.l.b16 %v4984
          %v5248 = vunpack.c.l.b16 %v4985
          %v5249 = vunpack.c.l.b16 %v4986
          %v5250 = vunpack.c.l.b16 %v4987
          %v5251 = vunpack.c.l.b16 %v4988
          %v5252 = vunpack.c.l.b16 %v4989
          %v5253 = vunpack.c.l.b16 %v4990
          %v5254 = vunpack.c.l.b16 %v4991
          %v5255 = vunpack.c.l.b16 %v4992
          %v5256 = vunpack.c.l.b16 %v4993
          %v5257 = vunpack.c.l.b16 %v4994
          %v5258 = vunpack.c.l.b16 %v4995
          %v5259 = vunpack.c.l.b16 %v4996
          %v5260 = vunpack.c.l.b16 %v4997
          %v5261 = vunpack.c.l.b16 %v4998
          %v5262 = vunpack.c.l.b16 %v4999
          %v5263 = vunpack.c.l.b16 %v5000
          %v5264 = vunpack.c.l.b16 %v5001
          %v5265 = vunpack.c.l.b16 %v5002
          %v5266 = vunpack.c.l.b16 %v5003
          %v5267 = vunpack.c.l.b16 %v5004
          %v5268 = vunpack.c.l.b16 %v5005
          %v5269 = vunpack.c.l.b16 %v5006
          %v5270 = vunpack.c.l.b16 %v5007
          %v5271 = vunpack.c.l.b16 %v5008
          %v5272 = vunpack.c.l.b16 %v5009
          %v5273 = vunpack.c.l.b16 %v5010
          %v5274 = vunpack.c.l.b16 %v5011
          %v5275 = vunpack.c.l.b16 %v5012
          %v5276 = vunpack.c.l.b16 %v5013
          %v5277 = vunpack.c.l.b16 %v5014
          %v5278 = vunpack.c.l.b16 %v5015
          %v5279 = vunpack.c.l.b16 %v5016
          %v5280 = vunpack.c.l.b16 %v5017
          %v5281 = vunpack.c.l.b16 %v5018
          %v5282 = vunpack.c.l.b16 %v5019
          %v5283 = vunpack.c.l.b16 %v5020
          %v5284 = vunpack.c.l.b16 %v5021
          %v5285 = vunpack.c.l.b16 %v5022
          %v5286 = vunpack.c.l.b16 %v5023
          %v5287 = vunpack.c.l.b16 %v5024
          %v5288 = vunpack.c.l.b16 %v5025
          %v5289 = vunpack.c.l.b16 %v5026
          %v5290 = vunpack.c.l.b16 %v5027
          %v5291 = vpack.c.b16 %v5164, %v5163
          %v5292 = vpack.c.b16 %v5166, %v5165
          %v5293 = vpack.c.b16 %v5168, %v5167
          %v5294 = vpack.c.b16 %v5170, %v5169
          %v5295 = vpack.c.b16 %v5172, %v5171
          %v5296 = vpack.c.b16 %v5174, %v5173
          %v5297 = vpack.c.b16 %v5176, %v5175
          %v5298 = vpack.c.b16 %v5178, %v5177
          %v5299 = vpack.c.b16 %v5180, %v5179
          %v5300 = vpack.c.b16 %v5182, %v5181
          %v5301 = vpack.c.b16 %v5184, %v5183
          %v5302 = vpack.c.b16 %v5186, %v5185
          %v5303 = vpack.c.b16 %v5188, %v5187
          %v5304 = vpack.c.b16 %v5190, %v5189
          %v5305 = vpack.c.b16 %v5192, %v5191
          %v5306 = vpack.c.b16 %v5194, %v5193
          %v5307 = vpack.c.b16 %v5196, %v5195
          %v5308 = vpack.c.b16 %v5198, %v5197
          %v5309 = vpack.c.b16 %v5200, %v5199
          %v5310 = vpack.c.b16 %v5202, %v5201
          %v5311 = vpack.c.b16 %v5204, %v5203
          %v5312 = vpack.c.b16 %v5206, %v5205
          %v5313 = vpack.c.b16 %v5208, %v5207
          %v5314 = vpack.c.b16 %v5210, %v5209
          %v5315 = vpack.c.b16 %v5212, %v5211
          %v5316 = vpack.c.b16 %v5214, %v5213
          %v5317 = vpack.c.b16 %v5216, %v5215
          %v5318 = vpack.c.b16 %v5218, %v5217
          %v5319 = vpack.c.b16 %v5220, %v5219
          %v5320 = vpack.c.b16 %v5222, %v5221
          %v5321 = vpack.c.b16 %v5224, %v5223
          %v5322 = vpack.c.b16 %v5226, %v5225
          %v5323 = vpack.c.b16 %v5228, %v5227
          %v5324 = vpack.c.b16 %v5230, %v5229
          %v5325 = vpack.c.b16 %v5232, %v5231
          %v5326 = vpack.c.b16 %v5234, %v5233
          %v5327 = vpack.c.b16 %v5236, %v5235
          %v5328 = vpack.c.b16 %v5238, %v5237
          %v5329 = vpack.c.b16 %v5240, %v5239
          %v5330 = vpack.c.b16 %v5242, %v5241
          %v5331 = vpack.c.b16 %v5244, %v5243
          %v5332 = vpack.c.b16 %v5246, %v5245
          %v5333 = vpack.c.b16 %v5248, %v5247
          %v5334 = vpack.c.b16 %v5250, %v5249
          %v5335 = vpack.c.b16 %v5252, %v5251
          %v5336 = vpack.c.b16 %v5254, %v5253
          %v5337 = vpack.c.b16 %v5256, %v5255
          %v5338 = vpack.c.b16 %v5258, %v5257
          %v5339 = vpack.c.b16 %v5260, %v5259
          %v5340 = vpack.c.b16 %v5262, %v5261
          %v5341 = vpack.c.b16 %v5264, %v5263
          %v5342 = vpack.c.b16 %v5266, %v5265
          %v5343 = vpack.c.b16 %v5268, %v5267
          %v5344 = vpack.c.b16 %v5270, %v5269
          %v5345 = vpack.c.b16 %v5272, %v5271
          %v5346 = vpack.c.b16 %v5274, %v5273
          %v5347 = vpack.c.b16 %v5276, %v5275
          %v5348 = vpack.c.b16 %v5278, %v5277
          %v5349 = vpack.c.b16 %v5280, %v5279
          %v5350 = vpack.c.b16 %v5282, %v5281
          %v5351 = vpack.c.b16 %v5284, %v5283
          %v5352 = vpack.c.b16 %v5286, %v5285
          %v5353 = vpack.c.b16 %v5288, %v5287
          %v5354 = vpack.c.b16 %v5290, %v5289
          %5419 = vmatprep.subr.bf16.mxu0 0
          %5420 = vmatpush1.bf16.msra.mxu0 %v5298
          %5421 = vmatprep.subr.bf16.mxu0 0
          %5422 = vmatpush1.bf16.msra.mxu0 %v5297
          %5423 = vmatprep.subr.bf16.mxu0 0
          %5424 = vmatpush1.bf16.msra.mxu0 %v5296
          %5425 = vmatprep.subr.bf16.mxu0 0
          %5426 = vmatpush1.bf16.msra.mxu0 %v5295
          %5427 = vmatprep.subr.bf16.mxu0 0
          %5428 = vmatpush1.bf16.msra.mxu0 %v5294
          %5429 = vmatprep.subr.bf16.mxu0 0
          %5430 = vmatpush1.bf16.msra.mxu0 %v5293
          %5431 = vmatprep.subr.bf16.mxu0 0
          %5432 = vmatpush1.bf16.msra.mxu0 %v5292
          %5433 = vmatprep.subr.bf16.mxu0 0
          %5434 = vmatpush1.bf16.msra.mxu0 %v5291
          %5435 = vmatprep.subr.bf16.mxu0 0
          %5436 = vmatpush2.bf16.msra.mxu0 %v5306
          %5437 = vmatprep.subr.bf16.mxu0 0
          %5438 = vmatpush2.bf16.msra.mxu0 %v5305
          %5439 = vmatprep.subr.bf16.mxu0 0
          %5440 = vmatpush2.bf16.msra.mxu0 %v5304
          %5441 = vmatprep.subr.bf16.mxu0 0
          %5442 = vmatpush2.bf16.msra.mxu0 %v5303
          %5443 = vmatprep.subr.bf16.mxu0 0
          %5444 = vmatpush2.bf16.msra.mxu0 %v5302
          %5445 = vmatprep.subr.bf16.mxu0 0
          %5446 = vmatpush2.bf16.msra.mxu0 %v5301
          %5447 = vmatprep.subr.bf16.mxu0 0
          %5448 = vmatpush2.bf16.msra.mxu0 %v5300
          %5449 = vmatprep.subr.bf16.mxu0 0
          %5450 = vmatpush2.bf16.msra.mxu0 %v5299
          %5451 = vmatprep.mubr.bf16.mxu0 %v4893
          %5452 = vmatmul.mubr.bf16.gmra.mxu0 %v4892
          %v5453 = vpop.f32.mrf.mxu0
          %v5454 = vadd.f32 %v5033, %v5453
          %v5455 = vpop.f32.mrf.mxu0
          %v5456 = vpop.f32.mrf.mxu0
          %v5457 = vpop.f32.mrf.mxu0
          %5458 = vdwg.mxu0
          %5459 = vmatprep.subr.bf16.mxu0 0
          %5460 = vmatpush1.bf16.msra.mxu0 %v5314
          %5461 = vmatprep.subr.bf16.mxu0 0
          %5462 = vmatpush1.bf16.msra.mxu0 %v5313
          %5463 = vmatprep.subr.bf16.mxu0 0
          %5464 = vmatpush1.bf16.msra.mxu0 %v5312
          %5465 = vmatprep.subr.bf16.mxu0 0
          %5466 = vmatpush1.bf16.msra.mxu0 %v5311
          %5467 = vmatprep.subr.bf16.mxu0 0
          %5468 = vmatpush1.bf16.msra.mxu0 %v5310
          %5469 = vmatprep.subr.bf16.mxu0 0
          %5470 = vmatpush1.bf16.msra.mxu0 %v5309
          %5471 = vmatprep.subr.bf16.mxu0 0
          %5472 = vmatpush1.bf16.msra.mxu0 %v5308
          %5473 = vmatprep.subr.bf16.mxu0 0
          %5474 = vmatpush1.bf16.msra.mxu0 %v5307
          %5475 = vmatprep.subr.bf16.mxu0 0
          %5476 = vmatpush2.bf16.msra.mxu0 %v5322
          %5477 = vmatprep.subr.bf16.mxu0 0
          %5478 = vmatpush2.bf16.msra.mxu0 %v5321
          %5479 = vmatprep.subr.bf16.mxu0 0
          %5480 = vmatpush2.bf16.msra.mxu0 %v5320
          %5481 = vmatprep.subr.bf16.mxu0 0
          %5482 = vmatpush2.bf16.msra.mxu0 %v5319
          %5483 = vmatprep.subr.bf16.mxu0 0
          %5484 = vmatpush2.bf16.msra.mxu0 %v5318
          %5485 = vmatprep.subr.bf16.mxu0 0
          %5486 = vmatpush2.bf16.msra.mxu0 %v5317
          %5487 = vmatprep.subr.bf16.mxu0 0
          %5488 = vmatpush2.bf16.msra.mxu0 %v5316
          %5489 = vmatprep.subr.bf16.mxu0 0
          %5490 = vmatpush2.bf16.msra.mxu0 %v5315
          %5491 = vmatprep.mubr.bf16.mxu0 %v4895
          %5492 = vmatmul.mubr.bf16.gmra.mxu0 %v4894
          %v5493 = vpop.f32.mrf.mxu0
          %v5494 = vadd.f32 %v5454, %v5493
          %v5495 = vpop.f32.mrf.mxu0
          %v5496 = vpop.f32.mrf.mxu0
          %v5497 = vpop.f32.mrf.mxu0
          %5498 = vdwg.mxu0
          %5499 = vmatprep.subr.bf16.mxu0 0
          %5500 = vmatpush1.bf16.msra.mxu0 %v5330
          %5501 = vmatprep.subr.bf16.mxu0 0
          %5502 = vmatpush1.bf16.msra.mxu0 %v5329
          %5503 = vmatprep.subr.bf16.mxu0 0
          %5504 = vmatpush1.bf16.msra.mxu0 %v5328
          %5505 = vmatprep.subr.bf16.mxu0 0
          %5506 = vmatpush1.bf16.msra.mxu0 %v5327
          %5507 = vmatprep.subr.bf16.mxu0 0
          %5508 = vmatpush1.bf16.msra.mxu0 %v5326
          %5509 = vmatprep.subr.bf16.mxu0 0
          %5510 = vmatpush1.bf16.msra.mxu0 %v5325
          %5511 = vmatprep.subr.bf16.mxu0 0
          %5512 = vmatpush1.bf16.msra.mxu0 %v5324
          %5513 = vmatprep.subr.bf16.mxu0 0
          %5514 = vmatpush1.bf16.msra.mxu0 %v5323
          %5515 = vmatprep.subr.bf16.mxu0 0
          %5516 = vmatpush2.bf16.msra.mxu0 %v5338
          %5517 = vmatprep.subr.bf16.mxu0 0
          %5518 = vmatpush2.bf16.msra.mxu0 %v5337
          %5519 = vmatprep.subr.bf16.mxu0 0
          %5520 = vmatpush2.bf16.msra.mxu0 %v5336
          %5521 = vmatprep.subr.bf16.mxu0 0
          %5522 = vmatpush2.bf16.msra.mxu0 %v5335
          %5523 = vmatprep.subr.bf16.mxu0 0
          %5524 = vmatpush2.bf16.msra.mxu0 %v5334
          %5525 = vmatprep.subr.bf16.mxu0 0
          %5526 = vmatpush2.bf16.msra.mxu0 %v5333
          %5527 = vmatprep.subr.bf16.mxu0 0
          %5528 = vmatpush2.bf16.msra.mxu0 %v5332
          %5529 = vmatprep.subr.bf16.mxu0 0
          %5530 = vmatpush2.bf16.msra.mxu0 %v5331
          %5531 = vmatprep.mubr.bf16.mxu0 %v4897
          %5532 = vmatmul.mubr.bf16.gmra.mxu0 %v4896
          %v5533 = vpop.f32.mrf.mxu0
          %v5534 = vadd.f32 %v5494, %v5533
          %v5535 = vpop.f32.mrf.mxu0
          %v5536 = vpop.f32.mrf.mxu0
          %v5537 = vpop.f32.mrf.mxu0
          %5538 = vdwg.mxu0
          %5539 = vmatprep.subr.bf16.mxu0 0
          %5540 = vmatpush1.bf16.msra.mxu0 %v5346
          %5541 = vmatprep.subr.bf16.mxu0 0
          %5542 = vmatpush1.bf16.msra.mxu0 %v5345
          %5543 = vmatprep.subr.bf16.mxu0 0
          %5544 = vmatpush1.bf16.msra.mxu0 %v5344
          %5545 = vmatprep.subr.bf16.mxu0 0
          %5546 = vmatpush1.bf16.msra.mxu0 %v5343
          %5547 = vmatprep.subr.bf16.mxu0 0
          %5548 = vmatpush1.bf16.msra.mxu0 %v5342
          %5549 = vmatprep.subr.bf16.mxu0 0
          %5550 = vmatpush1.bf16.msra.mxu0 %v5341
          %5551 = vmatprep.subr.bf16.mxu0 0
          %5552 = vmatpush1.bf16.msra.mxu0 %v5340
          %5553 = vmatprep.subr.bf16.mxu0 0
          %5554 = vmatpush1.bf16.msra.mxu0 %v5339
          %5555 = vmatprep.subr.bf16.mxu0 0
          %5556 = vmatpush2.bf16.msra.mxu0 %v5354
          %5557 = vmatprep.subr.bf16.mxu0 0
          %5558 = vmatpush2.bf16.msra.mxu0 %v5353
          %5559 = vmatprep.subr.bf16.mxu0 0
          %5560 = vmatpush2.bf16.msra.mxu0 %v5352
          %5561 = vmatprep.subr.bf16.mxu0 0
          %5562 = vmatpush2.bf16.msra.mxu0 %v5351
          %5563 = vmatprep.subr.bf16.mxu0 0
          %5564 = vmatpush2.bf16.msra.mxu0 %v5350
          %5565 = vmatprep.subr.bf16.mxu0 0
          %5566 = vmatpush2.bf16.msra.mxu0 %v5349
          %5567 = vmatprep.subr.bf16.mxu0 0
          %5568 = vmatpush2.bf16.msra.mxu0 %v5348
          %5569 = vmatprep.subr.bf16.mxu0 0
          %5570 = vmatpush2.bf16.msra.mxu0 %v5347
          %5571 = vmatprep.mubr.bf16.mxu0 %v4899
          %5572 = vmatmul.mubr.bf16.gmra.mxu0 %v4898
          %v5573 = vpop.f32.mrf.mxu0
          %v5574 = vadd.f32 %v5534, %v5573
          %v5575 = vpop.f32.mrf.mxu0
          %v5576 = vpop.f32.mrf.mxu0
          %v5577 = vpop.f32.mrf.mxu0
          %5578 = vdwg.mxu0
          %5579 = vst [vmem:[#allocation15] sm:$0xff] %v5574
        $region88: #{tpu_custom_call.1} parent=47 // pred_fallthru
          _
        // Predicated region
        $region89: #{tpu_custom_call.1} parent=47 // pred_check
          %p5580 = pneg %p215
        $region90: #{tpu_custom_call.1} parent=47 // pred_check_branch
          %5582 = sbr.rel (%p5580) target = $region92
        $region91: #{tpu_custom_call.1} parent=47 // pred_region
          %s5584 = ssub.s32 128, 128
          %5585 = vsyncadd [#allocation5], %s5584
          %s5587 = sshll.u32 [#allocation15], 4
          %s5588 = int_to_ptr.vmem [resolvable:$true] %s5587
          %5590 = dma.vmem_to_hbm [thread:$0]  %s5588, 128, %s7, [#allocation5]
        $region92: #{tpu_custom_call.1} parent=47 // pred_fallthru
          _
        // Predicated region
        $region93: #{tpu_custom_call.1} parent=47 // pred_check
          %p5591 = pneg %p215
        $region94: #{tpu_custom_call.1} parent=47 // pred_check_branch
          %5593 = sbr.rel (%p5591) target = $region96
        $region95: #{tpu_custom_call.1} parent=47 // pred_region
          %5594 = dma.done [#allocation5], 128
        $region96: #{tpu_custom_call.1} parent=47 // pred_fallthru
          _
      $region48: #{tpu_custom_call.1} parent=5 // pred_fallthru
        _
      %p5595 = scmp.le.s32.totalorder 2, %s20
      // Predicated region
      $region97: #{tpu_custom_call.1} parent=5 // pred_check
        %p5596 = pneg %p5595
      $region98: #{tpu_custom_call.1} parent=5 // pred_check_branch
        %5598 = sbr.rel (%p5596) target = $region100
      $region99: #{tpu_custom_call.1} parent=5 // pred_region
        %s5599 = ssub.s32 %s20, 2
      $region100: #{tpu_custom_call.1} parent=5 // pred_fallthru
        _
    $region6: #{tpu_custom_call.1} parent=1 // loop_footer
      %s24 = sadd.s32 1, %s20
    $region7: #{tpu_custom_call.1} parent=1 // loop_footer_branch
      %19 = sbr.rel target = $region3
    $region8: #{tpu_custom_call.1} parent=1 // loop_exit
      _
    %5600 = vsyncpa [#allocation4], 1
    %s5601 = scalar_lea.sflag [#allocation4], 1
    %5602 = vsyncpa %s5601, 1
    %5603 = vsyncpa [#allocation7], 1
    %5604 = vsyncpa [#allocation10], 1
    %s5605 = scalar_lea.sflag [#allocation10], 1
    %5606 = vsyncpa %s5605, 1
    %5607 = vsyncpa [#allocation13], 1
    %5608 = vsyncpa [#allocation5], 1
    %s5609 = scalar_lea.sflag [#allocation5], 1
    %5610 = vsyncpa %s5609, 1

</llo_original>
